<compile_context>
chip_gen: v7x
topology: tpu7x:2x2x1
jax: 0.10.0
libtpu: 0.0.40
codegen_flags: <defaults>
</compile_context>

<pallas_src>
import math
import numpy as np

import jax
import jax.numpy as jnp
from jax.experimental import pallas as pl
from jax.experimental.pallas import tpu as pltpu


# ----------------------------------------------------------------------------
# Config (small shapes consistent with the module's forward)
# ----------------------------------------------------------------------------
N_IMAGES = 2
C_FEAT = 64          # stands in for 512 in the real model
H_FEAT = 16
W_FEAT = 16
S_PER_IMAGE = 8      # proposals per image
ROI_POOL = 7         # roi_pool_outsize
SAMPLING_RATIO = 2
HIDDEN = 128
NUM_CLASSES = 8

SCORE_THRESH = 0.05
NMS_THRESH = 0.5
DETECTIONS_PER_IMG = 100
BBOX_XFORM_CLIP = math.log(1000.0 / 16.0)


# ----------------------------------------------------------------------------
# Kernel 1: ROI-align, one grid step per IMAGE (all S ROIs of the image at once)
# ----------------------------------------------------------------------------
def roi_align_kernel(feat_ref, cy_ref, cx_ref, gy_ref, gx_ref, out_ref):
    # feat_ref: (1, H*W, C) bf16       image's feature map, channel-last
    # cy_ref  : (1, SR, S*P*P, 1) f32  y sample coord per A-row (depends on (roi, ph))
    # cx_ref  : (1, SR, S*P*P, 1) f32  x sample coord per A-row (depends on (roi, pw))
    # gy_ref  : (1, H*W) f32           grid-row index per A-column (hoisted, image-invariant)
    # gx_ref  : (1, H*W) f32           grid-col index per A-column (hoisted, image-invariant)
    # out_ref : (1, S*P*P, C) bf16
    gy = gy_ref[...]                      # (1, HW)
    gx = gx_ref[...]                      # (1, HW)
    inv = 1.0 / (SAMPLING_RATIO * SAMPLING_RATIO)

    def axis_weight(c_ref, g, size):
        # torchvision roi_align(aligned=False) bilinear weight along one axis,
        # summed over the SAMPLING_RATIO samples of that axis.
        acc = None
        for k in range(SAMPLING_RATIO):               # SR=2, static unroll
            c = c_ref[0, k]                           # (S*P*P, 1)
            valid = (c >= -1.0) & (c <= size)
            cc = jnp.clip(c, 0.0, size - 1.0)
            w = jnp.maximum(1.0 - jnp.abs(cc - g), 0.0)   # (S*P*P, HW)
            w = jnp.where(valid, w, 0.0)
            acc = w if acc is None else acc + w
        return acc

    wy = axis_weight(cy_ref, gy, float(H_FEAT)) * inv
    wx = axis_weight(cx_ref, gx, float(W_FEAT))
    A = (wy * wx).astype(feat_ref.dtype)              # (S*P*P, HW) bf16 sampling matrix

    out_ref[0] = jnp.dot(A, feat_ref[0],
                         preferred_element_type=jnp.float32).astype(out_ref.dtype)


def roi_align_pallas(feat_flat, cy_rows, cx_rows, gy_cols, gx_cols):
    """feat_flat: (N, H*W, C) bf16 -> pooled (N, S*P*P, C) bf16."""
    N, HW, C = feat_flat.shape
    SR = SAMPLING_RATIO
    SPP = S_PER_IMAGE * ROI_POOL * ROI_POOL
    return pl.pallas_call(
        roi_align_kernel,
        grid=(N,),
        in_specs=[
            pl.BlockSpec((1, HW, C), lambda i: (i, 0, 0)),
            pl.BlockSpec((1, SR, SPP, 1), lambda i: (i, 0, 0, 0)),
            pl.BlockSpec((1, SR, SPP, 1), lambda i: (i, 0, 0, 0)),
            pl.BlockSpec((1, HW), lambda i: (0, 0)),        # image-invariant constants
            pl.BlockSpec((1, HW), lambda i: (0, 0)),
        ],
        out_specs=pl.BlockSpec((1, SPP, C), lambda i: (i, 0, 0)),
        out_shape=jax.ShapeDtypeStruct((N, SPP, C), jnp.bfloat16),
        compiler_params=pltpu.CompilerParams(dimension_semantics=("parallel",)),
    )(feat_flat, cy_rows, cx_rows, gy_cols, gx_cols)


def build_sampling_inputs(rois, H, W):
    """Hoisted (tiny) coordinate slabs for the ROI-align kernel.

    rois: (N, S, 4) f32 -> cy_rows/cx_rows: (N, SR, S*P*P, 1), gy_cols/gx_cols: (1, H*W).
    """
    N, S, _ = rois.shape
    P, SR = ROI_POOL, SAMPLING_RATIO
    x1, y1, x2, y2 = rois[..., 0], rois[..., 1], rois[..., 2], rois[..., 3]   # (N, S)
    # torchvision roi_align, spatial_scale=1.0, aligned=False
    roi_w = jnp.maximum(x2 - x1, 1.0)
    roi_h = jnp.maximum(y2 - y1, 1.0)
    bin_w = roi_w / P
    bin_h = roi_h / P

    p_idx = jnp.arange(P, dtype=jnp.float32)                    # (P,)
    k_off = (jnp.arange(SR, dtype=jnp.float32) + 0.5) / SR      # (SR,)
    frac = p_idx[None, :] + k_off[:, None]                      # (SR, P)

    # (N, SR, S, P): sample coordinate per (image, sample, roi, bin)
    cy = y1[:, None, :, None] + frac[None, :, None, :] * bin_h[:, None, :, None]
    cx = x1[:, None, :, None] + frac[None, :, None, :] * bin_w[:, None, :, None]

    # Expand to per-A-row resolution: row = s*P*P + ph*P + pw  (cy varies with ph, cx with pw)
    cy_rows = jnp.broadcast_to(cy[:, :, :, :, None], (N, SR, S, P, P)).reshape(N, SR, S * P * P, 1)
    cx_rows = jnp.broadcast_to(cx[:, :, :, None, :], (N, SR, S, P, P)).reshape(N, SR, S * P * P, 1)

    gy_cols = jnp.repeat(jnp.arange(H, dtype=jnp.float32), W).reshape(1, H * W)
    gx_cols = jnp.tile(jnp.arange(W, dtype=jnp.float32), H).reshape(1, H * W)
    return cy_rows, cx_rows, gy_cols, gx_cols


# ----------------------------------------------------------------------------
# Kernel 2: fused rcnn_fc + rcnn_predictor + softmax + bbox decode + clip
# ----------------------------------------------------------------------------
def head_kernel(x_ref, w1_ref, b1_ref, w2_ref, b2_ref, wcb_ref, bcb_ref,
                rois_ref, img_ref, scores_ref, boxes_ref):
    K = NUM_CLASSES
    x = x_ref[...]                                                             # (R, D_IN) bf16
    h = jnp.dot(x, w1_ref[...], preferred_element_type=jnp.float32) + b1_ref[...]
    h = jnp.maximum(h, 0.0).astype(jnp.bfloat16)
    h = jnp.dot(h, w2_ref[...], preferred_element_type=jnp.float32) + b2_ref[...]
    h = jnp.maximum(h, 0.0).astype(jnp.bfloat16)
    # fused predictor: columns = [cls(K) | dx(K) | dy(K) | dw(K) | dh(K)]
    y = jnp.dot(h, wcb_ref[...], preferred_element_type=jnp.float32) + bcb_ref[...]   # (R, 5K)

    # softmax over classes
    logits = y[:, 0:K]
    m = jnp.max(logits, axis=-1, keepdims=True)
    e = jnp.exp(logits - m)
    scores_ref[...] = e / jnp.sum(e, axis=-1, keepdims=True)

    # bbox decode, encode weights [10, 10, 5, 5], dw/dh clamped at BBOX_XFORM_CLIP
    dx = y[:, K:2 * K] / 10.0
    dy = y[:, 2 * K:3 * K] / 10.0
    dw = jnp.minimum(y[:, 3 * K:4 * K] / 5.0, BBOX_XFORM_CLIP)
    dh = jnp.minimum(y[:, 4 * K:5 * K] / 5.0, BBOX_XFORM_CLIP)

    px1 = rois_ref[:, 0:1]
    py1 = rois_ref[:, 1:2]
    px2 = rois_ref[:, 2:3]
    py2 = rois_ref[:, 3:4]
    pw = px2 - px1
    ph = py2 - py1
    cx = px1 + 0.5 * pw
    cy = py1 + 0.5 * ph

    pcx = dx * pw + cx
    pcy = dy * ph + cy
    nw = jnp.exp(dw) * pw
    nh = jnp.exp(dh) * ph

    img_h = img_ref[:, 0:1]
    img_w = img_ref[:, 1:2]
    boxes_ref[0] = jnp.clip(pcx - 0.5 * nw, 0.0, img_w)
    boxes_ref[1] = jnp.clip(pcy - 0.5 * nh, 0.0, img_h)
    boxes_ref[2] = jnp.clip(pcx + 0.5 * nw, 0.0, img_w)
    boxes_ref[3] = jnp.clip(pcy + 0.5 * nh, 0.0, img_h)


def head_pallas(x, rois, img_hw, hp):
    R = x.shape[0]
    K = NUM_CLASSES
    vmem = pl.BlockSpec(memory_space=pltpu.MemorySpace.VMEM)
    args = (x, hp["w1"], hp["b1"], hp["w2"], hp["b2"], hp["wcb"], hp["bcb"], rois, img_hw)
    return pl.pallas_call(
        head_kernel,
        out_shape=(jax.ShapeDtypeStruct((R, K), jnp.float32),
                   jax.ShapeDtypeStruct((4, R, K), jnp.float32)),
        in_specs=[vmem] * len(args),
        out_specs=(vmem, vmem),
    )(*args)


def prepare_head_params(params):
    """bf16 weights for the MXU + fused/column-reordered predictor weight.

    Canonical wb columns are (class-major, delta-minor); the kernel wants
    [dx(all K) | dy | dw | dh] after the cls block.
    """
    K = NUM_CLASSES
    wb_r = jnp.transpose(params["wb"].reshape(HIDDEN, K, 4), (0, 2, 1)).reshape(HIDDEN, 4 * K)
    bb_r = jnp.transpose(params["bb"].reshape(1, K, 4), (0, 2, 1)).reshape(1, 4 * K)
    return {
        "w1": params["w1"].astype(jnp.bfloat16),
        "b1": params["b1"].astype(jnp.float32),
        "w2": params["w2"].astype(jnp.bfloat16),
        "b2": params["b2"].astype(jnp.float32),
        "wcb": jnp.concatenate([params["wc"], wb_r], axis=1).astype(jnp.bfloat16),
        "bcb": jnp.concatenate([params["bc"], bb_r], axis=1).astype(jnp.float32),
    }


# ----------------------------------------------------------------------------
# Host-side (numpy) dynamic-shape post-processing: threshold / small-box / NMS / top-k
# ----------------------------------------------------------------------------
def _nms_np(boxes, scores, iou_thresh):
    order = np.argsort(-scores, kind="stable")
    keep = []
    while order.size > 0:
        i = order[0]
        keep.append(i)
        if order.size == 1:
            break
        rest = order[1:]
        xx1 = np.maximum(boxes[i, 0], boxes[rest, 0])
        yy1 = np.maximum(boxes[i, 1], boxes[rest, 1])
        xx2 = np.minimum(boxes[i, 2], boxes[rest, 2])
        yy2 = np.minimum(boxes[i, 3], boxes[rest, 3])
        inter = np.maximum(xx2 - xx1, 0.0) * np.maximum(yy2 - yy1, 0.0)
        area_i = (boxes[i, 2] - boxes[i, 0]) * (boxes[i, 3] - boxes[i, 1])
        area_r = (boxes[rest, 2] - boxes[rest, 0]) * (boxes[rest, 3] - boxes[rest, 1])
        iou = inter / (area_i + area_r - inter + 1e-9)
        order = rest[iou <= iou_thresh]
    return np.asarray(keep, dtype=np.int64)


def _batched_nms_np(boxes, scores, labels, iou_thresh):
    if boxes.shape[0] == 0:
        return np.zeros((0,), dtype=np.int64)
    max_coord = boxes.max()
    offsets = labels.astype(np.float32) * (max_coord + 1.0)
    return _nms_np(boxes + offsets[:, None], scores, iou_thresh)


def host_process_result(scores, boxes4, num_boxes_per_image):
    scores = np.asarray(scores)                          # (R, K)
    boxes = np.transpose(np.asarray(boxes4), (1, 2, 0))  # (R, K, 4)
    K = scores.shape[1]
    results = []
    start = 0
    for n in num_boxes_per_image:
        sc = scores[start:start + n, 1:]
        bx = boxes[start:start + n, 1:, :]
        lb = np.tile(np.arange(K)[None, :], (n, 1))[:, 1:]
        sc = sc.reshape(-1)
        bx = bx.reshape(-1, 4)
        lb = lb.reshape(-1)
        keep = np.where(sc > SCORE_THRESH)[0]
        sc, bx, lb = sc[keep], bx[keep], lb[keep]
        ws, hs = bx[:, 2] - bx[:, 0], bx[:, 3] - bx[:, 1]
        keep = np.where((ws >= 0.01) & (hs >= 0.01))[0]
        sc, bx, lb = sc[keep], bx[keep], lb[keep]
        keep = _batched_nms_np(bx, sc, lb, NMS_THRESH)[:DETECTIONS_PER_IMG]
        results.append({"boxes": bx[keep], "labels": lb[keep], "scores": sc[keep]})
        start += n
    return results


# ----------------------------------------------------------------------------
# Full forward (inference path of RCNNHead.forward)
# ----------------------------------------------------------------------------
def rcnn_head_forward(features_nchw, proposals_list, image_sizes, params):
    N, C, H, W = features_nchw.shape
    num_boxes_per_image = [int(p.shape[0]) for p in proposals_list]
    assert all(s == num_boxes_per_image[0] for s in num_boxes_per_image)
    S = num_boxes_per_image[0]

    # NCHW -> (N, H*W, C) channel-last, bf16 for the MXU
    feat_flat = jnp.transpose(features_nchw, (0, 2, 3, 1)).reshape(N, H * W, C)
    feat_flat = feat_flat.astype(jnp.bfloat16)

    rois = jnp.stack([p.astype(jnp.float32) for p in proposals_list], axis=0)   # (N, S, 4)
    cy_rows, cx_rows, gy_cols, gx_cols = build_sampling_inputs(rois, H, W)

    pooled = roi_align_pallas(feat_flat, cy_rows, cx_rows, gy_cols, gx_cols)    # (N, S*P*P, C)
    x = pooled.reshape(N * S, ROI_POOL * ROI_POOL * C)                          # (R, P*P*C) bf16

    head_params = prepare_head_params(params)
    rois_cat = rois.reshape(N * S, 4)
    # Built purely from host Python data -> no device->host sync in the pipeline.
    img_hw = jnp.asarray(np.repeat(np.asarray(image_sizes, dtype=np.float32), S, axis=0))

    scores, boxes4 = head_pallas(x, rois_cat, img_hw, head_params)              # (R,K), (4,R,K)

    result = host_process_result(scores, boxes4, num_boxes_per_image)
    losses = {}  # TODO(synk): training losses (cross-entropy / smooth-L1 on sampled proposals) not ported.
    return result, losses, (scores, boxes4)


# ----------------------------------------------------------------------------
# Deterministic parameter / input construction
# ----------------------------------------------------------------------------
def make_params(key):
    d_in = ROI_POOL * ROI_POOL * C_FEAT
    ks = jax.random.split(key, 4)
    return {
        "w1": 0.01 * jax.random.normal(ks[0], (d_in, HIDDEN), jnp.float32),
        "b1": jnp.zeros((1, HIDDEN), jnp.float32),
        "w2": 0.05 * jax.random.normal(ks[1], (HIDDEN, HIDDEN), jnp.float32),
        "b2": jnp.zeros((1, HIDDEN), jnp.float32),
        "wc": 0.05 * jax.random.normal(ks[2], (HIDDEN, NUM_CLASSES), jnp.float32),
        "bc": jnp.zeros((1, NUM_CLASSES), jnp.float32),
        "wb": 0.05 * jax.random.normal(ks[3], (HIDDEN, NUM_CLASSES * 4), jnp.float32),
        "bb": jnp.zeros((1, NUM_CLASSES * 4), jnp.float32),
    }


def make_inputs(key):
    kf, kp = jax.random.split(key)
    features = jax.random.normal(kf, (N_IMAGES, C_FEAT, H_FEAT, W_FEAT), jnp.float32)
    proposals = []
    pks = jax.random.split(kp, N_IMAGES)
    for i in range(N_IMAGES):
        k1, k2, k3, k4 = jax.random.split(pks[i], 4)
        x1 = jax.random.uniform(k1, (S_PER_IMAGE,), minval=0.0, maxval=10.0)
        y1 = jax.random.uniform(k2, (S_PER_IMAGE,), minval=0.0, maxval=10.0)
        x2 = jnp.minimum(x1 + jax.random.uniform(k3, (S_PER_IMAGE,), minval=2.0, maxval=6.0), float(W_FEAT))
        y2 = jnp.minimum(y1 + jax.random.uniform(k4, (S_PER_IMAGE,), minval=2.0, maxval=6.0), float(H_FEAT))
        proposals.append(jnp.stack([x1, y1, x2, y2], axis=1))
    image_sizes = [(float(H_FEAT), float(W_FEAT))] * N_IMAGES
    return features, proposals, image_sizes


if __name__ == "__main__":
    key = jax.random.PRNGKey(0)
    k_par, k_in = jax.random.split(key)
    params = make_params(k_par)
    features, proposals, image_sizes = make_inputs(k_in)

    result, losses, dev_out = rcnn_head_forward(features, proposals, image_sizes, params)
    jax.block_until_ready(dev_out)

    # Basic sanity on structure.
    assert isinstance(result, list) and len(result) == N_IMAGES
    for r in result:
        assert r["boxes"].shape[-1] == 4
        assert r["boxes"].shape[0] == r["scores"].shape[0] == r["labels"].shape[0]
    assert losses == {}
    print("KERNEL_OK")
</pallas_src>

<mosaic_0001>
module attributes {stable_mosaic.version = 11 : i64} {
  func.func @roi_align_kernel(%arg0: i32, %arg1: memref<1x256x64xbf16, #tpu.memory_space<vmem>>, %arg2: memref<1x2x392x1xf32, #tpu.memory_space<vmem>>, %arg3: memref<1x2x392x1xf32, #tpu.memory_space<vmem>>, %arg4: memref<1x256xf32, #tpu.memory_space<vmem>>, %arg5: memref<1x256xf32, #tpu.memory_space<vmem>>, %arg6: memref<1x392x64xbf16, #tpu.memory_space<vmem>>) attributes {dimension_semantics = [#tpu.dimension_semantics<parallel>], iteration_bounds = array<i64: 2>, scalar_prefetch = 0 : i64, scratch_operands = 0 : i64, tpu.core_type = #tpu.core_type<tc>, window_params = [{transform_indices = @transform_0, window_bounds = array<i64: 1, 256, 64>}, {transform_indices = @transform_1, window_bounds = array<i64: 1, 2, 392, 1>}, {transform_indices = @transform_2, window_bounds = array<i64: 1, 2, 392, 1>}, {pipeline_mode = #tpu.pipeline_mode<synchronous>, transform_indices = @transform_3, window_bounds = array<i64: 1, 256>}, {pipeline_mode = #tpu.pipeline_mode<synchronous>, transform_indices = @transform_4, window_bounds = array<i64: 1, 256>}, {transform_indices = @transform_5, window_bounds = array<i64: 1, 392, 64>}]} {
    %c0 = arith.constant 0 : index
    %c0_0 = arith.constant 0 : index
    %0 = vector.load %arg4[%c0, %c0_0] : memref<1x256xf32, #tpu.memory_space<vmem>>, vector<1x256xf32>
    %c0_1 = arith.constant 0 : index
    %c0_2 = arith.constant 0 : index
    %1 = vector.load %arg5[%c0_1, %c0_2] : memref<1x256xf32, #tpu.memory_space<vmem>>, vector<1x256xf32>
    %c0_3 = arith.constant 0 : index
    %c0_4 = arith.constant 0 : index
    %c0_5 = arith.constant 0 : index
    %c0_6 = arith.constant 0 : index
    %2 = vector.load %arg2[%c0_3, %c0_4, %c0_5, %c0_6] : memref<1x2x392x1xf32, #tpu.memory_space<vmem>>, vector<1x1x392x1xf32>
    %3 = vector.shape_cast %2 : vector<1x1x392x1xf32> to vector<392x1xf32>
    %cst = arith.constant -1.000000e+00 : f32
    %4 = vector.broadcast %cst : f32 to vector<392x1xf32>
    %5 = arith.cmpf oge, %3, %4 : vector<392x1xf32>
    %cst_7 = arith.constant 1.600000e+01 : f32
    %6 = vector.broadcast %cst_7 : f32 to vector<392x1xf32>
    %7 = arith.cmpf ole, %3, %6 : vector<392x1xf32>
    %8 = arith.andi %5, %7 : vector<392x1xi1>
    %cst_8 = arith.constant 0.000000e+00 : f32
    %cst_9 = arith.constant 1.500000e+01 : f32
    %9 = vector.broadcast %cst_8 : f32 to vector<392x1xf32>
    %10 = arith.maximumf %9, %3 : vector<392x1xf32>
    %11 = vector.broadcast %cst_9 : f32 to vector<392x1xf32>
    %12 = arith.minimumf %11, %10 : vector<392x1xf32>
    %13 = vector.broadcast %12 : vector<392x1xf32> to vector<392x256xf32>
    %14 = vector.broadcast %0 : vector<1x256xf32> to vector<392x256xf32>
    %15 = arith.subf %13, %14 : vector<392x256xf32>
    %16 = math.absf %15 : vector<392x256xf32>
    %cst_10 = arith.constant 1.000000e+00 : f32
    %17 = vector.broadcast %cst_10 : f32 to vector<392x256xf32>
    %18 = arith.subf %17, %16 : vector<392x256xf32>
    %cst_11 = arith.constant 0.000000e+00 : f32
    %19 = vector.broadcast %cst_11 : f32 to vector<392x256xf32>
    %20 = arith.maximumf %18, %19 : vector<392x256xf32>
    %cst_12 = arith.constant 0.000000e+00 : f32
    %21 = vector.shape_cast %8 : vector<392x1xi1> to vector<392x1xi1>
    %22 = vector.broadcast %21 : vector<392x1xi1> to vector<392x256xi1>
    %23 = vector.broadcast %cst_12 : f32 to vector<392x256xf32>
    %24 = arith.select %22, %20, %23 : vector<392x256xi1>, vector<392x256xf32>
    %c0_13 = arith.constant 0 : index
    %c1 = arith.constant 1 : index
    %c0_14 = arith.constant 0 : index
    %c0_15 = arith.constant 0 : index
    %25 = vector.load %arg2[%c0_13, %c1, %c0_14, %c0_15] : memref<1x2x392x1xf32, #tpu.memory_space<vmem>>, vector<1x1x392x1xf32>
    %26 = vector.shape_cast %25 : vector<1x1x392x1xf32> to vector<392x1xf32>
    %cst_16 = arith.constant -1.000000e+00 : f32
    %27 = vector.broadcast %cst_16 : f32 to vector<392x1xf32>
    %28 = arith.cmpf oge, %26, %27 : vector<392x1xf32>
    %cst_17 = arith.constant 1.600000e+01 : f32
    %29 = vector.broadcast %cst_17 : f32 to vector<392x1xf32>
    %30 = arith.cmpf ole, %26, %29 : vector<392x1xf32>
    %31 = arith.andi %28, %30 : vector<392x1xi1>
    %cst_18 = arith.constant 0.000000e+00 : f32
    %cst_19 = arith.constant 1.500000e+01 : f32
    %32 = vector.broadcast %cst_18 : f32 to vector<392x1xf32>
    %33 = arith.maximumf %32, %26 : vector<392x1xf32>
    %34 = vector.broadcast %cst_19 : f32 to vector<392x1xf32>
    %35 = arith.minimumf %34, %33 : vector<392x1xf32>
    %36 = vector.broadcast %35 : vector<392x1xf32> to vector<392x256xf32>
    %37 = vector.broadcast %0 : vector<1x256xf32> to vector<392x256xf32>
    %38 = arith.subf %36, %37 : vector<392x256xf32>
    %39 = math.absf %38 : vector<392x256xf32>
    %cst_20 = arith.constant 1.000000e+00 : f32
    %40 = vector.broadcast %cst_20 : f32 to vector<392x256xf32>
    %41 = arith.subf %40, %39 : vector<392x256xf32>
    %cst_21 = arith.constant 0.000000e+00 : f32
    %42 = vector.broadcast %cst_21 : f32 to vector<392x256xf32>
    %43 = arith.maximumf %41, %42 : vector<392x256xf32>
    %cst_22 = arith.constant 0.000000e+00 : f32
    %44 = vector.shape_cast %31 : vector<392x1xi1> to vector<392x1xi1>
    %45 = vector.broadcast %44 : vector<392x1xi1> to vector<392x256xi1>
    %46 = vector.broadcast %cst_22 : f32 to vector<392x256xf32>
    %47 = arith.select %45, %43, %46 : vector<392x256xi1>, vector<392x256xf32>
    %48 = arith.addf %24, %47 : vector<392x256xf32>
    %cst_23 = arith.constant 2.500000e-01 : f32
    %49 = vector.broadcast %cst_23 : f32 to vector<392x256xf32>
    %50 = arith.mulf %48, %49 : vector<392x256xf32>
    %c0_24 = arith.constant 0 : index
    %c0_25 = arith.constant 0 : index
    %c0_26 = arith.constant 0 : index
    %c0_27 = arith.constant 0 : index
    %51 = vector.load %arg3[%c0_24, %c0_25, %c0_26, %c0_27] : memref<1x2x392x1xf32, #tpu.memory_space<vmem>>, vector<1x1x392x1xf32>
    %52 = vector.shape_cast %51 : vector<1x1x392x1xf32> to vector<392x1xf32>
    %cst_28 = arith.constant -1.000000e+00 : f32
    %53 = vector.broadcast %cst_28 : f32 to vector<392x1xf32>
    %54 = arith.cmpf oge, %52, %53 : vector<392x1xf32>
    %cst_29 = arith.constant 1.600000e+01 : f32
    %55 = vector.broadcast %cst_29 : f32 to vector<392x1xf32>
    %56 = arith.cmpf ole, %52, %55 : vector<392x1xf32>
    %57 = arith.andi %54, %56 : vector<392x1xi1>
    %cst_30 = arith.constant 0.000000e+00 : f32
    %cst_31 = arith.constant 1.500000e+01 : f32
    %58 = vector.broadcast %cst_30 : f32 to vector<392x1xf32>
    %59 = arith.maximumf %58, %52 : vector<392x1xf32>
    %60 = vector.broadcast %cst_31 : f32 to vector<392x1xf32>
    %61 = arith.minimumf %60, %59 : vector<392x1xf32>
    %62 = vector.broadcast %61 : vector<392x1xf32> to vector<392x256xf32>
    %63 = vector.broadcast %1 : vector<1x256xf32> to vector<392x256xf32>
    %64 = arith.subf %62, %63 : vector<392x256xf32>
    %65 = math.absf %64 : vector<392x256xf32>
    %cst_32 = arith.constant 1.000000e+00 : f32
    %66 = vector.broadcast %cst_32 : f32 to vector<392x256xf32>
    %67 = arith.subf %66, %65 : vector<392x256xf32>
    %cst_33 = arith.constant 0.000000e+00 : f32
    %68 = vector.broadcast %cst_33 : f32 to vector<392x256xf32>
    %69 = arith.maximumf %67, %68 : vector<392x256xf32>
    %cst_34 = arith.constant 0.000000e+00 : f32
    %70 = vector.shape_cast %57 : vector<392x1xi1> to vector<392x1xi1>
    %71 = vector.broadcast %70 : vector<392x1xi1> to vector<392x256xi1>
    %72 = vector.broadcast %cst_34 : f32 to vector<392x256xf32>
    %73 = arith.select %71, %69, %72 : vector<392x256xi1>, vector<392x256xf32>
    %c0_35 = arith.constant 0 : index
    %c1_36 = arith.constant 1 : index
    %c0_37 = arith.constant 0 : index
    %c0_38 = arith.constant 0 : index
    %74 = vector.load %arg3[%c0_35, %c1_36, %c0_37, %c0_38] : memref<1x2x392x1xf32, #tpu.memory_space<vmem>>, vector<1x1x392x1xf32>
    %75 = vector.shape_cast %74 : vector<1x1x392x1xf32> to vector<392x1xf32>
    %cst_39 = arith.constant -1.000000e+00 : f32
    %76 = vector.broadcast %cst_39 : f32 to vector<392x1xf32>
    %77 = arith.cmpf oge, %75, %76 : vector<392x1xf32>
    %cst_40 = arith.constant 1.600000e+01 : f32
    %78 = vector.broadcast %cst_40 : f32 to vector<392x1xf32>
    %79 = arith.cmpf ole, %75, %78 : vector<392x1xf32>
    %80 = arith.andi %77, %79 : vector<392x1xi1>
    %cst_41 = arith.constant 0.000000e+00 : f32
    %cst_42 = arith.constant 1.500000e+01 : f32
    %81 = vector.broadcast %cst_41 : f32 to vector<392x1xf32>
    %82 = arith.maximumf %81, %75 : vector<392x1xf32>
    %83 = vector.broadcast %cst_42 : f32 to vector<392x1xf32>
    %84 = arith.minimumf %83, %82 : vector<392x1xf32>
    %85 = vector.broadcast %84 : vector<392x1xf32> to vector<392x256xf32>
    %86 = vector.broadcast %1 : vector<1x256xf32> to vector<392x256xf32>
    %87 = arith.subf %85, %86 : vector<392x256xf32>
    %88 = math.absf %87 : vector<392x256xf32>
    %cst_43 = arith.constant 1.000000e+00 : f32
    %89 = vector.broadcast %cst_43 : f32 to vector<392x256xf32>
    %90 = arith.subf %89, %88 : vector<392x256xf32>
    %cst_44 = arith.constant 0.000000e+00 : f32
    %91 = vector.broadcast %cst_44 : f32 to vector<392x256xf32>
    %92 = arith.maximumf %90, %91 : vector<392x256xf32>
    %cst_45 = arith.constant 0.000000e+00 : f32
    %93 = vector.shape_cast %80 : vector<392x1xi1> to vector<392x1xi1>
    %94 = vector.broadcast %93 : vector<392x1xi1> to vector<392x256xi1>
    %95 = vector.broadcast %cst_45 : f32 to vector<392x256xf32>
    %96 = arith.select %94, %92, %95 : vector<392x256xi1>, vector<392x256xf32>
    %97 = arith.addf %73, %96 : vector<392x256xf32>
    %98 = arith.mulf %50, %97 : vector<392x256xf32>
    %99 = arith.truncf %98 : vector<392x256xf32> to vector<392x256xbf16>
    %c0_46 = arith.constant 0 : index
    %c0_47 = arith.constant 0 : index
    %c0_48 = arith.constant 0 : index
    %100 = vector.load %arg1[%c0_46, %c0_47, %c0_48] : memref<1x256x64xbf16, #tpu.memory_space<vmem>>, vector<1x256x64xbf16>
    %101 = vector.shape_cast %100 : vector<1x256x64xbf16> to vector<256x64xbf16>
    %cst_49 = arith.constant dense<0.000000e+00> : vector<392x64xf32>
    %102 = tpu.matmul %99, %101, %cst_49 {dimension_numbers = #tpu.dot_dimension_numbers<[1], [0], [0], [1], [0, 0, 1, 1], [], []>} : vector<392x256xbf16>, vector<256x64xbf16>, vector<392x64xf32> -> vector<392x64xf32>
    %103 = arith.truncf %102 : vector<392x64xf32> to vector<392x64xbf16>
    %c0_50 = arith.constant 0 : index
    %c0_51 = arith.constant 0 : index
    %c0_52 = arith.constant 0 : index
    %104 = vector.load %arg6[%c0_50, %c0_51, %c0_52] : memref<1x392x64xbf16, #tpu.memory_space<vmem>>, vector<1x392x64xbf16>
    %105 = vector.shape_cast %104 : vector<1x392x64xbf16> to vector<392x64xbf16>
    %106 = vector.shape_cast %103 : vector<392x64xbf16> to vector<1x392x64xbf16>
    tpu.vector_store %arg6[%c0_50, %c0_51, %c0_52], %106 {strides = array<i32>} : memref<1x392x64xbf16, #tpu.memory_space<vmem>>, vector<1x392x64xbf16>,
    return
  }
  func.func @transform_0(%arg0: i32) -> (i32, i32, i32) {
    %c0_i32 = arith.constant 0 : i32
    %c0_i32_0 = arith.constant 0 : i32
    %c0_i32_1 = arith.constant 0 : i32
    return %arg0, %c0_i32, %c0_i32_0 : i32, i32, i32
  }
  func.func @transform_1(%arg0: i32) -> (i32, i32, i32, i32) {
    %c0_i32 = arith.constant 0 : i32
    %c0_i32_0 = arith.constant 0 : i32
    %c0_i32_1 = arith.constant 0 : i32
    %c0_i32_2 = arith.constant 0 : i32
    return %arg0, %c0_i32, %c0_i32_0, %c0_i32_1 : i32, i32, i32, i32
  }
  func.func @transform_2(%arg0: i32) -> (i32, i32, i32, i32) {
    %c0_i32 = arith.constant 0 : i32
    %c0_i32_0 = arith.constant 0 : i32
    %c0_i32_1 = arith.constant 0 : i32
    %c0_i32_2 = arith.constant 0 : i32
    return %arg0, %c0_i32, %c0_i32_0, %c0_i32_1 : i32, i32, i32, i32
  }
  func.func @transform_3(%arg0: i32) -> (i32, i32) {
    %c0_i32 = arith.constant 0 : i32
    %c0_i32_0 = arith.constant 0 : i32
    %c0_i32_1 = arith.constant 0 : i32
    return %c0_i32, %c0_i32_0 : i32, i32
  }
  func.func @transform_4(%arg0: i32) -> (i32, i32) {
    %c0_i32 = arith.constant 0 : i32
    %c0_i32_0 = arith.constant 0 : i32
    %c0_i32_1 = arith.constant 0 : i32
    return %c0_i32, %c0_i32_0 : i32, i32
  }
  func.func @transform_5(%arg0: i32) -> (i32, i32, i32) {
    %c0_i32 = arith.constant 0 : i32
    %c0_i32_0 = arith.constant 0 : i32
    %c0_i32_1 = arith.constant 0 : i32
    return %arg0, %c0_i32, %c0_i32_0 : i32, i32, i32
  }
}

</mosaic_0001>

<llo_original>
// kernel: tpu_custom_call.1
$region0: #{tpu_custom_call.1}
  #allocation0 [shape = 'u32[]', space=smem, size = 0x4, offset = 0x4, fixed_abs, tag = 'smem constant byte address 0x4 - core index']
  #allocation1 [shape = 'u32[144,128]{1,0:T(1,128)}', space=vmem, size = 0x12000, scoped, tag = 'internal scratch']
  %s0 = inlined_call_operand.vmem [shape: bf16[2,256,64], index: 0, kind: input, shape index: {}]
  %s1 = inlined_call_operand.vmem [shape: f32[2,2,392,1], index: 1, kind: input, shape index: {}]
  %s2 = inlined_call_operand.vmem [shape: f32[2,2,392,1], index: 2, kind: input, shape index: {}]
  %s3 = inlined_call_operand.vmem [shape: f32[1,256], index: 3, kind: input, shape index: {}]
  %s4 = inlined_call_operand.vmem [shape: f32[1,256], index: 4, kind: input, shape index: {}]
  %s5 = inlined_call_operand.vmem [shape: bf16[2,392,64], index: 5, kind: output, shape index: {}]
  %s6 = sld [smem:[#allocation0]]
  $region53: #{tpu_custom_call.1} parent=0
    _
  %s8 = ssub.s32 1, %s6
  %s9 = scalar_select 0, %s8, %s6
  loop: start=0, step=1, limit=4
  $region2: #{tpu_custom_call.1} parent=0 // loop_pre_header
    _
  $region3: #{tpu_custom_call.1} parent=0 // loop_header
    %s11 = sphi 0, %s15
    %p12 = scmp.ge.s32.totalorder %s11, 4
    %s21 = sphi 0, %s23
    %s24 = sphi 0, %s21
    %s25 = sphi 0, %s24
    %s41 = sphi 0, %s25
    %s47 = sphi 0, %s49
    %s50 = sphi 0, %s47
    %s51 = sphi 0, %s50
    %s67 = sphi 0, %s51
    %s73 = sphi 0, %s75
    %s76 = sphi 0, %s73
    %s77 = sphi 0, %s76
    %s93 = sphi 0, %s77
    %s97 = sphi 0, %s97
    %s99 = sphi 0, %s97
    %s100 = sphi 0, %s99
    %s114 = sphi 0, %s100
    %s118 = sphi 0, %s118
    %s120 = sphi 0, %s118
    %s121 = sphi 0, %s120
    %s135 = sphi 0, %s121
    %s141 = sphi 0, %s143
    %s144 = sphi 0, %s141
    %s145 = sphi 0, %s144
    %s161 = sphi 0, %s145
  $region4: #{tpu_custom_call.1} parent=0 // loop_header_branch
    %14 = sbr.rel (%p12) target = $region8
  $region5: #{tpu_custom_call.1} parent=0 // loop_body
    %s16 = ssub.s32 %s11, 1
    %s17 = ssub.s32 %s11, 2
    %s18 = sadd.s32 %s11, 1
    %s19 = ssub.s32 %s11, %s18
    %p20 = scmp.eq.s32.totalorder %s19, 0
    %s22 = sadd.s32 %s21, 1
    %s23 = scalar_select %p20, %s21, %s22
    %p26 = pneg %p20
    %p27 = scmp.eq.s32.totalorder %s11, 1
    %p28 = por %p26, %p27
    %p29 = scmp.ne.s32.totalorder %s21, %s24
    %p30 = scmp.eq.s32.totalorder %s11, 0
    %p31 = por %p29, %p30
    %p32 = scmp.ne.s32.totalorder %s21, %s24
    %p33 = scmp.eq.s32.totalorder %s16, 1
    %p34 = por %p32, %p33
    %p35 = scmp.ne.s32.totalorder %s24, %s25
    %p36 = scmp.eq.s32.totalorder %s16, 0
    %p37 = por %p35, %p36
    %p38 = scmp.ne.s32.totalorder %s24, %s25
    %p39 = scmp.eq.s32.totalorder %s17, 1
    %p40 = por %p38, %p39
    %p42 = scmp.ne.s32.totalorder %s25, %s41
    %p43 = scmp.eq.s32.totalorder %s17, 0
    %p44 = por %p42, %p43
    %s45 = ssub.s32 %s11, %s18
    %p46 = scmp.eq.s32.totalorder %s45, 0
    %s48 = sadd.s32 %s47, 1
    %s49 = scalar_select %p46, %s47, %s48
    %p52 = pneg %p46
    %p53 = scmp.eq.s32.totalorder %s11, 1
    %p54 = por %p52, %p53
    %p55 = scmp.ne.s32.totalorder %s47, %s50
    %p56 = scmp.eq.s32.totalorder %s11, 0
    %p57 = por %p55, %p56
    %p58 = scmp.ne.s32.totalorder %s47, %s50
    %p59 = scmp.eq.s32.totalorder %s16, 1
    %p60 = por %p58, %p59
    %p61 = scmp.ne.s32.totalorder %s50, %s51
    %p62 = scmp.eq.s32.totalorder %s16, 0
    %p63 = por %p61, %p62
    %p64 = scmp.ne.s32.totalorder %s50, %s51
    %p65 = scmp.eq.s32.totalorder %s17, 1
    %p66 = por %p64, %p65
    %p68 = scmp.ne.s32.totalorder %s51, %s67
    %p69 = scmp.eq.s32.totalorder %s17, 0
    %p70 = por %p68, %p69
    %s71 = ssub.s32 %s11, %s18
    %p72 = scmp.eq.s32.totalorder %s71, 0
    %s74 = sadd.s32 %s73, 1
    %s75 = scalar_select %p72, %s73, %s74
    %p78 = pneg %p72
    %p79 = scmp.eq.s32.totalorder %s11, 1
    %p80 = por %p78, %p79
    %p81 = scmp.ne.s32.totalorder %s73, %s76
    %p82 = scmp.eq.s32.totalorder %s11, 0
    %p83 = por %p81, %p82
    %p84 = scmp.ne.s32.totalorder %s73, %s76
    %p85 = scmp.eq.s32.totalorder %s16, 1
    %p86 = por %p84, %p85
    %p87 = scmp.ne.s32.totalorder %s76, %s77
    %p88 = scmp.eq.s32.totalorder %s16, 0
    %p89 = por %p87, %p88
    %p90 = scmp.ne.s32.totalorder %s76, %s77
    %p91 = scmp.eq.s32.totalorder %s17, 1
    %p92 = por %p90, %p91
    %p94 = scmp.ne.s32.totalorder %s77, %s93
    %p95 = scmp.eq.s32.totalorder %s17, 0
    %p96 = por %p94, %p95
    %s98 = sadd.s32 %s97, 1
    %p101 = scmp.eq.s32.totalorder %s11, 1
    %p102 = scmp.ne.s32.totalorder %s97, %s99
    %p103 = scmp.eq.s32.totalorder %s11, 0
    %p104 = por %p102, %p103
    %p105 = scmp.ne.s32.totalorder %s97, %s99
    %p106 = scmp.eq.s32.totalorder %s16, 1
    %p107 = por %p105, %p106
    %p108 = scmp.ne.s32.totalorder %s99, %s100
    %p109 = scmp.eq.s32.totalorder %s16, 0
    %p110 = por %p108, %p109
    %p111 = scmp.ne.s32.totalorder %s99, %s100
    %p112 = scmp.eq.s32.totalorder %s17, 1
    %p113 = por %p111, %p112
    %p115 = scmp.ne.s32.totalorder %s100, %s114
    %p116 = scmp.eq.s32.totalorder %s17, 0
    %p117 = por %p115, %p116
    %s119 = sadd.s32 %s118, 1
    %p122 = scmp.eq.s32.totalorder %s11, 1
    %p123 = scmp.ne.s32.totalorder %s118, %s120
    %p124 = scmp.eq.s32.totalorder %s11, 0
    %p125 = por %p123, %p124
    %p126 = scmp.ne.s32.totalorder %s118, %s120
    %p127 = scmp.eq.s32.totalorder %s16, 1
    %p128 = por %p126, %p127
    %p129 = scmp.ne.s32.totalorder %s120, %s121
    %p130 = scmp.eq.s32.totalorder %s16, 0
    %p131 = por %p129, %p130
    %p132 = scmp.ne.s32.totalorder %s120, %s121
    %p133 = scmp.eq.s32.totalorder %s17, 1
    %p134 = por %p132, %p133
    %p136 = scmp.ne.s32.totalorder %s121, %s135
    %p137 = scmp.eq.s32.totalorder %s17, 0
    %p138 = por %p136, %p137
    %s139 = ssub.s32 %s11, %s18
    %p140 = scmp.eq.s32.totalorder %s139, 0
    %s142 = sadd.s32 %s141, 1
    %s143 = scalar_select %p140, %s141, %s142
    %p146 = pneg %p140
    %p147 = scmp.eq.s32.totalorder %s11, 1
    %p148 = por %p146, %p147
    %p149 = scmp.ne.s32.totalorder %s141, %s144
    %p150 = scmp.eq.s32.totalorder %s11, 0
    %p151 = por %p149, %p150
    %p152 = scmp.ne.s32.totalorder %s141, %s144
    %p153 = scmp.eq.s32.totalorder %s16, 1
    %p154 = por %p152, %p153
    %p155 = scmp.ne.s32.totalorder %s144, %s145
    %p156 = scmp.eq.s32.totalorder %s16, 0
    %p157 = por %p155, %p156
    %p158 = scmp.ne.s32.totalorder %s144, %s145
    %p159 = scmp.eq.s32.totalorder %s17, 1
    %p160 = por %p158, %p159
    %p162 = scmp.ne.s32.totalorder %s145, %s161
    %p163 = scmp.eq.s32.totalorder %s17, 0
    %p164 = por %p162, %p163
    %p165 = scmp.le.s32.totalorder 1, %s11
    %p166 = scmp.lt.s32.totalorder %s11, 3
    %p167 = pnand %p165, %p166
    %p168 = pneg %p167
    // Predicated region
    $region9: #{tpu_custom_call.1} parent=5 // pred_check
      _
    $region10: #{tpu_custom_call.1} parent=5 // pred_check_branch
      %170 = sbr.rel (%p167) target = $region12
    $region11: #{tpu_custom_call.1} parent=5 // pred_region
      %s171 = ssub.s32 %s11, 1
      // Predicated region
      $region13: #{tpu_custom_call.1} parent=11 // pred_check
        %p172 = pneg %p110
      $region14: #{tpu_custom_call.1} parent=11 // pred_check_branch
        %174 = sbr.rel (%p172) target = $region16
      $region15: #{tpu_custom_call.1} parent=11 // pred_region
        _
      $region16: #{tpu_custom_call.1} parent=11 // pred_fallthru
        _
      // Predicated region
      $region17: #{tpu_custom_call.1} parent=11 // pred_check
        %p175 = pneg %p131
      $region18: #{tpu_custom_call.1} parent=11 // pred_check_branch
        %177 = sbr.rel (%p175) target = $region20
      $region19: #{tpu_custom_call.1} parent=11 // pred_region
        _
      $region20: #{tpu_custom_call.1} parent=11 // pred_fallthru
        _
    $region12: #{tpu_custom_call.1} parent=5 // pred_fallthru
      _
    %p178 = scmp.lt.s32.totalorder %s11, 2
    // Predicated region
    $region21: #{tpu_custom_call.1} parent=5 // pred_check
      %p179 = pneg %p178
    $region22: #{tpu_custom_call.1} parent=5 // pred_check_branch
      %181 = sbr.rel (%p179) target = $region24
    $region23: #{tpu_custom_call.1} parent=5 // pred_region
      // Predicated region
      $region25: #{tpu_custom_call.1} parent=23 // pred_check
        %p182 = pneg %p31
      $region26: #{tpu_custom_call.1} parent=23 // pred_check_branch
        %184 = sbr.rel (%p182) target = $region28
      $region27: #{tpu_custom_call.1} parent=23 // pred_region
        %p185 = scmp.lt.s32.totalorder %s11, 1
        %s186 = scalar_select %p185, %s11, 1
        %s187 = smul.addr %s186, 32
        %s188 = smul.addr %s187, 4
        %s189 = scalar_lea.vmem %s0, %s188
      $region28: #{tpu_custom_call.1} parent=23 // pred_fallthru
        _
      // Predicated region
      $region29: #{tpu_custom_call.1} parent=23 // pred_check
        %p190 = pneg %p57
      $region30: #{tpu_custom_call.1} parent=23 // pred_check_branch
        %192 = sbr.rel (%p190) target = $region32
      $region31: #{tpu_custom_call.1} parent=23 // pred_region
        %p193 = scmp.lt.s32.totalorder %s11, 1
        %s194 = scalar_select %p193, %s11, 1
        %s195 = smul.addr %s194, 98
        %s196 = smul.addr %s195, 8
        %s197 = scalar_lea.vmem %s1, %s196
      $region32: #{tpu_custom_call.1} parent=23 // pred_fallthru
        _
      // Predicated region
      $region33: #{tpu_custom_call.1} parent=23 // pred_check
        %p198 = pneg %p83
      $region34: #{tpu_custom_call.1} parent=23 // pred_check_branch
        %200 = sbr.rel (%p198) target = $region36
      $region35: #{tpu_custom_call.1} parent=23 // pred_region
        %p201 = scmp.lt.s32.totalorder %s11, 1
        %s202 = scalar_select %p201, %s11, 1
        %s203 = smul.addr %s202, 98
        %s204 = smul.addr %s203, 8
        %s205 = scalar_lea.vmem %s2, %s204
      $region36: #{tpu_custom_call.1} parent=23 // pred_fallthru
        _
    $region24: #{tpu_custom_call.1} parent=5 // pred_fallthru
      _
    %p206 = scmp.le.s32.totalorder 1, %s11
    %p207 = scmp.lt.s32.totalorder %s11, 3
    %p208 = pnand %p206, %p207
    %p209 = pneg %p208
    // Predicated region
    $region37: #{tpu_custom_call.1} parent=5 // pred_check
      _
    $region38: #{tpu_custom_call.1} parent=5 // pred_check_branch
      %211 = sbr.rel (%p208) target = $region40
    $region39: #{tpu_custom_call.1} parent=5 // pred_region
      %s212 = ssub.s32 %s11, 1
      %p213 = scmp.lt.s32.totalorder %s16, 1
      %s214 = scalar_select %p213, %s16, 1
      %s215 = smul.addr %s214, 32
      %s216 = smul.addr %s215, 4
      %s217 = scalar_lea.vmem %s0, %s216
      %p218 = pneg %p37
      %p219 = pneg %p34
      %p220 = scmp.lt.s32.totalorder %s16, 1
      %s221 = scalar_select %p220, %s16, 1
      %s222 = smul.addr %s221, 98
      %s223 = smul.addr %s222, 8
      %s224 = scalar_lea.vmem %s1, %s223
      %p225 = pneg %p63
      %p226 = pneg %p60
      %p227 = scmp.lt.s32.totalorder %s16, 1
      %s228 = scalar_select %p227, %s16, 1
      %s229 = smul.addr %s228, 98
      %s230 = smul.addr %s229, 8
      %s231 = scalar_lea.vmem %s2, %s230
      %p232 = pneg %p89
      %p233 = pneg %p86
      %p234 = pneg %p110
      %p235 = pneg %p107
      %p236 = pneg %p131
      %p237 = pneg %p128
      %p238 = pneg %p157
      %p239 = pneg %p154
      %p240 = scmp.lt.s32.totalorder %s16, 1
      %s241 = scalar_select %p240, %s16, 1
      %s242 = smul.addr %s241, 49
      %s243 = smul.addr %s242, 4
      %s244 = scalar_lea.vmem %s5, %s243
      %p245 = scmp.lt.s32.totalorder %s16, 1
      %s246 = scalar_select %p245, %s16, 1
      %s247 = smul.addr %s246, 32
      %s248 = smul.addr %s247, 4
      %s249 = scalar_lea.vmem %s0, %s248
      %p250 = scmp.lt.s32.totalorder %s16, 1
      %s251 = scalar_select %p250, %s16, 1
      %s252 = smul.addr %s251, 98
      %s253 = smul.addr %s252, 8
      %s254 = scalar_lea.vmem %s1, %s253
      %p255 = scmp.lt.s32.totalorder %s16, 1
      %s256 = scalar_select %p255, %s16, 1
      %s257 = smul.addr %s256, 98
      %s258 = smul.addr %s257, 8
      %s259 = scalar_lea.vmem %s2, %s258
      %p260 = scmp.lt.s32.totalorder %s16, 1
      %s261 = scalar_select %p260, %s16, 1
      %s262 = smul.addr %s261, 49
      %s263 = smul.addr %s262, 4
      %s264 = scalar_lea.vmem %s5, %s263
      %v266 = vld [vmem:[%s3] sm:$0x3]
      %v267 = vld [vmem:[%s4] sm:$0x3]
      %v268 = vld [vmem:[%s254] sm:$0xff]
      %v269 = vld [vmem:[%s254 + $0x8] sm:$0xff]
      %v270 = vld [vmem:[%s254 + $0x10] sm:$0xff]
      %v271 = vld [vmem:[%s254 + $0x18] sm:$0xff]
      %v272 = vld [vmem:[%s254 + $0x20] sm:$0xff]
      %v273 = vld [vmem:[%s254 + $0x28] sm:$0xff]
      %v274 = vld [vmem:[%s254 + $0x30] sm:$0xff]
      %v275 = vld [vmem:[%s254 + $0x38] sm:$0xff]
      %v276 = vld [vmem:[%s254 + $0x40] sm:$0xff]
      %v277 = vld [vmem:[%s254 + $0x48] sm:$0xff]
      %v278 = vld [vmem:[%s254 + $0x50] sm:$0xff]
      %v279 = vld [vmem:[%s254 + $0x58] sm:$0xff]
      %v280 = vld [vmem:[%s254 + $0x60] sm:$0xff]
      %v281 = vld [vmem:[%s254 + $0x68] sm:$0xff]
      %v282 = vld [vmem:[%s254 + $0x70] sm:$0xff]
      %v283 = vld [vmem:[%s254 + $0x78] sm:$0xff]
      %v284 = vld [vmem:[%s254 + $0x80] sm:$0xff]
      %v285 = vld [vmem:[%s254 + $0x88] sm:$0xff]
      %v286 = vld [vmem:[%s254 + $0x90] sm:$0xff]
      %v287 = vld [vmem:[%s254 + $0x98] sm:$0xff]
      %v288 = vld [vmem:[%s254 + $0xa0] sm:$0xff]
      %v289 = vld [vmem:[%s254 + $0xa8] sm:$0xff]
      %v290 = vld [vmem:[%s254 + $0xb0] sm:$0xff]
      %v291 = vld [vmem:[%s254 + $0xb8] sm:$0xff]
      %v292 = vld [vmem:[%s254 + $0xc0] sm:$0xff]
      %v293 = vld [vmem:[%s254 + $0xc8] sm:$0xff]
      %v294 = vld [vmem:[%s254 + $0xd0] sm:$0xff]
      %v295 = vld [vmem:[%s254 + $0xd8] sm:$0xff]
      %v296 = vld [vmem:[%s254 + $0xe0] sm:$0xff]
      %v297 = vld [vmem:[%s254 + $0xe8] sm:$0xff]
      %v298 = vld [vmem:[%s254 + $0xf0] sm:$0xff]
      %v299 = vld [vmem:[%s254 + $0xf8] sm:$0xff]
      %v300 = vld [vmem:[%s254 + $0x100] sm:$0xff]
      %v301 = vld [vmem:[%s254 + $0x108] sm:$0xff]
      %v302 = vld [vmem:[%s254 + $0x110] sm:$0xff]
      %v303 = vld [vmem:[%s254 + $0x118] sm:$0xff]
      %v304 = vld [vmem:[%s254 + $0x120] sm:$0xff]
      %v305 = vld [vmem:[%s254 + $0x128] sm:$0xff]
      %v306 = vld [vmem:[%s254 + $0x130] sm:$0xff]
      %v307 = vld [vmem:[%s254 + $0x138] sm:$0xff]
      %v308 = vld [vmem:[%s254 + $0x140] sm:$0xff]
      %v309 = vld [vmem:[%s254 + $0x148] sm:$0xff]
      %v310 = vld [vmem:[%s254 + $0x150] sm:$0xff]
      %v311 = vld [vmem:[%s254 + $0x158] sm:$0xff]
      %v312 = vld [vmem:[%s254 + $0x160] sm:$0xff]
      %v313 = vld [vmem:[%s254 + $0x168] sm:$0xff]
      %v314 = vld [vmem:[%s254 + $0x170] sm:$0xff]
      %v315 = vld [vmem:[%s254 + $0x178] sm:$0xff]
      %v316 = vld [vmem:[%s254 + $0x180] sm:$0xff]
      %vm317 = vcmp.ge.f32.partialorder %v268, -1.0
      %vm318 = vcmp.ge.f32.partialorder %v269, -1.0
      %vm319 = vcmp.ge.f32.partialorder %v270, -1.0
      %vm320 = vcmp.ge.f32.partialorder %v271, -1.0
      %vm321 = vcmp.ge.f32.partialorder %v272, -1.0
      %vm322 = vcmp.ge.f32.partialorder %v273, -1.0
      %vm323 = vcmp.ge.f32.partialorder %v274, -1.0
      %vm324 = vcmp.ge.f32.partialorder %v275, -1.0
      %vm325 = vcmp.ge.f32.partialorder %v276, -1.0
      %vm326 = vcmp.ge.f32.partialorder %v277, -1.0
      %vm327 = vcmp.ge.f32.partialorder %v278, -1.0
      %vm328 = vcmp.ge.f32.partialorder %v279, -1.0
      %vm329 = vcmp.ge.f32.partialorder %v280, -1.0
      %vm330 = vcmp.ge.f32.partialorder %v281, -1.0
      %vm331 = vcmp.ge.f32.partialorder %v282, -1.0
      %vm332 = vcmp.ge.f32.partialorder %v283, -1.0
      %vm333 = vcmp.ge.f32.partialorder %v284, -1.0
      %vm334 = vcmp.ge.f32.partialorder %v285, -1.0
      %vm335 = vcmp.ge.f32.partialorder %v286, -1.0
      %vm336 = vcmp.ge.f32.partialorder %v287, -1.0
      %vm337 = vcmp.ge.f32.partialorder %v288, -1.0
      %vm338 = vcmp.ge.f32.partialorder %v289, -1.0
      %vm339 = vcmp.ge.f32.partialorder %v290, -1.0
      %vm340 = vcmp.ge.f32.partialorder %v291, -1.0
      %vm341 = vcmp.ge.f32.partialorder %v292, -1.0
      %vm342 = vcmp.ge.f32.partialorder %v293, -1.0
      %vm343 = vcmp.ge.f32.partialorder %v294, -1.0
      %vm344 = vcmp.ge.f32.partialorder %v295, -1.0
      %vm345 = vcmp.ge.f32.partialorder %v296, -1.0
      %vm346 = vcmp.ge.f32.partialorder %v297, -1.0
      %vm347 = vcmp.ge.f32.partialorder %v298, -1.0
      %vm348 = vcmp.ge.f32.partialorder %v299, -1.0
      %vm349 = vcmp.ge.f32.partialorder %v300, -1.0
      %vm350 = vcmp.ge.f32.partialorder %v301, -1.0
      %vm351 = vcmp.ge.f32.partialorder %v302, -1.0
      %vm352 = vcmp.ge.f32.partialorder %v303, -1.0
      %vm353 = vcmp.ge.f32.partialorder %v304, -1.0
      %vm354 = vcmp.ge.f32.partialorder %v305, -1.0
      %vm355 = vcmp.ge.f32.partialorder %v306, -1.0
      %vm356 = vcmp.ge.f32.partialorder %v307, -1.0
      %vm357 = vcmp.ge.f32.partialorder %v308, -1.0
      %vm358 = vcmp.ge.f32.partialorder %v309, -1.0
      %vm359 = vcmp.ge.f32.partialorder %v310, -1.0
      %vm360 = vcmp.ge.f32.partialorder %v311, -1.0
      %vm361 = vcmp.ge.f32.partialorder %v312, -1.0
      %vm362 = vcmp.ge.f32.partialorder %v313, -1.0
      %vm363 = vcmp.ge.f32.partialorder %v314, -1.0
      %vm364 = vcmp.ge.f32.partialorder %v315, -1.0
      %vm365 = vcmp.ge.f32.partialorder %v316, -1.0
      %vm366 = vcmp.le.f32.partialorder %v268, 16.0
      %vm367 = vcmp.le.f32.partialorder %v269, 16.0
      %vm368 = vcmp.le.f32.partialorder %v270, 16.0
      %vm369 = vcmp.le.f32.partialorder %v271, 16.0
      %vm370 = vcmp.le.f32.partialorder %v272, 16.0
      %vm371 = vcmp.le.f32.partialorder %v273, 16.0
      %vm372 = vcmp.le.f32.partialorder %v274, 16.0
      %vm373 = vcmp.le.f32.partialorder %v275, 16.0
      %vm374 = vcmp.le.f32.partialorder %v276, 16.0
      %vm375 = vcmp.le.f32.partialorder %v277, 16.0
      %vm376 = vcmp.le.f32.partialorder %v278, 16.0
      %vm377 = vcmp.le.f32.partialorder %v279, 16.0
      %vm378 = vcmp.le.f32.partialorder %v280, 16.0
      %vm379 = vcmp.le.f32.partialorder %v281, 16.0
      %vm380 = vcmp.le.f32.partialorder %v282, 16.0
      %vm381 = vcmp.le.f32.partialorder %v283, 16.0
      %vm382 = vcmp.le.f32.partialorder %v284, 16.0
      %vm383 = vcmp.le.f32.partialorder %v285, 16.0
      %vm384 = vcmp.le.f32.partialorder %v286, 16.0
      %vm385 = vcmp.le.f32.partialorder %v287, 16.0
      %vm386 = vcmp.le.f32.partialorder %v288, 16.0
      %vm387 = vcmp.le.f32.partialorder %v289, 16.0
      %vm388 = vcmp.le.f32.partialorder %v290, 16.0
      %vm389 = vcmp.le.f32.partialorder %v291, 16.0
      %vm390 = vcmp.le.f32.partialorder %v292, 16.0
      %vm391 = vcmp.le.f32.partialorder %v293, 16.0
      %vm392 = vcmp.le.f32.partialorder %v294, 16.0
      %vm393 = vcmp.le.f32.partialorder %v295, 16.0
      %vm394 = vcmp.le.f32.partialorder %v296, 16.0
      %vm395 = vcmp.le.f32.partialorder %v297, 16.0
      %vm396 = vcmp.le.f32.partialorder %v298, 16.0
      %vm397 = vcmp.le.f32.partialorder %v299, 16.0
      %vm398 = vcmp.le.f32.partialorder %v300, 16.0
      %vm399 = vcmp.le.f32.partialorder %v301, 16.0
      %vm400 = vcmp.le.f32.partialorder %v302, 16.0
      %vm401 = vcmp.le.f32.partialorder %v303, 16.0
      %vm402 = vcmp.le.f32.partialorder %v304, 16.0
      %vm403 = vcmp.le.f32.partialorder %v305, 16.0
      %vm404 = vcmp.le.f32.partialorder %v306, 16.0
      %vm405 = vcmp.le.f32.partialorder %v307, 16.0
      %vm406 = vcmp.le.f32.partialorder %v308, 16.0
      %vm407 = vcmp.le.f32.partialorder %v309, 16.0
      %vm408 = vcmp.le.f32.partialorder %v310, 16.0
      %vm409 = vcmp.le.f32.partialorder %v311, 16.0
      %vm410 = vcmp.le.f32.partialorder %v312, 16.0
      %vm411 = vcmp.le.f32.partialorder %v313, 16.0
      %vm412 = vcmp.le.f32.partialorder %v314, 16.0
      %vm413 = vcmp.le.f32.partialorder %v315, 16.0
      %vm414 = vcmp.le.f32.partialorder %v316, 16.0
      %vm415 = vmand %vm317, %vm366
      %vm416 = vmand %vm318, %vm367
      %vm417 = vmand %vm319, %vm368
      %vm418 = vmand %vm320, %vm369
      %vm419 = vmand %vm321, %vm370
      %vm420 = vmand %vm322, %vm371
      %vm421 = vmand %vm323, %vm372
      %vm422 = vmand %vm324, %vm373
      %vm423 = vmand %vm325, %vm374
      %vm424 = vmand %vm326, %vm375
      %vm425 = vmand %vm327, %vm376
      %vm426 = vmand %vm328, %vm377
      %vm427 = vmand %vm329, %vm378
      %vm428 = vmand %vm330, %vm379
      %vm429 = vmand %vm331, %vm380
      %vm430 = vmand %vm332, %vm381
      %vm431 = vmand %vm333, %vm382
      %vm432 = vmand %vm334, %vm383
      %vm433 = vmand %vm335, %vm384
      %vm434 = vmand %vm336, %vm385
      %vm435 = vmand %vm337, %vm386
      %vm436 = vmand %vm338, %vm387
      %vm437 = vmand %vm339, %vm388
      %vm438 = vmand %vm340, %vm389
      %vm439 = vmand %vm341, %vm390
      %vm440 = vmand %vm342, %vm391
      %vm441 = vmand %vm343, %vm392
      %vm442 = vmand %vm344, %vm393
      %vm443 = vmand %vm345, %vm394
      %vm444 = vmand %vm346, %vm395
      %vm445 = vmand %vm347, %vm396
      %vm446 = vmand %vm348, %vm397
      %vm447 = vmand %vm349, %vm398
      %vm448 = vmand %vm350, %vm399
      %vm449 = vmand %vm351, %vm400
      %vm450 = vmand %vm352, %vm401
      %vm451 = vmand %vm353, %vm402
      %vm452 = vmand %vm354, %vm403
      %vm453 = vmand %vm355, %vm404
      %vm454 = vmand %vm356, %vm405
      %vm455 = vmand %vm357, %vm406
      %vm456 = vmand %vm358, %vm407
      %vm457 = vmand %vm359, %vm408
      %vm458 = vmand %vm360, %vm409
      %vm459 = vmand %vm361, %vm410
      %vm460 = vmand %vm362, %vm411
      %vm461 = vmand %vm363, %vm412
      %vm462 = vmand %vm364, %vm413
      %vm463 = vmand %vm365, %vm414
      %v464 = vmax.f32 %v268, 0.0
      %v465 = vmax.f32 %v269, 0.0
      %v466 = vmax.f32 %v270, 0.0
      %v467 = vmax.f32 %v271, 0.0
      %v468 = vmax.f32 %v272, 0.0
      %v469 = vmax.f32 %v273, 0.0
      %v470 = vmax.f32 %v274, 0.0
      %v471 = vmax.f32 %v275, 0.0
      %v472 = vmax.f32 %v276, 0.0
      %v473 = vmax.f32 %v277, 0.0
      %v474 = vmax.f32 %v278, 0.0
      %v475 = vmax.f32 %v279, 0.0
      %v476 = vmax.f32 %v280, 0.0
      %v477 = vmax.f32 %v281, 0.0
      %v478 = vmax.f32 %v282, 0.0
      %v479 = vmax.f32 %v283, 0.0
      %v480 = vmax.f32 %v284, 0.0
      %v481 = vmax.f32 %v285, 0.0
      %v482 = vmax.f32 %v286, 0.0
      %v483 = vmax.f32 %v287, 0.0
      %v484 = vmax.f32 %v288, 0.0
      %v485 = vmax.f32 %v289, 0.0
      %v486 = vmax.f32 %v290, 0.0
      %v487 = vmax.f32 %v291, 0.0
      %v488 = vmax.f32 %v292, 0.0
      %v489 = vmax.f32 %v293, 0.0
      %v490 = vmax.f32 %v294, 0.0
      %v491 = vmax.f32 %v295, 0.0
      %v492 = vmax.f32 %v296, 0.0
      %v493 = vmax.f32 %v297, 0.0
      %v494 = vmax.f32 %v298, 0.0
      %v495 = vmax.f32 %v299, 0.0
      %v496 = vmax.f32 %v300, 0.0
      %v497 = vmax.f32 %v301, 0.0
      %v498 = vmax.f32 %v302, 0.0
      %v499 = vmax.f32 %v303, 0.0
      %v500 = vmax.f32 %v304, 0.0
      %v501 = vmax.f32 %v305, 0.0
      %v502 = vmax.f32 %v306, 0.0
      %v503 = vmax.f32 %v307, 0.0
      %v504 = vmax.f32 %v308, 0.0
      %v505 = vmax.f32 %v309, 0.0
      %v506 = vmax.f32 %v310, 0.0
      %v507 = vmax.f32 %v311, 0.0
      %v508 = vmax.f32 %v312, 0.0
      %v509 = vmax.f32 %v313, 0.0
      %v510 = vmax.f32 %v314, 0.0
      %v511 = vmax.f32 %v315, 0.0
      %v512 = vmax.f32 %v316, 0.0
      %v513 = vmin.f32 %v464, 15.0
      %v514 = vmin.f32 %v465, 15.0
      %v515 = vmin.f32 %v466, 15.0
      %v516 = vmin.f32 %v467, 15.0
      %v517 = vmin.f32 %v468, 15.0
      %v518 = vmin.f32 %v469, 15.0
      %v519 = vmin.f32 %v470, 15.0
      %v520 = vmin.f32 %v471, 15.0
      %v521 = vmin.f32 %v472, 15.0
      %v522 = vmin.f32 %v473, 15.0
      %v523 = vmin.f32 %v474, 15.0
      %v524 = vmin.f32 %v475, 15.0
      %v525 = vmin.f32 %v476, 15.0
      %v526 = vmin.f32 %v477, 15.0
      %v527 = vmin.f32 %v478, 15.0
      %v528 = vmin.f32 %v479, 15.0
      %v529 = vmin.f32 %v480, 15.0
      %v530 = vmin.f32 %v481, 15.0
      %v531 = vmin.f32 %v482, 15.0
      %v532 = vmin.f32 %v483, 15.0
      %v533 = vmin.f32 %v484, 15.0
      %v534 = vmin.f32 %v485, 15.0
      %v535 = vmin.f32 %v486, 15.0
      %v536 = vmin.f32 %v487, 15.0
      %v537 = vmin.f32 %v488, 15.0
      %v538 = vmin.f32 %v489, 15.0
      %v539 = vmin.f32 %v490, 15.0
      %v540 = vmin.f32 %v491, 15.0
      %v541 = vmin.f32 %v492, 15.0
      %v542 = vmin.f32 %v493, 15.0
      %v543 = vmin.f32 %v494, 15.0
      %v544 = vmin.f32 %v495, 15.0
      %v545 = vmin.f32 %v496, 15.0
      %v546 = vmin.f32 %v497, 15.0
      %v547 = vmin.f32 %v498, 15.0
      %v548 = vmin.f32 %v499, 15.0
      %v549 = vmin.f32 %v500, 15.0
      %v550 = vmin.f32 %v501, 15.0
      %v551 = vmin.f32 %v502, 15.0
      %v552 = vmin.f32 %v503, 15.0
      %v553 = vmin.f32 %v504, 15.0
      %v554 = vmin.f32 %v505, 15.0
      %v555 = vmin.f32 %v506, 15.0
      %v556 = vmin.f32 %v507, 15.0
      %v557 = vmin.f32 %v508, 15.0
      %v558 = vmin.f32 %v509, 15.0
      %v559 = vmin.f32 %v510, 15.0
      %v560 = vmin.f32 %v511, 15.0
      %v561 = vmin.f32 %v512, 15.0
      %563 = vset.pattern.permute.xlu0 0
      %564 = vperm.xlu0 %563, %v513
      %v565 = vpop.permute.xlu0 %564
      %568 = vset.pattern.permute.xlu0 0
      %569 = vperm.xlu0 %568, %v514
      %v570 = vpop.permute.xlu0 %569
      %573 = vset.pattern.permute.xlu0 0
      %574 = vperm.xlu0 %573, %v515
      %v575 = vpop.permute.xlu0 %574
      %578 = vset.pattern.permute.xlu0 0
      %579 = vperm.xlu0 %578, %v516
      %v580 = vpop.permute.xlu0 %579
      %583 = vset.pattern.permute.xlu0 0
      %584 = vperm.xlu0 %583, %v517
      %v585 = vpop.permute.xlu0 %584
      %588 = vset.pattern.permute.xlu0 0
      %589 = vperm.xlu0 %588, %v518
      %v590 = vpop.permute.xlu0 %589
      %593 = vset.pattern.permute.xlu0 0
      %594 = vperm.xlu0 %593, %v519
      %v595 = vpop.permute.xlu0 %594
      %598 = vset.pattern.permute.xlu0 0
      %599 = vperm.xlu0 %598, %v520
      %v600 = vpop.permute.xlu0 %599
      %603 = vset.pattern.permute.xlu0 0
      %604 = vperm.xlu0 %603, %v521
      %v605 = vpop.permute.xlu0 %604
      %608 = vset.pattern.permute.xlu0 0
      %609 = vperm.xlu0 %608, %v522
      %v610 = vpop.permute.xlu0 %609
      %613 = vset.pattern.permute.xlu0 0
      %614 = vperm.xlu0 %613, %v523
      %v615 = vpop.permute.xlu0 %614
      %618 = vset.pattern.permute.xlu0 0
      %619 = vperm.xlu0 %618, %v524
      %v620 = vpop.permute.xlu0 %619
      %623 = vset.pattern.permute.xlu0 0
      %624 = vperm.xlu0 %623, %v525
      %v625 = vpop.permute.xlu0 %624
      %628 = vset.pattern.permute.xlu0 0
      %629 = vperm.xlu0 %628, %v526
      %v630 = vpop.permute.xlu0 %629
      %633 = vset.pattern.permute.xlu0 0
      %634 = vperm.xlu0 %633, %v527
      %v635 = vpop.permute.xlu0 %634
      %638 = vset.pattern.permute.xlu0 0
      %639 = vperm.xlu0 %638, %v528
      %v640 = vpop.permute.xlu0 %639
      %643 = vset.pattern.permute.xlu0 0
      %644 = vperm.xlu0 %643, %v529
      %v645 = vpop.permute.xlu0 %644
      %648 = vset.pattern.permute.xlu0 0
      %649 = vperm.xlu0 %648, %v530
      %v650 = vpop.permute.xlu0 %649
      %653 = vset.pattern.permute.xlu0 0
      %654 = vperm.xlu0 %653, %v531
      %v655 = vpop.permute.xlu0 %654
      %658 = vset.pattern.permute.xlu0 0
      %659 = vperm.xlu0 %658, %v532
      %v660 = vpop.permute.xlu0 %659
      %663 = vset.pattern.permute.xlu0 0
      %664 = vperm.xlu0 %663, %v533
      %v665 = vpop.permute.xlu0 %664
      %668 = vset.pattern.permute.xlu0 0
      %669 = vperm.xlu0 %668, %v534
      %v670 = vpop.permute.xlu0 %669
      %673 = vset.pattern.permute.xlu0 0
      %674 = vperm.xlu0 %673, %v535
      %v675 = vpop.permute.xlu0 %674
      %678 = vset.pattern.permute.xlu0 0
      %679 = vperm.xlu0 %678, %v536
      %v680 = vpop.permute.xlu0 %679
      %683 = vset.pattern.permute.xlu0 0
      %684 = vperm.xlu0 %683, %v537
      %v685 = vpop.permute.xlu0 %684
      %688 = vset.pattern.permute.xlu0 0
      %689 = vperm.xlu0 %688, %v538
      %v690 = vpop.permute.xlu0 %689
      %693 = vset.pattern.permute.xlu0 0
      %694 = vperm.xlu0 %693, %v539
      %v695 = vpop.permute.xlu0 %694
      %698 = vset.pattern.permute.xlu0 0
      %699 = vperm.xlu0 %698, %v540
      %v700 = vpop.permute.xlu0 %699
      %703 = vset.pattern.permute.xlu0 0
      %704 = vperm.xlu0 %703, %v541
      %v705 = vpop.permute.xlu0 %704
      %708 = vset.pattern.permute.xlu0 0
      %709 = vperm.xlu0 %708, %v542
      %v710 = vpop.permute.xlu0 %709
      %713 = vset.pattern.permute.xlu0 0
      %714 = vperm.xlu0 %713, %v543
      %v715 = vpop.permute.xlu0 %714
      %718 = vset.pattern.permute.xlu0 0
      %719 = vperm.xlu0 %718, %v544
      %v720 = vpop.permute.xlu0 %719
      %723 = vset.pattern.permute.xlu0 0
      %724 = vperm.xlu0 %723, %v545
      %v725 = vpop.permute.xlu0 %724
      %728 = vset.pattern.permute.xlu0 0
      %729 = vperm.xlu0 %728, %v546
      %v730 = vpop.permute.xlu0 %729
      %733 = vset.pattern.permute.xlu0 0
      %734 = vperm.xlu0 %733, %v547
      %v735 = vpop.permute.xlu0 %734
      %738 = vset.pattern.permute.xlu0 0
      %739 = vperm.xlu0 %738, %v548
      %v740 = vpop.permute.xlu0 %739
      %743 = vset.pattern.permute.xlu0 0
      %744 = vperm.xlu0 %743, %v549
      %v745 = vpop.permute.xlu0 %744
      %748 = vset.pattern.permute.xlu0 0
      %749 = vperm.xlu0 %748, %v550
      %v750 = vpop.permute.xlu0 %749
      %753 = vset.pattern.permute.xlu0 0
      %754 = vperm.xlu0 %753, %v551
      %v755 = vpop.permute.xlu0 %754
      %758 = vset.pattern.permute.xlu0 0
      %759 = vperm.xlu0 %758, %v552
      %v760 = vpop.permute.xlu0 %759
      %763 = vset.pattern.permute.xlu0 0
      %764 = vperm.xlu0 %763, %v553
      %v765 = vpop.permute.xlu0 %764
      %768 = vset.pattern.permute.xlu0 0
      %769 = vperm.xlu0 %768, %v554
      %v770 = vpop.permute.xlu0 %769
      %773 = vset.pattern.permute.xlu0 0
      %774 = vperm.xlu0 %773, %v555
      %v775 = vpop.permute.xlu0 %774
      %778 = vset.pattern.permute.xlu0 0
      %779 = vperm.xlu0 %778, %v556
      %v780 = vpop.permute.xlu0 %779
      %783 = vset.pattern.permute.xlu0 0
      %784 = vperm.xlu0 %783, %v557
      %v785 = vpop.permute.xlu0 %784
      %788 = vset.pattern.permute.xlu0 0
      %789 = vperm.xlu0 %788, %v558
      %v790 = vpop.permute.xlu0 %789
      %793 = vset.pattern.permute.xlu0 0
      %794 = vperm.xlu0 %793, %v559
      %v795 = vpop.permute.xlu0 %794
      %798 = vset.pattern.permute.xlu0 0
      %799 = vperm.xlu0 %798, %v560
      %v800 = vpop.permute.xlu0 %799
      %803 = vset.pattern.permute.xlu0 0
      %804 = vperm.xlu0 %803, %v561
      %v805 = vpop.permute.xlu0 %804
      %v808 = vlaneseq
      %v809 = vshrl.u32 %v808, 7
      %v810 = vsub.s32 0, %v809
      %v811 = vrot.slane %v266, %v810
      %v812 = vlaneseq
      %v813 = vshrl.u32 %v812, 7
      %v814 = vsub.s32 1, %v813
      %v815 = vrot.slane %v266, %v814
      %v818 = vsub.f32 %v565, %v811
      %v819 = vsub.f32 %v565, %v815
      %v820 = vsub.f32 %v570, %v811
      %v821 = vsub.f32 %v570, %v815
      %v822 = vsub.f32 %v575, %v811
      %v823 = vsub.f32 %v575, %v815
      %v824 = vsub.f32 %v580, %v811
      %v825 = vsub.f32 %v580, %v815
      %v826 = vsub.f32 %v585, %v811
      %v827 = vsub.f32 %v585, %v815
      %v828 = vsub.f32 %v590, %v811
      %v829 = vsub.f32 %v590, %v815
      %v830 = vsub.f32 %v595, %v811
      %v831 = vsub.f32 %v595, %v815
      %v832 = vsub.f32 %v600, %v811
      %v833 = vsub.f32 %v600, %v815
      %v834 = vsub.f32 %v605, %v811
      %v835 = vsub.f32 %v605, %v815
      %v836 = vsub.f32 %v610, %v811
      %v837 = vsub.f32 %v610, %v815
      %v838 = vsub.f32 %v615, %v811
      %v839 = vsub.f32 %v615, %v815
      %v840 = vsub.f32 %v620, %v811
      %v841 = vsub.f32 %v620, %v815
      %v842 = vsub.f32 %v625, %v811
      %v843 = vsub.f32 %v625, %v815
      %v844 = vsub.f32 %v630, %v811
      %v845 = vsub.f32 %v630, %v815
      %v846 = vsub.f32 %v635, %v811
      %v847 = vsub.f32 %v635, %v815
      %v848 = vsub.f32 %v640, %v811
      %v849 = vsub.f32 %v640, %v815
      %v850 = vsub.f32 %v645, %v811
      %v851 = vsub.f32 %v645, %v815
      %v852 = vsub.f32 %v650, %v811
      %v853 = vsub.f32 %v650, %v815
      %v854 = vsub.f32 %v655, %v811
      %v855 = vsub.f32 %v655, %v815
      %v856 = vsub.f32 %v660, %v811
      %v857 = vsub.f32 %v660, %v815
      %v858 = vsub.f32 %v665, %v811
      %v859 = vsub.f32 %v665, %v815
      %v860 = vsub.f32 %v670, %v811
      %v861 = vsub.f32 %v670, %v815
      %v862 = vsub.f32 %v675, %v811
      %v863 = vsub.f32 %v675, %v815
      %v864 = vsub.f32 %v680, %v811
      %v865 = vsub.f32 %v680, %v815
      %v866 = vsub.f32 %v685, %v811
      %v867 = vsub.f32 %v685, %v815
      %v868 = vsub.f32 %v690, %v811
      %v869 = vsub.f32 %v690, %v815
      %v870 = vsub.f32 %v695, %v811
      %v871 = vsub.f32 %v695, %v815
      %v872 = vsub.f32 %v700, %v811
      %v873 = vsub.f32 %v700, %v815
      %v874 = vsub.f32 %v705, %v811
      %v875 = vsub.f32 %v705, %v815
      %v876 = vsub.f32 %v710, %v811
      %v877 = vsub.f32 %v710, %v815
      %v878 = vsub.f32 %v715, %v811
      %v879 = vsub.f32 %v715, %v815
      %v880 = vsub.f32 %v720, %v811
      %v881 = vsub.f32 %v720, %v815
      %v882 = vsub.f32 %v725, %v811
      %v883 = vsub.f32 %v725, %v815
      %v884 = vsub.f32 %v730, %v811
      %v885 = vsub.f32 %v730, %v815
      %v886 = vsub.f32 %v735, %v811
      %v887 = vsub.f32 %v735, %v815
      %v888 = vsub.f32 %v740, %v811
      %v889 = vsub.f32 %v740, %v815
      %v890 = vsub.f32 %v745, %v811
      %v891 = vsub.f32 %v745, %v815
      %v892 = vsub.f32 %v750, %v811
      %v893 = vsub.f32 %v750, %v815
      %v894 = vsub.f32 %v755, %v811
      %v895 = vsub.f32 %v755, %v815
      %v896 = vsub.f32 %v760, %v811
      %v897 = vsub.f32 %v760, %v815
      %v898 = vsub.f32 %v765, %v811
      %v899 = vsub.f32 %v765, %v815
      %v900 = vsub.f32 %v770, %v811
      %v901 = vsub.f32 %v770, %v815
      %v902 = vsub.f32 %v775, %v811
      %v903 = vsub.f32 %v775, %v815
      %v904 = vsub.f32 %v780, %v811
      %v905 = vsub.f32 %v780, %v815
      %v906 = vsub.f32 %v785, %v811
      %v907 = vsub.f32 %v785, %v815
      %v908 = vsub.f32 %v790, %v811
      %v909 = vsub.f32 %v790, %v815
      %v910 = vsub.f32 %v795, %v811
      %v911 = vsub.f32 %v795, %v815
      %v912 = vsub.f32 %v800, %v811
      %v913 = vsub.f32 %v800, %v815
      %v914 = vsub.f32 %v805, %v811
      %v915 = vsub.f32 %v805, %v815
      %v916 = vand.u32 2147483647, %v818
      %v917 = vand.u32 2147483647, %v819
      %v918 = vand.u32 2147483647, %v820
      %v919 = vand.u32 2147483647, %v821
      %v920 = vand.u32 2147483647, %v822
      %v921 = vand.u32 2147483647, %v823
      %v922 = vand.u32 2147483647, %v824
      %v923 = vand.u32 2147483647, %v825
      %v924 = vand.u32 2147483647, %v826
      %v925 = vand.u32 2147483647, %v827
      %v926 = vand.u32 2147483647, %v828
      %v927 = vand.u32 2147483647, %v829
      %v928 = vand.u32 2147483647, %v830
      %v929 = vand.u32 2147483647, %v831
      %v930 = vand.u32 2147483647, %v832
      %v931 = vand.u32 2147483647, %v833
      %v932 = vand.u32 2147483647, %v834
      %v933 = vand.u32 2147483647, %v835
      %v934 = vand.u32 2147483647, %v836
      %v935 = vand.u32 2147483647, %v837
      %v936 = vand.u32 2147483647, %v838
      %v937 = vand.u32 2147483647, %v839
      %v938 = vand.u32 2147483647, %v840
      %v939 = vand.u32 2147483647, %v841
      %v940 = vand.u32 2147483647, %v842
      %v941 = vand.u32 2147483647, %v843
      %v942 = vand.u32 2147483647, %v844
      %v943 = vand.u32 2147483647, %v845
      %v944 = vand.u32 2147483647, %v846
      %v945 = vand.u32 2147483647, %v847
      %v946 = vand.u32 2147483647, %v848
      %v947 = vand.u32 2147483647, %v849
      %v948 = vand.u32 2147483647, %v850
      %v949 = vand.u32 2147483647, %v851
      %v950 = vand.u32 2147483647, %v852
      %v951 = vand.u32 2147483647, %v853
      %v952 = vand.u32 2147483647, %v854
      %v953 = vand.u32 2147483647, %v855
      %v954 = vand.u32 2147483647, %v856
      %v955 = vand.u32 2147483647, %v857
      %v956 = vand.u32 2147483647, %v858
      %v957 = vand.u32 2147483647, %v859
      %v958 = vand.u32 2147483647, %v860
      %v959 = vand.u32 2147483647, %v861
      %v960 = vand.u32 2147483647, %v862
      %v961 = vand.u32 2147483647, %v863
      %v962 = vand.u32 2147483647, %v864
      %v963 = vand.u32 2147483647, %v865
      %v964 = vand.u32 2147483647, %v866
      %v965 = vand.u32 2147483647, %v867
      %v966 = vand.u32 2147483647, %v868
      %v967 = vand.u32 2147483647, %v869
      %v968 = vand.u32 2147483647, %v870
      %v969 = vand.u32 2147483647, %v871
      %v970 = vand.u32 2147483647, %v872
      %v971 = vand.u32 2147483647, %v873
      %v972 = vand.u32 2147483647, %v874
      %v973 = vand.u32 2147483647, %v875
      %v974 = vand.u32 2147483647, %v876
      %v975 = vand.u32 2147483647, %v877
      %v976 = vand.u32 2147483647, %v878
      %v977 = vand.u32 2147483647, %v879
      %v978 = vand.u32 2147483647, %v880
      %v979 = vand.u32 2147483647, %v881
      %v980 = vand.u32 2147483647, %v882
      %v981 = vand.u32 2147483647, %v883
      %v982 = vand.u32 2147483647, %v884
      %v983 = vand.u32 2147483647, %v885
      %v984 = vand.u32 2147483647, %v886
      %v985 = vand.u32 2147483647, %v887
      %v986 = vand.u32 2147483647, %v888
      %v987 = vand.u32 2147483647, %v889
      %v988 = vand.u32 2147483647, %v890
      %v989 = vand.u32 2147483647, %v891
      %v990 = vand.u32 2147483647, %v892
      %v991 = vand.u32 2147483647, %v893
      %v992 = vand.u32 2147483647, %v894
      %v993 = vand.u32 2147483647, %v895
      %v994 = vand.u32 2147483647, %v896
      %v995 = vand.u32 2147483647, %v897
      %v996 = vand.u32 2147483647, %v898
      %v997 = vand.u32 2147483647, %v899
      %v998 = vand.u32 2147483647, %v900
      %v999 = vand.u32 2147483647, %v901
      %v1000 = vand.u32 2147483647, %v902
      %v1001 = vand.u32 2147483647, %v903
      %v1002 = vand.u32 2147483647, %v904
      %v1003 = vand.u32 2147483647, %v905
      %v1004 = vand.u32 2147483647, %v906
      %v1005 = vand.u32 2147483647, %v907
      %v1006 = vand.u32 2147483647, %v908
      %v1007 = vand.u32 2147483647, %v909
      %v1008 = vand.u32 2147483647, %v910
      %v1009 = vand.u32 2147483647, %v911
      %v1010 = vand.u32 2147483647, %v912
      %v1011 = vand.u32 2147483647, %v913
      %v1012 = vand.u32 2147483647, %v914
      %v1013 = vand.u32 2147483647, %v915
      %v1014 = vsub.f32 1.0, %v916
      %v1015 = vsub.f32 1.0, %v917
      %v1016 = vsub.f32 1.0, %v918
      %v1017 = vsub.f32 1.0, %v919
      %v1018 = vsub.f32 1.0, %v920
      %v1019 = vsub.f32 1.0, %v921
      %v1020 = vsub.f32 1.0, %v922
      %v1021 = vsub.f32 1.0, %v923
      %v1022 = vsub.f32 1.0, %v924
      %v1023 = vsub.f32 1.0, %v925
      %v1024 = vsub.f32 1.0, %v926
      %v1025 = vsub.f32 1.0, %v927
      %v1026 = vsub.f32 1.0, %v928
      %v1027 = vsub.f32 1.0, %v929
      %v1028 = vsub.f32 1.0, %v930
      %v1029 = vsub.f32 1.0, %v931
      %v1030 = vsub.f32 1.0, %v932
      %v1031 = vsub.f32 1.0, %v933
      %v1032 = vsub.f32 1.0, %v934
      %v1033 = vsub.f32 1.0, %v935
      %v1034 = vsub.f32 1.0, %v936
      %v1035 = vsub.f32 1.0, %v937
      %v1036 = vsub.f32 1.0, %v938
      %v1037 = vsub.f32 1.0, %v939
      %v1038 = vsub.f32 1.0, %v940
      %v1039 = vsub.f32 1.0, %v941
      %v1040 = vsub.f32 1.0, %v942
      %v1041 = vsub.f32 1.0, %v943
      %v1042 = vsub.f32 1.0, %v944
      %v1043 = vsub.f32 1.0, %v945
      %v1044 = vsub.f32 1.0, %v946
      %v1045 = vsub.f32 1.0, %v947
      %v1046 = vsub.f32 1.0, %v948
      %v1047 = vsub.f32 1.0, %v949
      %v1048 = vsub.f32 1.0, %v950
      %v1049 = vsub.f32 1.0, %v951
      %v1050 = vsub.f32 1.0, %v952
      %v1051 = vsub.f32 1.0, %v953
      %v1052 = vsub.f32 1.0, %v954
      %v1053 = vsub.f32 1.0, %v955
      %v1054 = vsub.f32 1.0, %v956
      %v1055 = vsub.f32 1.0, %v957
      %v1056 = vsub.f32 1.0, %v958
      %v1057 = vsub.f32 1.0, %v959
      %v1058 = vsub.f32 1.0, %v960
      %v1059 = vsub.f32 1.0, %v961
      %v1060 = vsub.f32 1.0, %v962
      %v1061 = vsub.f32 1.0, %v963
      %v1062 = vsub.f32 1.0, %v964
      %v1063 = vsub.f32 1.0, %v965
      %v1064 = vsub.f32 1.0, %v966
      %v1065 = vsub.f32 1.0, %v967
      %v1066 = vsub.f32 1.0, %v968
      %v1067 = vsub.f32 1.0, %v969
      %v1068 = vsub.f32 1.0, %v970
      %v1069 = vsub.f32 1.0, %v971
      %v1070 = vsub.f32 1.0, %v972
      %v1071 = vsub.f32 1.0, %v973
      %v1072 = vsub.f32 1.0, %v974
      %v1073 = vsub.f32 1.0, %v975
      %v1074 = vsub.f32 1.0, %v976
      %v1075 = vsub.f32 1.0, %v977
      %v1076 = vsub.f32 1.0, %v978
      %v1077 = vsub.f32 1.0, %v979
      %v1078 = vsub.f32 1.0, %v980
      %v1079 = vsub.f32 1.0, %v981
      %v1080 = vsub.f32 1.0, %v982
      %v1081 = vsub.f32 1.0, %v983
      %v1082 = vsub.f32 1.0, %v984
      %v1083 = vsub.f32 1.0, %v985
      %v1084 = vsub.f32 1.0, %v986
      %v1085 = vsub.f32 1.0, %v987
      %v1086 = vsub.f32 1.0, %v988
      %v1087 = vsub.f32 1.0, %v989
      %v1088 = vsub.f32 1.0, %v990
      %v1089 = vsub.f32 1.0, %v991
      %v1090 = vsub.f32 1.0, %v992
      %v1091 = vsub.f32 1.0, %v993
      %v1092 = vsub.f32 1.0, %v994
      %v1093 = vsub.f32 1.0, %v995
      %v1094 = vsub.f32 1.0, %v996
      %v1095 = vsub.f32 1.0, %v997
      %v1096 = vsub.f32 1.0, %v998
      %v1097 = vsub.f32 1.0, %v999
      %v1098 = vsub.f32 1.0, %v1000
      %v1099 = vsub.f32 1.0, %v1001
      %v1100 = vsub.f32 1.0, %v1002
      %v1101 = vsub.f32 1.0, %v1003
      %v1102 = vsub.f32 1.0, %v1004
      %v1103 = vsub.f32 1.0, %v1005
      %v1104 = vsub.f32 1.0, %v1006
      %v1105 = vsub.f32 1.0, %v1007
      %v1106 = vsub.f32 1.0, %v1008
      %v1107 = vsub.f32 1.0, %v1009
      %v1108 = vsub.f32 1.0, %v1010
      %v1109 = vsub.f32 1.0, %v1011
      %v1110 = vsub.f32 1.0, %v1012
      %v1111 = vsub.f32 1.0, %v1013
      %v1112 = vmax.f32 %v1014, 0.0
      %v1113 = vmax.f32 %v1015, 0.0
      %v1114 = vmax.f32 %v1016, 0.0
      %v1115 = vmax.f32 %v1017, 0.0
      %v1116 = vmax.f32 %v1018, 0.0
      %v1117 = vmax.f32 %v1019, 0.0
      %v1118 = vmax.f32 %v1020, 0.0
      %v1119 = vmax.f32 %v1021, 0.0
      %v1120 = vmax.f32 %v1022, 0.0
      %v1121 = vmax.f32 %v1023, 0.0
      %v1122 = vmax.f32 %v1024, 0.0
      %v1123 = vmax.f32 %v1025, 0.0
      %v1124 = vmax.f32 %v1026, 0.0
      %v1125 = vmax.f32 %v1027, 0.0
      %v1126 = vmax.f32 %v1028, 0.0
      %v1127 = vmax.f32 %v1029, 0.0
      %v1128 = vmax.f32 %v1030, 0.0
      %v1129 = vmax.f32 %v1031, 0.0
      %v1130 = vmax.f32 %v1032, 0.0
      %v1131 = vmax.f32 %v1033, 0.0
      %v1132 = vmax.f32 %v1034, 0.0
      %v1133 = vmax.f32 %v1035, 0.0
      %v1134 = vmax.f32 %v1036, 0.0
      %v1135 = vmax.f32 %v1037, 0.0
      %v1136 = vmax.f32 %v1038, 0.0
      %v1137 = vmax.f32 %v1039, 0.0
      %v1138 = vmax.f32 %v1040, 0.0
      %v1139 = vmax.f32 %v1041, 0.0
      %v1140 = vmax.f32 %v1042, 0.0
      %v1141 = vmax.f32 %v1043, 0.0
      %v1142 = vmax.f32 %v1044, 0.0
      %v1143 = vmax.f32 %v1045, 0.0
      %v1144 = vmax.f32 %v1046, 0.0
      %v1145 = vmax.f32 %v1047, 0.0
      %v1146 = vmax.f32 %v1048, 0.0
      %v1147 = vmax.f32 %v1049, 0.0
      %v1148 = vmax.f32 %v1050, 0.0
      %v1149 = vmax.f32 %v1051, 0.0
      %v1150 = vmax.f32 %v1052, 0.0
      %v1151 = vmax.f32 %v1053, 0.0
      %v1152 = vmax.f32 %v1054, 0.0
      %v1153 = vmax.f32 %v1055, 0.0
      %v1154 = vmax.f32 %v1056, 0.0
      %v1155 = vmax.f32 %v1057, 0.0
      %v1156 = vmax.f32 %v1058, 0.0
      %v1157 = vmax.f32 %v1059, 0.0
      %v1158 = vmax.f32 %v1060, 0.0
      %v1159 = vmax.f32 %v1061, 0.0
      %v1160 = vmax.f32 %v1062, 0.0
      %v1161 = vmax.f32 %v1063, 0.0
      %v1162 = vmax.f32 %v1064, 0.0
      %v1163 = vmax.f32 %v1065, 0.0
      %v1164 = vmax.f32 %v1066, 0.0
      %v1165 = vmax.f32 %v1067, 0.0
      %v1166 = vmax.f32 %v1068, 0.0
      %v1167 = vmax.f32 %v1069, 0.0
      %v1168 = vmax.f32 %v1070, 0.0
      %v1169 = vmax.f32 %v1071, 0.0
      %v1170 = vmax.f32 %v1072, 0.0
      %v1171 = vmax.f32 %v1073, 0.0
      %v1172 = vmax.f32 %v1074, 0.0
      %v1173 = vmax.f32 %v1075, 0.0
      %v1174 = vmax.f32 %v1076, 0.0
      %v1175 = vmax.f32 %v1077, 0.0
      %v1176 = vmax.f32 %v1078, 0.0
      %v1177 = vmax.f32 %v1079, 0.0
      %v1178 = vmax.f32 %v1080, 0.0
      %v1179 = vmax.f32 %v1081, 0.0
      %v1180 = vmax.f32 %v1082, 0.0
      %v1181 = vmax.f32 %v1083, 0.0
      %v1182 = vmax.f32 %v1084, 0.0
      %v1183 = vmax.f32 %v1085, 0.0
      %v1184 = vmax.f32 %v1086, 0.0
      %v1185 = vmax.f32 %v1087, 0.0
      %v1186 = vmax.f32 %v1088, 0.0
      %v1187 = vmax.f32 %v1089, 0.0
      %v1188 = vmax.f32 %v1090, 0.0
      %v1189 = vmax.f32 %v1091, 0.0
      %v1190 = vmax.f32 %v1092, 0.0
      %v1191 = vmax.f32 %v1093, 0.0
      %v1192 = vmax.f32 %v1094, 0.0
      %v1193 = vmax.f32 %v1095, 0.0
      %v1194 = vmax.f32 %v1096, 0.0
      %v1195 = vmax.f32 %v1097, 0.0
      %v1196 = vmax.f32 %v1098, 0.0
      %v1197 = vmax.f32 %v1099, 0.0
      %v1198 = vmax.f32 %v1100, 0.0
      %v1199 = vmax.f32 %v1101, 0.0
      %v1200 = vmax.f32 %v1102, 0.0
      %v1201 = vmax.f32 %v1103, 0.0
      %v1202 = vmax.f32 %v1104, 0.0
      %v1203 = vmax.f32 %v1105, 0.0
      %v1204 = vmax.f32 %v1106, 0.0
      %v1205 = vmax.f32 %v1107, 0.0
      %v1206 = vmax.f32 %v1108, 0.0
      %v1207 = vmax.f32 %v1109, 0.0
      %v1208 = vmax.f32 %v1110, 0.0
      %v1209 = vmax.f32 %v1111, 0.0
      %v1210 = vsel %vm415, 1, 0
      %v1211 = vsel %vm416, 1, 0
      %v1212 = vsel %vm417, 1, 0
      %v1213 = vsel %vm418, 1, 0
      %v1214 = vsel %vm419, 1, 0
      %v1215 = vsel %vm420, 1, 0
      %v1216 = vsel %vm421, 1, 0
      %v1217 = vsel %vm422, 1, 0
      %v1218 = vsel %vm423, 1, 0
      %v1219 = vsel %vm424, 1, 0
      %v1220 = vsel %vm425, 1, 0
      %v1221 = vsel %vm426, 1, 0
      %v1222 = vsel %vm427, 1, 0
      %v1223 = vsel %vm428, 1, 0
      %v1224 = vsel %vm429, 1, 0
      %v1225 = vsel %vm430, 1, 0
      %v1226 = vsel %vm431, 1, 0
      %v1227 = vsel %vm432, 1, 0
      %v1228 = vsel %vm433, 1, 0
      %v1229 = vsel %vm434, 1, 0
      %v1230 = vsel %vm435, 1, 0
      %v1231 = vsel %vm436, 1, 0
      %v1232 = vsel %vm437, 1, 0
      %v1233 = vsel %vm438, 1, 0
      %v1234 = vsel %vm439, 1, 0
      %v1235 = vsel %vm440, 1, 0
      %v1236 = vsel %vm441, 1, 0
      %v1237 = vsel %vm442, 1, 0
      %v1238 = vsel %vm443, 1, 0
      %v1239 = vsel %vm444, 1, 0
      %v1240 = vsel %vm445, 1, 0
      %v1241 = vsel %vm446, 1, 0
      %v1242 = vsel %vm447, 1, 0
      %v1243 = vsel %vm448, 1, 0
      %v1244 = vsel %vm449, 1, 0
      %v1245 = vsel %vm450, 1, 0
      %v1246 = vsel %vm451, 1, 0
      %v1247 = vsel %vm452, 1, 0
      %v1248 = vsel %vm453, 1, 0
      %v1249 = vsel %vm454, 1, 0
      %v1250 = vsel %vm455, 1, 0
      %v1251 = vsel %vm456, 1, 0
      %v1252 = vsel %vm457, 1, 0
      %v1253 = vsel %vm458, 1, 0
      %v1254 = vsel %vm459, 1, 0
      %v1255 = vsel %vm460, 1, 0
      %v1256 = vsel %vm461, 1, 0
      %v1257 = vsel %vm462, 1, 0
      %v1258 = vsel %vm463, 1, 0
      %1259 = vset.pattern.permute.xlu0 0
      %1260 = vperm.xlu0 %1259, %v1210
      %v1261 = vpop.permute.xlu0 %1260
      %1262 = vset.pattern.permute.xlu0 0
      %1263 = vperm.xlu0 %1262, %v1211
      %v1264 = vpop.permute.xlu0 %1263
      %1265 = vset.pattern.permute.xlu0 0
      %1266 = vperm.xlu0 %1265, %v1212
      %v1267 = vpop.permute.xlu0 %1266
      %1268 = vset.pattern.permute.xlu0 0
      %1269 = vperm.xlu0 %1268, %v1213
      %v1270 = vpop.permute.xlu0 %1269
      %1271 = vset.pattern.permute.xlu0 0
      %1272 = vperm.xlu0 %1271, %v1214
      %v1273 = vpop.permute.xlu0 %1272
      %1274 = vset.pattern.permute.xlu0 0
      %1275 = vperm.xlu0 %1274, %v1215
      %v1276 = vpop.permute.xlu0 %1275
      %1277 = vset.pattern.permute.xlu0 0
      %1278 = vperm.xlu0 %1277, %v1216
      %v1279 = vpop.permute.xlu0 %1278
      %1280 = vset.pattern.permute.xlu0 0
      %1281 = vperm.xlu0 %1280, %v1217
      %v1282 = vpop.permute.xlu0 %1281
      %1283 = vset.pattern.permute.xlu0 0
      %1284 = vperm.xlu0 %1283, %v1218
      %v1285 = vpop.permute.xlu0 %1284
      %1286 = vset.pattern.permute.xlu0 0
      %1287 = vperm.xlu0 %1286, %v1219
      %v1288 = vpop.permute.xlu0 %1287
      %1289 = vset.pattern.permute.xlu0 0
      %1290 = vperm.xlu0 %1289, %v1220
      %v1291 = vpop.permute.xlu0 %1290
      %1292 = vset.pattern.permute.xlu0 0
      %1293 = vperm.xlu0 %1292, %v1221
      %v1294 = vpop.permute.xlu0 %1293
      %1295 = vset.pattern.permute.xlu0 0
      %1296 = vperm.xlu0 %1295, %v1222
      %v1297 = vpop.permute.xlu0 %1296
      %1298 = vset.pattern.permute.xlu0 0
      %1299 = vperm.xlu0 %1298, %v1223
      %v1300 = vpop.permute.xlu0 %1299
      %1301 = vset.pattern.permute.xlu0 0
      %1302 = vperm.xlu0 %1301, %v1224
      %v1303 = vpop.permute.xlu0 %1302
      %1304 = vset.pattern.permute.xlu0 0
      %1305 = vperm.xlu0 %1304, %v1225
      %v1306 = vpop.permute.xlu0 %1305
      %1307 = vset.pattern.permute.xlu0 0
      %1308 = vperm.xlu0 %1307, %v1226
      %v1309 = vpop.permute.xlu0 %1308
      %1310 = vset.pattern.permute.xlu0 0
      %1311 = vperm.xlu0 %1310, %v1227
      %v1312 = vpop.permute.xlu0 %1311
      %1313 = vset.pattern.permute.xlu0 0
      %1314 = vperm.xlu0 %1313, %v1228
      %v1315 = vpop.permute.xlu0 %1314
      %1316 = vset.pattern.permute.xlu0 0
      %1317 = vperm.xlu0 %1316, %v1229
      %v1318 = vpop.permute.xlu0 %1317
      %1319 = vset.pattern.permute.xlu0 0
      %1320 = vperm.xlu0 %1319, %v1230
      %v1321 = vpop.permute.xlu0 %1320
      %1322 = vset.pattern.permute.xlu0 0
      %1323 = vperm.xlu0 %1322, %v1231
      %v1324 = vpop.permute.xlu0 %1323
      %1325 = vset.pattern.permute.xlu0 0
      %1326 = vperm.xlu0 %1325, %v1232
      %v1327 = vpop.permute.xlu0 %1326
      %1328 = vset.pattern.permute.xlu0 0
      %1329 = vperm.xlu0 %1328, %v1233
      %v1330 = vpop.permute.xlu0 %1329
      %1331 = vset.pattern.permute.xlu0 0
      %1332 = vperm.xlu0 %1331, %v1234
      %v1333 = vpop.permute.xlu0 %1332
      %1334 = vset.pattern.permute.xlu0 0
      %1335 = vperm.xlu0 %1334, %v1235
      %v1336 = vpop.permute.xlu0 %1335
      %1337 = vset.pattern.permute.xlu0 0
      %1338 = vperm.xlu0 %1337, %v1236
      %v1339 = vpop.permute.xlu0 %1338
      %1340 = vset.pattern.permute.xlu0 0
      %1341 = vperm.xlu0 %1340, %v1237
      %v1342 = vpop.permute.xlu0 %1341
      %1343 = vset.pattern.permute.xlu0 0
      %1344 = vperm.xlu0 %1343, %v1238
      %v1345 = vpop.permute.xlu0 %1344
      %1346 = vset.pattern.permute.xlu0 0
      %1347 = vperm.xlu0 %1346, %v1239
      %v1348 = vpop.permute.xlu0 %1347
      %1349 = vset.pattern.permute.xlu0 0
      %1350 = vperm.xlu0 %1349, %v1240
      %v1351 = vpop.permute.xlu0 %1350
      %1352 = vset.pattern.permute.xlu0 0
      %1353 = vperm.xlu0 %1352, %v1241
      %v1354 = vpop.permute.xlu0 %1353
      %1355 = vset.pattern.permute.xlu0 0
      %1356 = vperm.xlu0 %1355, %v1242
      %v1357 = vpop.permute.xlu0 %1356
      %1358 = vset.pattern.permute.xlu0 0
      %1359 = vperm.xlu0 %1358, %v1243
      %v1360 = vpop.permute.xlu0 %1359
      %1361 = vset.pattern.permute.xlu0 0
      %1362 = vperm.xlu0 %1361, %v1244
      %v1363 = vpop.permute.xlu0 %1362
      %1364 = vset.pattern.permute.xlu0 0
      %1365 = vperm.xlu0 %1364, %v1245
      %v1366 = vpop.permute.xlu0 %1365
      %1367 = vset.pattern.permute.xlu0 0
      %1368 = vperm.xlu0 %1367, %v1246
      %v1369 = vpop.permute.xlu0 %1368
      %1370 = vset.pattern.permute.xlu0 0
      %1371 = vperm.xlu0 %1370, %v1247
      %v1372 = vpop.permute.xlu0 %1371
      %1373 = vset.pattern.permute.xlu0 0
      %1374 = vperm.xlu0 %1373, %v1248
      %v1375 = vpop.permute.xlu0 %1374
      %1376 = vset.pattern.permute.xlu0 0
      %1377 = vperm.xlu0 %1376, %v1249
      %v1378 = vpop.permute.xlu0 %1377
      %1379 = vset.pattern.permute.xlu0 0
      %1380 = vperm.xlu0 %1379, %v1250
      %v1381 = vpop.permute.xlu0 %1380
      %1382 = vset.pattern.permute.xlu0 0
      %1383 = vperm.xlu0 %1382, %v1251
      %v1384 = vpop.permute.xlu0 %1383
      %1385 = vset.pattern.permute.xlu0 0
      %1386 = vperm.xlu0 %1385, %v1252
      %v1387 = vpop.permute.xlu0 %1386
      %1388 = vset.pattern.permute.xlu0 0
      %1389 = vperm.xlu0 %1388, %v1253
      %v1390 = vpop.permute.xlu0 %1389
      %1391 = vset.pattern.permute.xlu0 0
      %1392 = vperm.xlu0 %1391, %v1254
      %v1393 = vpop.permute.xlu0 %1392
      %1394 = vset.pattern.permute.xlu0 0
      %1395 = vperm.xlu0 %1394, %v1255
      %v1396 = vpop.permute.xlu0 %1395
      %1397 = vset.pattern.permute.xlu0 0
      %1398 = vperm.xlu0 %1397, %v1256
      %v1399 = vpop.permute.xlu0 %1398
      %1400 = vset.pattern.permute.xlu0 0
      %1401 = vperm.xlu0 %1400, %v1257
      %v1402 = vpop.permute.xlu0 %1401
      %1403 = vset.pattern.permute.xlu0 0
      %1404 = vperm.xlu0 %1403, %v1258
      %v1405 = vpop.permute.xlu0 %1404
      %vm1406 = vcmp.eq.s32.totalorder %v1261, 1
      %vm1407 = vcmp.eq.s32.totalorder %v1264, 1
      %vm1408 = vcmp.eq.s32.totalorder %v1267, 1
      %vm1409 = vcmp.eq.s32.totalorder %v1270, 1
      %vm1410 = vcmp.eq.s32.totalorder %v1273, 1
      %vm1411 = vcmp.eq.s32.totalorder %v1276, 1
      %vm1412 = vcmp.eq.s32.totalorder %v1279, 1
      %vm1413 = vcmp.eq.s32.totalorder %v1282, 1
      %vm1414 = vcmp.eq.s32.totalorder %v1285, 1
      %vm1415 = vcmp.eq.s32.totalorder %v1288, 1
      %vm1416 = vcmp.eq.s32.totalorder %v1291, 1
      %vm1417 = vcmp.eq.s32.totalorder %v1294, 1
      %vm1418 = vcmp.eq.s32.totalorder %v1297, 1
      %vm1419 = vcmp.eq.s32.totalorder %v1300, 1
      %vm1420 = vcmp.eq.s32.totalorder %v1303, 1
      %vm1421 = vcmp.eq.s32.totalorder %v1306, 1
      %vm1422 = vcmp.eq.s32.totalorder %v1309, 1
      %vm1423 = vcmp.eq.s32.totalorder %v1312, 1
      %vm1424 = vcmp.eq.s32.totalorder %v1315, 1
      %vm1425 = vcmp.eq.s32.totalorder %v1318, 1
      %vm1426 = vcmp.eq.s32.totalorder %v1321, 1
      %vm1427 = vcmp.eq.s32.totalorder %v1324, 1
      %vm1428 = vcmp.eq.s32.totalorder %v1327, 1
      %vm1429 = vcmp.eq.s32.totalorder %v1330, 1
      %vm1430 = vcmp.eq.s32.totalorder %v1333, 1
      %vm1431 = vcmp.eq.s32.totalorder %v1336, 1
      %vm1432 = vcmp.eq.s32.totalorder %v1339, 1
      %vm1433 = vcmp.eq.s32.totalorder %v1342, 1
      %vm1434 = vcmp.eq.s32.totalorder %v1345, 1
      %vm1435 = vcmp.eq.s32.totalorder %v1348, 1
      %vm1436 = vcmp.eq.s32.totalorder %v1351, 1
      %vm1437 = vcmp.eq.s32.totalorder %v1354, 1
      %vm1438 = vcmp.eq.s32.totalorder %v1357, 1
      %vm1439 = vcmp.eq.s32.totalorder %v1360, 1
      %vm1440 = vcmp.eq.s32.totalorder %v1363, 1
      %vm1441 = vcmp.eq.s32.totalorder %v1366, 1
      %vm1442 = vcmp.eq.s32.totalorder %v1369, 1
      %vm1443 = vcmp.eq.s32.totalorder %v1372, 1
      %vm1444 = vcmp.eq.s32.totalorder %v1375, 1
      %vm1445 = vcmp.eq.s32.totalorder %v1378, 1
      %vm1446 = vcmp.eq.s32.totalorder %v1381, 1
      %vm1447 = vcmp.eq.s32.totalorder %v1384, 1
      %vm1448 = vcmp.eq.s32.totalorder %v1387, 1
      %vm1449 = vcmp.eq.s32.totalorder %v1390, 1
      %vm1450 = vcmp.eq.s32.totalorder %v1393, 1
      %vm1451 = vcmp.eq.s32.totalorder %v1396, 1
      %vm1452 = vcmp.eq.s32.totalorder %v1399, 1
      %vm1453 = vcmp.eq.s32.totalorder %v1402, 1
      %vm1454 = vcmp.eq.s32.totalorder %v1405, 1
      %v1455 = vsel %vm1406, %v1112, 0.0
      %v1456 = vsel %vm1406, %v1113, 0.0
      %v1457 = vsel %vm1407, %v1114, 0.0
      %v1458 = vsel %vm1407, %v1115, 0.0
      %v1459 = vsel %vm1408, %v1116, 0.0
      %v1460 = vsel %vm1408, %v1117, 0.0
      %v1461 = vsel %vm1409, %v1118, 0.0
      %v1462 = vsel %vm1409, %v1119, 0.0
      %v1463 = vsel %vm1410, %v1120, 0.0
      %v1464 = vsel %vm1410, %v1121, 0.0
      %v1465 = vsel %vm1411, %v1122, 0.0
      %v1466 = vsel %vm1411, %v1123, 0.0
      %v1467 = vsel %vm1412, %v1124, 0.0
      %v1468 = vsel %vm1412, %v1125, 0.0
      %v1469 = vsel %vm1413, %v1126, 0.0
      %v1470 = vsel %vm1413, %v1127, 0.0
      %v1471 = vsel %vm1414, %v1128, 0.0
      %v1472 = vsel %vm1414, %v1129, 0.0
      %v1473 = vsel %vm1415, %v1130, 0.0
      %v1474 = vsel %vm1415, %v1131, 0.0
      %v1475 = vsel %vm1416, %v1132, 0.0
      %v1476 = vsel %vm1416, %v1133, 0.0
      %v1477 = vsel %vm1417, %v1134, 0.0
      %v1478 = vsel %vm1417, %v1135, 0.0
      %v1479 = vsel %vm1418, %v1136, 0.0
      %v1480 = vsel %vm1418, %v1137, 0.0
      %v1481 = vsel %vm1419, %v1138, 0.0
      %v1482 = vsel %vm1419, %v1139, 0.0
      %v1483 = vsel %vm1420, %v1140, 0.0
      %v1484 = vsel %vm1420, %v1141, 0.0
      %v1485 = vsel %vm1421, %v1142, 0.0
      %v1486 = vsel %vm1421, %v1143, 0.0
      %v1487 = vsel %vm1422, %v1144, 0.0
      %v1488 = vsel %vm1422, %v1145, 0.0
      %v1489 = vsel %vm1423, %v1146, 0.0
      %v1490 = vsel %vm1423, %v1147, 0.0
      %v1491 = vsel %vm1424, %v1148, 0.0
      %v1492 = vsel %vm1424, %v1149, 0.0
      %v1493 = vsel %vm1425, %v1150, 0.0
      %v1494 = vsel %vm1425, %v1151, 0.0
      %v1495 = vsel %vm1426, %v1152, 0.0
      %v1496 = vsel %vm1426, %v1153, 0.0
      %v1497 = vsel %vm1427, %v1154, 0.0
      %v1498 = vsel %vm1427, %v1155, 0.0
      %v1499 = vsel %vm1428, %v1156, 0.0
      %v1500 = vsel %vm1428, %v1157, 0.0
      %v1501 = vsel %vm1429, %v1158, 0.0
      %v1502 = vsel %vm1429, %v1159, 0.0
      %v1503 = vsel %vm1430, %v1160, 0.0
      %v1504 = vsel %vm1430, %v1161, 0.0
      %v1505 = vsel %vm1431, %v1162, 0.0
      %v1506 = vsel %vm1431, %v1163, 0.0
      %v1507 = vsel %vm1432, %v1164, 0.0
      %v1508 = vsel %vm1432, %v1165, 0.0
      %v1509 = vsel %vm1433, %v1166, 0.0
      %v1510 = vsel %vm1433, %v1167, 0.0
      %v1511 = vsel %vm1434, %v1168, 0.0
      %v1512 = vsel %vm1434, %v1169, 0.0
      %v1513 = vsel %vm1435, %v1170, 0.0
      %v1514 = vsel %vm1435, %v1171, 0.0
      %v1515 = vsel %vm1436, %v1172, 0.0
      %v1516 = vsel %vm1436, %v1173, 0.0
      %v1517 = vsel %vm1437, %v1174, 0.0
      %v1518 = vsel %vm1437, %v1175, 0.0
      %v1519 = vsel %vm1438, %v1176, 0.0
      %v1520 = vsel %vm1438, %v1177, 0.0
      %v1521 = vsel %vm1439, %v1178, 0.0
      %v1522 = vsel %vm1439, %v1179, 0.0
      %v1523 = vsel %vm1440, %v1180, 0.0
      %v1524 = vsel %vm1440, %v1181, 0.0
      %v1525 = vsel %vm1441, %v1182, 0.0
      %v1526 = vsel %vm1441, %v1183, 0.0
      %v1527 = vsel %vm1442, %v1184, 0.0
      %v1528 = vsel %vm1442, %v1185, 0.0
      %v1529 = vsel %vm1443, %v1186, 0.0
      %v1530 = vsel %vm1443, %v1187, 0.0
      %v1531 = vsel %vm1444, %v1188, 0.0
      %v1532 = vsel %vm1444, %v1189, 0.0
      %v1533 = vsel %vm1445, %v1190, 0.0
      %v1534 = vsel %vm1445, %v1191, 0.0
      %v1535 = vsel %vm1446, %v1192, 0.0
      %v1536 = vsel %vm1446, %v1193, 0.0
      %v1537 = vsel %vm1447, %v1194, 0.0
      %v1538 = vsel %vm1447, %v1195, 0.0
      %v1539 = vsel %vm1448, %v1196, 0.0
      %v1540 = vsel %vm1448, %v1197, 0.0
      %v1541 = vsel %vm1449, %v1198, 0.0
      %v1542 = vsel %vm1449, %v1199, 0.0
      %v1543 = vsel %vm1450, %v1200, 0.0
      %v1544 = vsel %vm1450, %v1201, 0.0
      %v1545 = vsel %vm1451, %v1202, 0.0
      %v1546 = vsel %vm1451, %v1203, 0.0
      %v1547 = vsel %vm1452, %v1204, 0.0
      %v1548 = vsel %vm1452, %v1205, 0.0
      %v1549 = vsel %vm1453, %v1206, 0.0
      %v1550 = vsel %vm1453, %v1207, 0.0
      %v1551 = vsel %vm1454, %v1208, 0.0
      %v1552 = vsel %vm1454, %v1209, 0.0
      %s1553 = scalar_lea.vmem %s254, 392
      %v1554 = vld [vmem:[%s1553] sm:$0xff]
      %v1555 = vld [vmem:[%s1553 + $0x8] sm:$0xff]
      %v1556 = vld [vmem:[%s1553 + $0x10] sm:$0xff]
      %v1557 = vld [vmem:[%s1553 + $0x18] sm:$0xff]
      %v1558 = vld [vmem:[%s1553 + $0x20] sm:$0xff]
      %v1559 = vld [vmem:[%s1553 + $0x28] sm:$0xff]
      %v1560 = vld [vmem:[%s1553 + $0x30] sm:$0xff]
      %v1561 = vld [vmem:[%s1553 + $0x38] sm:$0xff]
      %v1562 = vld [vmem:[%s1553 + $0x40] sm:$0xff]
      %v1563 = vld [vmem:[%s1553 + $0x48] sm:$0xff]
      %v1564 = vld [vmem:[%s1553 + $0x50] sm:$0xff]
      %v1565 = vld [vmem:[%s1553 + $0x58] sm:$0xff]
      %v1566 = vld [vmem:[%s1553 + $0x60] sm:$0xff]
      %v1567 = vld [vmem:[%s1553 + $0x68] sm:$0xff]
      %v1568 = vld [vmem:[%s1553 + $0x70] sm:$0xff]
      %v1569 = vld [vmem:[%s1553 + $0x78] sm:$0xff]
      %v1570 = vld [vmem:[%s1553 + $0x80] sm:$0xff]
      %v1571 = vld [vmem:[%s1553 + $0x88] sm:$0xff]
      %v1572 = vld [vmem:[%s1553 + $0x90] sm:$0xff]
      %v1573 = vld [vmem:[%s1553 + $0x98] sm:$0xff]
      %v1574 = vld [vmem:[%s1553 + $0xa0] sm:$0xff]
      %v1575 = vld [vmem:[%s1553 + $0xa8] sm:$0xff]
      %v1576 = vld [vmem:[%s1553 + $0xb0] sm:$0xff]
      %v1577 = vld [vmem:[%s1553 + $0xb8] sm:$0xff]
      %v1578 = vld [vmem:[%s1553 + $0xc0] sm:$0xff]
      %v1579 = vld [vmem:[%s1553 + $0xc8] sm:$0xff]
      %v1580 = vld [vmem:[%s1553 + $0xd0] sm:$0xff]
      %v1581 = vld [vmem:[%s1553 + $0xd8] sm:$0xff]
      %v1582 = vld [vmem:[%s1553 + $0xe0] sm:$0xff]
      %v1583 = vld [vmem:[%s1553 + $0xe8] sm:$0xff]
      %v1584 = vld [vmem:[%s1553 + $0xf0] sm:$0xff]
      %v1585 = vld [vmem:[%s1553 + $0xf8] sm:$0xff]
      %v1586 = vld [vmem:[%s1553 + $0x100] sm:$0xff]
      %v1587 = vld [vmem:[%s1553 + $0x108] sm:$0xff]
      %v1588 = vld [vmem:[%s1553 + $0x110] sm:$0xff]
      %v1589 = vld [vmem:[%s1553 + $0x118] sm:$0xff]
      %v1590 = vld [vmem:[%s1553 + $0x120] sm:$0xff]
      %v1591 = vld [vmem:[%s1553 + $0x128] sm:$0xff]
      %v1592 = vld [vmem:[%s1553 + $0x130] sm:$0xff]
      %v1593 = vld [vmem:[%s1553 + $0x138] sm:$0xff]
      %v1594 = vld [vmem:[%s1553 + $0x140] sm:$0xff]
      %v1595 = vld [vmem:[%s1553 + $0x148] sm:$0xff]
      %v1596 = vld [vmem:[%s1553 + $0x150] sm:$0xff]
      %v1597 = vld [vmem:[%s1553 + $0x158] sm:$0xff]
      %v1598 = vld [vmem:[%s1553 + $0x160] sm:$0xff]
      %v1599 = vld [vmem:[%s1553 + $0x168] sm:$0xff]
      %v1600 = vld [vmem:[%s1553 + $0x170] sm:$0xff]
      %v1601 = vld [vmem:[%s1553 + $0x178] sm:$0xff]
      %v1602 = vld [vmem:[%s1553 + $0x180] sm:$0xff]
      %vm1603 = vcmp.ge.f32.partialorder %v1554, -1.0
      %vm1604 = vcmp.ge.f32.partialorder %v1555, -1.0
      %vm1605 = vcmp.ge.f32.partialorder %v1556, -1.0
      %vm1606 = vcmp.ge.f32.partialorder %v1557, -1.0
      %vm1607 = vcmp.ge.f32.partialorder %v1558, -1.0
      %vm1608 = vcmp.ge.f32.partialorder %v1559, -1.0
      %vm1609 = vcmp.ge.f32.partialorder %v1560, -1.0
      %vm1610 = vcmp.ge.f32.partialorder %v1561, -1.0
      %vm1611 = vcmp.ge.f32.partialorder %v1562, -1.0
      %vm1612 = vcmp.ge.f32.partialorder %v1563, -1.0
      %vm1613 = vcmp.ge.f32.partialorder %v1564, -1.0
      %vm1614 = vcmp.ge.f32.partialorder %v1565, -1.0
      %vm1615 = vcmp.ge.f32.partialorder %v1566, -1.0
      %vm1616 = vcmp.ge.f32.partialorder %v1567, -1.0
      %vm1617 = vcmp.ge.f32.partialorder %v1568, -1.0
      %vm1618 = vcmp.ge.f32.partialorder %v1569, -1.0
      %vm1619 = vcmp.ge.f32.partialorder %v1570, -1.0
      %vm1620 = vcmp.ge.f32.partialorder %v1571, -1.0
      %vm1621 = vcmp.ge.f32.partialorder %v1572, -1.0
      %vm1622 = vcmp.ge.f32.partialorder %v1573, -1.0
      %vm1623 = vcmp.ge.f32.partialorder %v1574, -1.0
      %vm1624 = vcmp.ge.f32.partialorder %v1575, -1.0
      %vm1625 = vcmp.ge.f32.partialorder %v1576, -1.0
      %vm1626 = vcmp.ge.f32.partialorder %v1577, -1.0
      %vm1627 = vcmp.ge.f32.partialorder %v1578, -1.0
      %vm1628 = vcmp.ge.f32.partialorder %v1579, -1.0
      %vm1629 = vcmp.ge.f32.partialorder %v1580, -1.0
      %vm1630 = vcmp.ge.f32.partialorder %v1581, -1.0
      %vm1631 = vcmp.ge.f32.partialorder %v1582, -1.0
      %vm1632 = vcmp.ge.f32.partialorder %v1583, -1.0
      %vm1633 = vcmp.ge.f32.partialorder %v1584, -1.0
      %vm1634 = vcmp.ge.f32.partialorder %v1585, -1.0
      %vm1635 = vcmp.ge.f32.partialorder %v1586, -1.0
      %vm1636 = vcmp.ge.f32.partialorder %v1587, -1.0
      %vm1637 = vcmp.ge.f32.partialorder %v1588, -1.0
      %vm1638 = vcmp.ge.f32.partialorder %v1589, -1.0
      %vm1639 = vcmp.ge.f32.partialorder %v1590, -1.0
      %vm1640 = vcmp.ge.f32.partialorder %v1591, -1.0
      %vm1641 = vcmp.ge.f32.partialorder %v1592, -1.0
      %vm1642 = vcmp.ge.f32.partialorder %v1593, -1.0
      %vm1643 = vcmp.ge.f32.partialorder %v1594, -1.0
      %vm1644 = vcmp.ge.f32.partialorder %v1595, -1.0
      %vm1645 = vcmp.ge.f32.partialorder %v1596, -1.0
      %vm1646 = vcmp.ge.f32.partialorder %v1597, -1.0
      %vm1647 = vcmp.ge.f32.partialorder %v1598, -1.0
      %vm1648 = vcmp.ge.f32.partialorder %v1599, -1.0
      %vm1649 = vcmp.ge.f32.partialorder %v1600, -1.0
      %vm1650 = vcmp.ge.f32.partialorder %v1601, -1.0
      %vm1651 = vcmp.ge.f32.partialorder %v1602, -1.0
      %vm1652 = vcmp.le.f32.partialorder %v1554, 16.0
      %vm1653 = vcmp.le.f32.partialorder %v1555, 16.0
      %vm1654 = vcmp.le.f32.partialorder %v1556, 16.0
      %vm1655 = vcmp.le.f32.partialorder %v1557, 16.0
      %vm1656 = vcmp.le.f32.partialorder %v1558, 16.0
      %vm1657 = vcmp.le.f32.partialorder %v1559, 16.0
      %vm1658 = vcmp.le.f32.partialorder %v1560, 16.0
      %vm1659 = vcmp.le.f32.partialorder %v1561, 16.0
      %vm1660 = vcmp.le.f32.partialorder %v1562, 16.0
      %vm1661 = vcmp.le.f32.partialorder %v1563, 16.0
      %vm1662 = vcmp.le.f32.partialorder %v1564, 16.0
      %vm1663 = vcmp.le.f32.partialorder %v1565, 16.0
      %vm1664 = vcmp.le.f32.partialorder %v1566, 16.0
      %vm1665 = vcmp.le.f32.partialorder %v1567, 16.0
      %vm1666 = vcmp.le.f32.partialorder %v1568, 16.0
      %vm1667 = vcmp.le.f32.partialorder %v1569, 16.0
      %vm1668 = vcmp.le.f32.partialorder %v1570, 16.0
      %vm1669 = vcmp.le.f32.partialorder %v1571, 16.0
      %vm1670 = vcmp.le.f32.partialorder %v1572, 16.0
      %vm1671 = vcmp.le.f32.partialorder %v1573, 16.0
      %vm1672 = vcmp.le.f32.partialorder %v1574, 16.0
      %vm1673 = vcmp.le.f32.partialorder %v1575, 16.0
      %vm1674 = vcmp.le.f32.partialorder %v1576, 16.0
      %vm1675 = vcmp.le.f32.partialorder %v1577, 16.0
      %vm1676 = vcmp.le.f32.partialorder %v1578, 16.0
      %vm1677 = vcmp.le.f32.partialorder %v1579, 16.0
      %vm1678 = vcmp.le.f32.partialorder %v1580, 16.0
      %vm1679 = vcmp.le.f32.partialorder %v1581, 16.0
      %vm1680 = vcmp.le.f32.partialorder %v1582, 16.0
      %vm1681 = vcmp.le.f32.partialorder %v1583, 16.0
      %vm1682 = vcmp.le.f32.partialorder %v1584, 16.0
      %vm1683 = vcmp.le.f32.partialorder %v1585, 16.0
      %vm1684 = vcmp.le.f32.partialorder %v1586, 16.0
      %vm1685 = vcmp.le.f32.partialorder %v1587, 16.0
      %vm1686 = vcmp.le.f32.partialorder %v1588, 16.0
      %vm1687 = vcmp.le.f32.partialorder %v1589, 16.0
      %vm1688 = vcmp.le.f32.partialorder %v1590, 16.0
      %vm1689 = vcmp.le.f32.partialorder %v1591, 16.0
      %vm1690 = vcmp.le.f32.partialorder %v1592, 16.0
      %vm1691 = vcmp.le.f32.partialorder %v1593, 16.0
      %vm1692 = vcmp.le.f32.partialorder %v1594, 16.0
      %vm1693 = vcmp.le.f32.partialorder %v1595, 16.0
      %vm1694 = vcmp.le.f32.partialorder %v1596, 16.0
      %vm1695 = vcmp.le.f32.partialorder %v1597, 16.0
      %vm1696 = vcmp.le.f32.partialorder %v1598, 16.0
      %vm1697 = vcmp.le.f32.partialorder %v1599, 16.0
      %vm1698 = vcmp.le.f32.partialorder %v1600, 16.0
      %vm1699 = vcmp.le.f32.partialorder %v1601, 16.0
      %vm1700 = vcmp.le.f32.partialorder %v1602, 16.0
      %vm1701 = vmand %vm1603, %vm1652
      %vm1702 = vmand %vm1604, %vm1653
      %vm1703 = vmand %vm1605, %vm1654
      %vm1704 = vmand %vm1606, %vm1655
      %vm1705 = vmand %vm1607, %vm1656
      %vm1706 = vmand %vm1608, %vm1657
      %vm1707 = vmand %vm1609, %vm1658
      %vm1708 = vmand %vm1610, %vm1659
      %vm1709 = vmand %vm1611, %vm1660
      %vm1710 = vmand %vm1612, %vm1661
      %vm1711 = vmand %vm1613, %vm1662
      %vm1712 = vmand %vm1614, %vm1663
      %vm1713 = vmand %vm1615, %vm1664
      %vm1714 = vmand %vm1616, %vm1665
      %vm1715 = vmand %vm1617, %vm1666
      %vm1716 = vmand %vm1618, %vm1667
      %vm1717 = vmand %vm1619, %vm1668
      %vm1718 = vmand %vm1620, %vm1669
      %vm1719 = vmand %vm1621, %vm1670
      %vm1720 = vmand %vm1622, %vm1671
      %vm1721 = vmand %vm1623, %vm1672
      %vm1722 = vmand %vm1624, %vm1673
      %vm1723 = vmand %vm1625, %vm1674
      %vm1724 = vmand %vm1626, %vm1675
      %vm1725 = vmand %vm1627, %vm1676
      %vm1726 = vmand %vm1628, %vm1677
      %vm1727 = vmand %vm1629, %vm1678
      %vm1728 = vmand %vm1630, %vm1679
      %vm1729 = vmand %vm1631, %vm1680
      %vm1730 = vmand %vm1632, %vm1681
      %vm1731 = vmand %vm1633, %vm1682
      %vm1732 = vmand %vm1634, %vm1683
      %vm1733 = vmand %vm1635, %vm1684
      %vm1734 = vmand %vm1636, %vm1685
      %vm1735 = vmand %vm1637, %vm1686
      %vm1736 = vmand %vm1638, %vm1687
      %vm1737 = vmand %vm1639, %vm1688
      %vm1738 = vmand %vm1640, %vm1689
      %vm1739 = vmand %vm1641, %vm1690
      %vm1740 = vmand %vm1642, %vm1691
      %vm1741 = vmand %vm1643, %vm1692
      %vm1742 = vmand %vm1644, %vm1693
      %vm1743 = vmand %vm1645, %vm1694
      %vm1744 = vmand %vm1646, %vm1695
      %vm1745 = vmand %vm1647, %vm1696
      %vm1746 = vmand %vm1648, %vm1697
      %vm1747 = vmand %vm1649, %vm1698
      %vm1748 = vmand %vm1650, %vm1699
      %vm1749 = vmand %vm1651, %vm1700
      %v1750 = vmax.f32 %v1554, 0.0
      %v1751 = vmax.f32 %v1555, 0.0
      %v1752 = vmax.f32 %v1556, 0.0
      %v1753 = vmax.f32 %v1557, 0.0
      %v1754 = vmax.f32 %v1558, 0.0
      %v1755 = vmax.f32 %v1559, 0.0
      %v1756 = vmax.f32 %v1560, 0.0
      %v1757 = vmax.f32 %v1561, 0.0
      %v1758 = vmax.f32 %v1562, 0.0
      %v1759 = vmax.f32 %v1563, 0.0
      %v1760 = vmax.f32 %v1564, 0.0
      %v1761 = vmax.f32 %v1565, 0.0
      %v1762 = vmax.f32 %v1566, 0.0
      %v1763 = vmax.f32 %v1567, 0.0
      %v1764 = vmax.f32 %v1568, 0.0
      %v1765 = vmax.f32 %v1569, 0.0
      %v1766 = vmax.f32 %v1570, 0.0
      %v1767 = vmax.f32 %v1571, 0.0
      %v1768 = vmax.f32 %v1572, 0.0
      %v1769 = vmax.f32 %v1573, 0.0
      %v1770 = vmax.f32 %v1574, 0.0
      %v1771 = vmax.f32 %v1575, 0.0
      %v1772 = vmax.f32 %v1576, 0.0
      %v1773 = vmax.f32 %v1577, 0.0
      %v1774 = vmax.f32 %v1578, 0.0
      %v1775 = vmax.f32 %v1579, 0.0
      %v1776 = vmax.f32 %v1580, 0.0
      %v1777 = vmax.f32 %v1581, 0.0
      %v1778 = vmax.f32 %v1582, 0.0
      %v1779 = vmax.f32 %v1583, 0.0
      %v1780 = vmax.f32 %v1584, 0.0
      %v1781 = vmax.f32 %v1585, 0.0
      %v1782 = vmax.f32 %v1586, 0.0
      %v1783 = vmax.f32 %v1587, 0.0
      %v1784 = vmax.f32 %v1588, 0.0
      %v1785 = vmax.f32 %v1589, 0.0
      %v1786 = vmax.f32 %v1590, 0.0
      %v1787 = vmax.f32 %v1591, 0.0
      %v1788 = vmax.f32 %v1592, 0.0
      %v1789 = vmax.f32 %v1593, 0.0
      %v1790 = vmax.f32 %v1594, 0.0
      %v1791 = vmax.f32 %v1595, 0.0
      %v1792 = vmax.f32 %v1596, 0.0
      %v1793 = vmax.f32 %v1597, 0.0
      %v1794 = vmax.f32 %v1598, 0.0
      %v1795 = vmax.f32 %v1599, 0.0
      %v1796 = vmax.f32 %v1600, 0.0
      %v1797 = vmax.f32 %v1601, 0.0
      %v1798 = vmax.f32 %v1602, 0.0
      %v1799 = vmin.f32 %v1750, 15.0
      %v1800 = vmin.f32 %v1751, 15.0
      %v1801 = vmin.f32 %v1752, 15.0
      %v1802 = vmin.f32 %v1753, 15.0
      %v1803 = vmin.f32 %v1754, 15.0
      %v1804 = vmin.f32 %v1755, 15.0
      %v1805 = vmin.f32 %v1756, 15.0
      %v1806 = vmin.f32 %v1757, 15.0
      %v1807 = vmin.f32 %v1758, 15.0
      %v1808 = vmin.f32 %v1759, 15.0
      %v1809 = vmin.f32 %v1760, 15.0
      %v1810 = vmin.f32 %v1761, 15.0
      %v1811 = vmin.f32 %v1762, 15.0
      %v1812 = vmin.f32 %v1763, 15.0
      %v1813 = vmin.f32 %v1764, 15.0
      %v1814 = vmin.f32 %v1765, 15.0
      %v1815 = vmin.f32 %v1766, 15.0
      %v1816 = vmin.f32 %v1767, 15.0
      %v1817 = vmin.f32 %v1768, 15.0
      %v1818 = vmin.f32 %v1769, 15.0
      %v1819 = vmin.f32 %v1770, 15.0
      %v1820 = vmin.f32 %v1771, 15.0
      %v1821 = vmin.f32 %v1772, 15.0
      %v1822 = vmin.f32 %v1773, 15.0
      %v1823 = vmin.f32 %v1774, 15.0
      %v1824 = vmin.f32 %v1775, 15.0
      %v1825 = vmin.f32 %v1776, 15.0
      %v1826 = vmin.f32 %v1777, 15.0
      %v1827 = vmin.f32 %v1778, 15.0
      %v1828 = vmin.f32 %v1779, 15.0
      %v1829 = vmin.f32 %v1780, 15.0
      %v1830 = vmin.f32 %v1781, 15.0
      %v1831 = vmin.f32 %v1782, 15.0
      %v1832 = vmin.f32 %v1783, 15.0
      %v1833 = vmin.f32 %v1784, 15.0
      %v1834 = vmin.f32 %v1785, 15.0
      %v1835 = vmin.f32 %v1786, 15.0
      %v1836 = vmin.f32 %v1787, 15.0
      %v1837 = vmin.f32 %v1788, 15.0
      %v1838 = vmin.f32 %v1789, 15.0
      %v1839 = vmin.f32 %v1790, 15.0
      %v1840 = vmin.f32 %v1791, 15.0
      %v1841 = vmin.f32 %v1792, 15.0
      %v1842 = vmin.f32 %v1793, 15.0
      %v1843 = vmin.f32 %v1794, 15.0
      %v1844 = vmin.f32 %v1795, 15.0
      %v1845 = vmin.f32 %v1796, 15.0
      %v1846 = vmin.f32 %v1797, 15.0
      %v1847 = vmin.f32 %v1798, 15.0
      %1849 = vset.pattern.permute.xlu0 0
      %1850 = vperm.xlu0 %1849, %v1799
      %v1851 = vpop.permute.xlu0 %1850
      %1854 = vset.pattern.permute.xlu0 0
      %1855 = vperm.xlu0 %1854, %v1800
      %v1856 = vpop.permute.xlu0 %1855
      %1859 = vset.pattern.permute.xlu0 0
      %1860 = vperm.xlu0 %1859, %v1801
      %v1861 = vpop.permute.xlu0 %1860
      %1864 = vset.pattern.permute.xlu0 0
      %1865 = vperm.xlu0 %1864, %v1802
      %v1866 = vpop.permute.xlu0 %1865
      %1869 = vset.pattern.permute.xlu0 0
      %1870 = vperm.xlu0 %1869, %v1803
      %v1871 = vpop.permute.xlu0 %1870
      %1874 = vset.pattern.permute.xlu0 0
      %1875 = vperm.xlu0 %1874, %v1804
      %v1876 = vpop.permute.xlu0 %1875
      %1879 = vset.pattern.permute.xlu0 0
      %1880 = vperm.xlu0 %1879, %v1805
      %v1881 = vpop.permute.xlu0 %1880
      %1884 = vset.pattern.permute.xlu0 0
      %1885 = vperm.xlu0 %1884, %v1806
      %v1886 = vpop.permute.xlu0 %1885
      %1889 = vset.pattern.permute.xlu0 0
      %1890 = vperm.xlu0 %1889, %v1807
      %v1891 = vpop.permute.xlu0 %1890
      %1894 = vset.pattern.permute.xlu0 0
      %1895 = vperm.xlu0 %1894, %v1808
      %v1896 = vpop.permute.xlu0 %1895
      %1899 = vset.pattern.permute.xlu0 0
      %1900 = vperm.xlu0 %1899, %v1809
      %v1901 = vpop.permute.xlu0 %1900
      %1904 = vset.pattern.permute.xlu0 0
      %1905 = vperm.xlu0 %1904, %v1810
      %v1906 = vpop.permute.xlu0 %1905
      %1909 = vset.pattern.permute.xlu0 0
      %1910 = vperm.xlu0 %1909, %v1811
      %v1911 = vpop.permute.xlu0 %1910
      %1914 = vset.pattern.permute.xlu0 0
      %1915 = vperm.xlu0 %1914, %v1812
      %v1916 = vpop.permute.xlu0 %1915
      %1919 = vset.pattern.permute.xlu0 0
      %1920 = vperm.xlu0 %1919, %v1813
      %v1921 = vpop.permute.xlu0 %1920
      %1924 = vset.pattern.permute.xlu0 0
      %1925 = vperm.xlu0 %1924, %v1814
      %v1926 = vpop.permute.xlu0 %1925
      %1929 = vset.pattern.permute.xlu0 0
      %1930 = vperm.xlu0 %1929, %v1815
      %v1931 = vpop.permute.xlu0 %1930
      %1934 = vset.pattern.permute.xlu0 0
      %1935 = vperm.xlu0 %1934, %v1816
      %v1936 = vpop.permute.xlu0 %1935
      %1939 = vset.pattern.permute.xlu0 0
      %1940 = vperm.xlu0 %1939, %v1817
      %v1941 = vpop.permute.xlu0 %1940
      %1944 = vset.pattern.permute.xlu0 0
      %1945 = vperm.xlu0 %1944, %v1818
      %v1946 = vpop.permute.xlu0 %1945
      %1949 = vset.pattern.permute.xlu0 0
      %1950 = vperm.xlu0 %1949, %v1819
      %v1951 = vpop.permute.xlu0 %1950
      %1954 = vset.pattern.permute.xlu0 0
      %1955 = vperm.xlu0 %1954, %v1820
      %v1956 = vpop.permute.xlu0 %1955
      %1959 = vset.pattern.permute.xlu0 0
      %1960 = vperm.xlu0 %1959, %v1821
      %v1961 = vpop.permute.xlu0 %1960
      %1964 = vset.pattern.permute.xlu0 0
      %1965 = vperm.xlu0 %1964, %v1822
      %v1966 = vpop.permute.xlu0 %1965
      %1969 = vset.pattern.permute.xlu0 0
      %1970 = vperm.xlu0 %1969, %v1823
      %v1971 = vpop.permute.xlu0 %1970
      %1974 = vset.pattern.permute.xlu0 0
      %1975 = vperm.xlu0 %1974, %v1824
      %v1976 = vpop.permute.xlu0 %1975
      %1979 = vset.pattern.permute.xlu0 0
      %1980 = vperm.xlu0 %1979, %v1825
      %v1981 = vpop.permute.xlu0 %1980
      %1984 = vset.pattern.permute.xlu0 0
      %1985 = vperm.xlu0 %1984, %v1826
      %v1986 = vpop.permute.xlu0 %1985
      %1989 = vset.pattern.permute.xlu0 0
      %1990 = vperm.xlu0 %1989, %v1827
      %v1991 = vpop.permute.xlu0 %1990
      %1994 = vset.pattern.permute.xlu0 0
      %1995 = vperm.xlu0 %1994, %v1828
      %v1996 = vpop.permute.xlu0 %1995
      %1999 = vset.pattern.permute.xlu0 0
      %2000 = vperm.xlu0 %1999, %v1829
      %v2001 = vpop.permute.xlu0 %2000
      %2004 = vset.pattern.permute.xlu0 0
      %2005 = vperm.xlu0 %2004, %v1830
      %v2006 = vpop.permute.xlu0 %2005
      %2009 = vset.pattern.permute.xlu0 0
      %2010 = vperm.xlu0 %2009, %v1831
      %v2011 = vpop.permute.xlu0 %2010
      %2014 = vset.pattern.permute.xlu0 0
      %2015 = vperm.xlu0 %2014, %v1832
      %v2016 = vpop.permute.xlu0 %2015
      %2019 = vset.pattern.permute.xlu0 0
      %2020 = vperm.xlu0 %2019, %v1833
      %v2021 = vpop.permute.xlu0 %2020
      %2024 = vset.pattern.permute.xlu0 0
      %2025 = vperm.xlu0 %2024, %v1834
      %v2026 = vpop.permute.xlu0 %2025
      %2029 = vset.pattern.permute.xlu0 0
      %2030 = vperm.xlu0 %2029, %v1835
      %v2031 = vpop.permute.xlu0 %2030
      %2034 = vset.pattern.permute.xlu0 0
      %2035 = vperm.xlu0 %2034, %v1836
      %v2036 = vpop.permute.xlu0 %2035
      %2039 = vset.pattern.permute.xlu0 0
      %2040 = vperm.xlu0 %2039, %v1837
      %v2041 = vpop.permute.xlu0 %2040
      %2044 = vset.pattern.permute.xlu0 0
      %2045 = vperm.xlu0 %2044, %v1838
      %v2046 = vpop.permute.xlu0 %2045
      %2049 = vset.pattern.permute.xlu0 0
      %2050 = vperm.xlu0 %2049, %v1839
      %v2051 = vpop.permute.xlu0 %2050
      %2054 = vset.pattern.permute.xlu0 0
      %2055 = vperm.xlu0 %2054, %v1840
      %v2056 = vpop.permute.xlu0 %2055
      %2059 = vset.pattern.permute.xlu0 0
      %2060 = vperm.xlu0 %2059, %v1841
      %v2061 = vpop.permute.xlu0 %2060
      %2064 = vset.pattern.permute.xlu0 0
      %2065 = vperm.xlu0 %2064, %v1842
      %v2066 = vpop.permute.xlu0 %2065
      %2069 = vset.pattern.permute.xlu0 0
      %2070 = vperm.xlu0 %2069, %v1843
      %v2071 = vpop.permute.xlu0 %2070
      %2074 = vset.pattern.permute.xlu0 0
      %2075 = vperm.xlu0 %2074, %v1844
      %v2076 = vpop.permute.xlu0 %2075
      %2079 = vset.pattern.permute.xlu0 0
      %2080 = vperm.xlu0 %2079, %v1845
      %v2081 = vpop.permute.xlu0 %2080
      %2084 = vset.pattern.permute.xlu0 0
      %2085 = vperm.xlu0 %2084, %v1846
      %v2086 = vpop.permute.xlu0 %2085
      %2089 = vset.pattern.permute.xlu0 0
      %2090 = vperm.xlu0 %2089, %v1847
      %v2091 = vpop.permute.xlu0 %2090
      %v2093 = vsub.f32 %v1851, %v811
      %v2094 = vsub.f32 %v1851, %v815
      %v2095 = vsub.f32 %v1856, %v811
      %v2096 = vsub.f32 %v1856, %v815
      %v2097 = vsub.f32 %v1861, %v811
      %v2098 = vsub.f32 %v1861, %v815
      %v2099 = vsub.f32 %v1866, %v811
      %v2100 = vsub.f32 %v1866, %v815
      %v2101 = vsub.f32 %v1871, %v811
      %v2102 = vsub.f32 %v1871, %v815
      %v2103 = vsub.f32 %v1876, %v811
      %v2104 = vsub.f32 %v1876, %v815
      %v2105 = vsub.f32 %v1881, %v811
      %v2106 = vsub.f32 %v1881, %v815
      %v2107 = vsub.f32 %v1886, %v811
      %v2108 = vsub.f32 %v1886, %v815
      %v2109 = vsub.f32 %v1891, %v811
      %v2110 = vsub.f32 %v1891, %v815
      %v2111 = vsub.f32 %v1896, %v811
      %v2112 = vsub.f32 %v1896, %v815
      %v2113 = vsub.f32 %v1901, %v811
      %v2114 = vsub.f32 %v1901, %v815
      %v2115 = vsub.f32 %v1906, %v811
      %v2116 = vsub.f32 %v1906, %v815
      %v2117 = vsub.f32 %v1911, %v811
      %v2118 = vsub.f32 %v1911, %v815
      %v2119 = vsub.f32 %v1916, %v811
      %v2120 = vsub.f32 %v1916, %v815
      %v2121 = vsub.f32 %v1921, %v811
      %v2122 = vsub.f32 %v1921, %v815
      %v2123 = vsub.f32 %v1926, %v811
      %v2124 = vsub.f32 %v1926, %v815
      %v2125 = vsub.f32 %v1931, %v811
      %v2126 = vsub.f32 %v1931, %v815
      %v2127 = vsub.f32 %v1936, %v811
      %v2128 = vsub.f32 %v1936, %v815
      %v2129 = vsub.f32 %v1941, %v811
      %v2130 = vsub.f32 %v1941, %v815
      %v2131 = vsub.f32 %v1946, %v811
      %v2132 = vsub.f32 %v1946, %v815
      %v2133 = vsub.f32 %v1951, %v811
      %v2134 = vsub.f32 %v1951, %v815
      %v2135 = vsub.f32 %v1956, %v811
      %v2136 = vsub.f32 %v1956, %v815
      %v2137 = vsub.f32 %v1961, %v811
      %v2138 = vsub.f32 %v1961, %v815
      %v2139 = vsub.f32 %v1966, %v811
      %v2140 = vsub.f32 %v1966, %v815
      %v2141 = vsub.f32 %v1971, %v811
      %v2142 = vsub.f32 %v1971, %v815
      %v2143 = vsub.f32 %v1976, %v811
      %v2144 = vsub.f32 %v1976, %v815
      %v2145 = vsub.f32 %v1981, %v811
      %v2146 = vsub.f32 %v1981, %v815
      %v2147 = vsub.f32 %v1986, %v811
      %v2148 = vsub.f32 %v1986, %v815
      %v2149 = vsub.f32 %v1991, %v811
      %v2150 = vsub.f32 %v1991, %v815
      %v2151 = vsub.f32 %v1996, %v811
      %v2152 = vsub.f32 %v1996, %v815
      %v2153 = vsub.f32 %v2001, %v811
      %v2154 = vsub.f32 %v2001, %v815
      %v2155 = vsub.f32 %v2006, %v811
      %v2156 = vsub.f32 %v2006, %v815
      %v2157 = vsub.f32 %v2011, %v811
      %v2158 = vsub.f32 %v2011, %v815
      %v2159 = vsub.f32 %v2016, %v811
      %v2160 = vsub.f32 %v2016, %v815
      %v2161 = vsub.f32 %v2021, %v811
      %v2162 = vsub.f32 %v2021, %v815
      %v2163 = vsub.f32 %v2026, %v811
      %v2164 = vsub.f32 %v2026, %v815
      %v2165 = vsub.f32 %v2031, %v811
      %v2166 = vsub.f32 %v2031, %v815
      %v2167 = vsub.f32 %v2036, %v811
      %v2168 = vsub.f32 %v2036, %v815
      %v2169 = vsub.f32 %v2041, %v811
      %v2170 = vsub.f32 %v2041, %v815
      %v2171 = vsub.f32 %v2046, %v811
      %v2172 = vsub.f32 %v2046, %v815
      %v2173 = vsub.f32 %v2051, %v811
      %v2174 = vsub.f32 %v2051, %v815
      %v2175 = vsub.f32 %v2056, %v811
      %v2176 = vsub.f32 %v2056, %v815
      %v2177 = vsub.f32 %v2061, %v811
      %v2178 = vsub.f32 %v2061, %v815
      %v2179 = vsub.f32 %v2066, %v811
      %v2180 = vsub.f32 %v2066, %v815
      %v2181 = vsub.f32 %v2071, %v811
      %v2182 = vsub.f32 %v2071, %v815
      %v2183 = vsub.f32 %v2076, %v811
      %v2184 = vsub.f32 %v2076, %v815
      %v2185 = vsub.f32 %v2081, %v811
      %v2186 = vsub.f32 %v2081, %v815
      %v2187 = vsub.f32 %v2086, %v811
      %v2188 = vsub.f32 %v2086, %v815
      %v2189 = vsub.f32 %v2091, %v811
      %v2190 = vsub.f32 %v2091, %v815
      %v2191 = vand.u32 2147483647, %v2093
      %v2192 = vand.u32 2147483647, %v2094
      %v2193 = vand.u32 2147483647, %v2095
      %v2194 = vand.u32 2147483647, %v2096
      %v2195 = vand.u32 2147483647, %v2097
      %v2196 = vand.u32 2147483647, %v2098
      %v2197 = vand.u32 2147483647, %v2099
      %v2198 = vand.u32 2147483647, %v2100
      %v2199 = vand.u32 2147483647, %v2101
      %v2200 = vand.u32 2147483647, %v2102
      %v2201 = vand.u32 2147483647, %v2103
      %v2202 = vand.u32 2147483647, %v2104
      %v2203 = vand.u32 2147483647, %v2105
      %v2204 = vand.u32 2147483647, %v2106
      %v2205 = vand.u32 2147483647, %v2107
      %v2206 = vand.u32 2147483647, %v2108
      %v2207 = vand.u32 2147483647, %v2109
      %v2208 = vand.u32 2147483647, %v2110
      %v2209 = vand.u32 2147483647, %v2111
      %v2210 = vand.u32 2147483647, %v2112
      %v2211 = vand.u32 2147483647, %v2113
      %v2212 = vand.u32 2147483647, %v2114
      %v2213 = vand.u32 2147483647, %v2115
      %v2214 = vand.u32 2147483647, %v2116
      %v2215 = vand.u32 2147483647, %v2117
      %v2216 = vand.u32 2147483647, %v2118
      %v2217 = vand.u32 2147483647, %v2119
      %v2218 = vand.u32 2147483647, %v2120
      %v2219 = vand.u32 2147483647, %v2121
      %v2220 = vand.u32 2147483647, %v2122
      %v2221 = vand.u32 2147483647, %v2123
      %v2222 = vand.u32 2147483647, %v2124
      %v2223 = vand.u32 2147483647, %v2125
      %v2224 = vand.u32 2147483647, %v2126
      %v2225 = vand.u32 2147483647, %v2127
      %v2226 = vand.u32 2147483647, %v2128
      %v2227 = vand.u32 2147483647, %v2129
      %v2228 = vand.u32 2147483647, %v2130
      %v2229 = vand.u32 2147483647, %v2131
      %v2230 = vand.u32 2147483647, %v2132
      %v2231 = vand.u32 2147483647, %v2133
      %v2232 = vand.u32 2147483647, %v2134
      %v2233 = vand.u32 2147483647, %v2135
      %v2234 = vand.u32 2147483647, %v2136
      %v2235 = vand.u32 2147483647, %v2137
      %v2236 = vand.u32 2147483647, %v2138
      %v2237 = vand.u32 2147483647, %v2139
      %v2238 = vand.u32 2147483647, %v2140
      %v2239 = vand.u32 2147483647, %v2141
      %v2240 = vand.u32 2147483647, %v2142
      %v2241 = vand.u32 2147483647, %v2143
      %v2242 = vand.u32 2147483647, %v2144
      %v2243 = vand.u32 2147483647, %v2145
      %v2244 = vand.u32 2147483647, %v2146
      %v2245 = vand.u32 2147483647, %v2147
      %v2246 = vand.u32 2147483647, %v2148
      %v2247 = vand.u32 2147483647, %v2149
      %v2248 = vand.u32 2147483647, %v2150
      %v2249 = vand.u32 2147483647, %v2151
      %v2250 = vand.u32 2147483647, %v2152
      %v2251 = vand.u32 2147483647, %v2153
      %v2252 = vand.u32 2147483647, %v2154
      %v2253 = vand.u32 2147483647, %v2155
      %v2254 = vand.u32 2147483647, %v2156
      %v2255 = vand.u32 2147483647, %v2157
      %v2256 = vand.u32 2147483647, %v2158
      %v2257 = vand.u32 2147483647, %v2159
      %v2258 = vand.u32 2147483647, %v2160
      %v2259 = vand.u32 2147483647, %v2161
      %v2260 = vand.u32 2147483647, %v2162
      %v2261 = vand.u32 2147483647, %v2163
      %v2262 = vand.u32 2147483647, %v2164
      %v2263 = vand.u32 2147483647, %v2165
      %v2264 = vand.u32 2147483647, %v2166
      %v2265 = vand.u32 2147483647, %v2167
      %v2266 = vand.u32 2147483647, %v2168
      %v2267 = vand.u32 2147483647, %v2169
      %v2268 = vand.u32 2147483647, %v2170
      %v2269 = vand.u32 2147483647, %v2171
      %v2270 = vand.u32 2147483647, %v2172
      %v2271 = vand.u32 2147483647, %v2173
      %v2272 = vand.u32 2147483647, %v2174
      %v2273 = vand.u32 2147483647, %v2175
      %v2274 = vand.u32 2147483647, %v2176
      %v2275 = vand.u32 2147483647, %v2177
      %v2276 = vand.u32 2147483647, %v2178
      %v2277 = vand.u32 2147483647, %v2179
      %v2278 = vand.u32 2147483647, %v2180
      %v2279 = vand.u32 2147483647, %v2181
      %v2280 = vand.u32 2147483647, %v2182
      %v2281 = vand.u32 2147483647, %v2183
      %v2282 = vand.u32 2147483647, %v2184
      %v2283 = vand.u32 2147483647, %v2185
      %v2284 = vand.u32 2147483647, %v2186
      %v2285 = vand.u32 2147483647, %v2187
      %v2286 = vand.u32 2147483647, %v2188
      %v2287 = vand.u32 2147483647, %v2189
      %v2288 = vand.u32 2147483647, %v2190
      %v2289 = vsub.f32 1.0, %v2191
      %v2290 = vsub.f32 1.0, %v2192
      %v2291 = vsub.f32 1.0, %v2193
      %v2292 = vsub.f32 1.0, %v2194
      %v2293 = vsub.f32 1.0, %v2195
      %v2294 = vsub.f32 1.0, %v2196
      %v2295 = vsub.f32 1.0, %v2197
      %v2296 = vsub.f32 1.0, %v2198
      %v2297 = vsub.f32 1.0, %v2199
      %v2298 = vsub.f32 1.0, %v2200
      %v2299 = vsub.f32 1.0, %v2201
      %v2300 = vsub.f32 1.0, %v2202
      %v2301 = vsub.f32 1.0, %v2203
      %v2302 = vsub.f32 1.0, %v2204
      %v2303 = vsub.f32 1.0, %v2205
      %v2304 = vsub.f32 1.0, %v2206
      %v2305 = vsub.f32 1.0, %v2207
      %v2306 = vsub.f32 1.0, %v2208
      %v2307 = vsub.f32 1.0, %v2209
      %v2308 = vsub.f32 1.0, %v2210
      %v2309 = vsub.f32 1.0, %v2211
      %v2310 = vsub.f32 1.0, %v2212
      %v2311 = vsub.f32 1.0, %v2213
      %v2312 = vsub.f32 1.0, %v2214
      %v2313 = vsub.f32 1.0, %v2215
      %v2314 = vsub.f32 1.0, %v2216
      %v2315 = vsub.f32 1.0, %v2217
      %v2316 = vsub.f32 1.0, %v2218
      %v2317 = vsub.f32 1.0, %v2219
      %v2318 = vsub.f32 1.0, %v2220
      %v2319 = vsub.f32 1.0, %v2221
      %v2320 = vsub.f32 1.0, %v2222
      %v2321 = vsub.f32 1.0, %v2223
      %v2322 = vsub.f32 1.0, %v2224
      %v2323 = vsub.f32 1.0, %v2225
      %v2324 = vsub.f32 1.0, %v2226
      %v2325 = vsub.f32 1.0, %v2227
      %v2326 = vsub.f32 1.0, %v2228
      %v2327 = vsub.f32 1.0, %v2229
      %v2328 = vsub.f32 1.0, %v2230
      %v2329 = vsub.f32 1.0, %v2231
      %v2330 = vsub.f32 1.0, %v2232
      %v2331 = vsub.f32 1.0, %v2233
      %v2332 = vsub.f32 1.0, %v2234
      %v2333 = vsub.f32 1.0, %v2235
      %v2334 = vsub.f32 1.0, %v2236
      %v2335 = vsub.f32 1.0, %v2237
      %v2336 = vsub.f32 1.0, %v2238
      %v2337 = vsub.f32 1.0, %v2239
      %v2338 = vsub.f32 1.0, %v2240
      %v2339 = vsub.f32 1.0, %v2241
      %v2340 = vsub.f32 1.0, %v2242
      %v2341 = vsub.f32 1.0, %v2243
      %v2342 = vsub.f32 1.0, %v2244
      %v2343 = vsub.f32 1.0, %v2245
      %v2344 = vsub.f32 1.0, %v2246
      %v2345 = vsub.f32 1.0, %v2247
      %v2346 = vsub.f32 1.0, %v2248
      %v2347 = vsub.f32 1.0, %v2249
      %v2348 = vsub.f32 1.0, %v2250
      %v2349 = vsub.f32 1.0, %v2251
      %v2350 = vsub.f32 1.0, %v2252
      %v2351 = vsub.f32 1.0, %v2253
      %v2352 = vsub.f32 1.0, %v2254
      %v2353 = vsub.f32 1.0, %v2255
      %v2354 = vsub.f32 1.0, %v2256
      %v2355 = vsub.f32 1.0, %v2257
      %v2356 = vsub.f32 1.0, %v2258
      %v2357 = vsub.f32 1.0, %v2259
      %v2358 = vsub.f32 1.0, %v2260
      %v2359 = vsub.f32 1.0, %v2261
      %v2360 = vsub.f32 1.0, %v2262
      %v2361 = vsub.f32 1.0, %v2263
      %v2362 = vsub.f32 1.0, %v2264
      %v2363 = vsub.f32 1.0, %v2265
      %v2364 = vsub.f32 1.0, %v2266
      %v2365 = vsub.f32 1.0, %v2267
      %v2366 = vsub.f32 1.0, %v2268
      %v2367 = vsub.f32 1.0, %v2269
      %v2368 = vsub.f32 1.0, %v2270
      %v2369 = vsub.f32 1.0, %v2271
      %v2370 = vsub.f32 1.0, %v2272
      %v2371 = vsub.f32 1.0, %v2273
      %v2372 = vsub.f32 1.0, %v2274
      %v2373 = vsub.f32 1.0, %v2275
      %v2374 = vsub.f32 1.0, %v2276
      %v2375 = vsub.f32 1.0, %v2277
      %v2376 = vsub.f32 1.0, %v2278
      %v2377 = vsub.f32 1.0, %v2279
      %v2378 = vsub.f32 1.0, %v2280
      %v2379 = vsub.f32 1.0, %v2281
      %v2380 = vsub.f32 1.0, %v2282
      %v2381 = vsub.f32 1.0, %v2283
      %v2382 = vsub.f32 1.0, %v2284
      %v2383 = vsub.f32 1.0, %v2285
      %v2384 = vsub.f32 1.0, %v2286
      %v2385 = vsub.f32 1.0, %v2287
      %v2386 = vsub.f32 1.0, %v2288
      %v2387 = vmax.f32 %v2289, 0.0
      %v2388 = vmax.f32 %v2290, 0.0
      %v2389 = vmax.f32 %v2291, 0.0
      %v2390 = vmax.f32 %v2292, 0.0
      %v2391 = vmax.f32 %v2293, 0.0
      %v2392 = vmax.f32 %v2294, 0.0
      %v2393 = vmax.f32 %v2295, 0.0
      %v2394 = vmax.f32 %v2296, 0.0
      %v2395 = vmax.f32 %v2297, 0.0
      %v2396 = vmax.f32 %v2298, 0.0
      %v2397 = vmax.f32 %v2299, 0.0
      %v2398 = vmax.f32 %v2300, 0.0
      %v2399 = vmax.f32 %v2301, 0.0
      %v2400 = vmax.f32 %v2302, 0.0
      %v2401 = vmax.f32 %v2303, 0.0
      %v2402 = vmax.f32 %v2304, 0.0
      %v2403 = vmax.f32 %v2305, 0.0
      %v2404 = vmax.f32 %v2306, 0.0
      %v2405 = vmax.f32 %v2307, 0.0
      %v2406 = vmax.f32 %v2308, 0.0
      %v2407 = vmax.f32 %v2309, 0.0
      %v2408 = vmax.f32 %v2310, 0.0
      %v2409 = vmax.f32 %v2311, 0.0
      %v2410 = vmax.f32 %v2312, 0.0
      %v2411 = vmax.f32 %v2313, 0.0
      %v2412 = vmax.f32 %v2314, 0.0
      %v2413 = vmax.f32 %v2315, 0.0
      %v2414 = vmax.f32 %v2316, 0.0
      %v2415 = vmax.f32 %v2317, 0.0
      %v2416 = vmax.f32 %v2318, 0.0
      %v2417 = vmax.f32 %v2319, 0.0
      %v2418 = vmax.f32 %v2320, 0.0
      %v2419 = vmax.f32 %v2321, 0.0
      %v2420 = vmax.f32 %v2322, 0.0
      %v2421 = vmax.f32 %v2323, 0.0
      %v2422 = vmax.f32 %v2324, 0.0
      %v2423 = vmax.f32 %v2325, 0.0
      %v2424 = vmax.f32 %v2326, 0.0
      %v2425 = vmax.f32 %v2327, 0.0
      %v2426 = vmax.f32 %v2328, 0.0
      %v2427 = vmax.f32 %v2329, 0.0
      %v2428 = vmax.f32 %v2330, 0.0
      %v2429 = vmax.f32 %v2331, 0.0
      %v2430 = vmax.f32 %v2332, 0.0
      %v2431 = vmax.f32 %v2333, 0.0
      %v2432 = vmax.f32 %v2334, 0.0
      %v2433 = vmax.f32 %v2335, 0.0
      %v2434 = vmax.f32 %v2336, 0.0
      %v2435 = vmax.f32 %v2337, 0.0
      %v2436 = vmax.f32 %v2338, 0.0
      %v2437 = vmax.f32 %v2339, 0.0
      %v2438 = vmax.f32 %v2340, 0.0
      %v2439 = vmax.f32 %v2341, 0.0
      %v2440 = vmax.f32 %v2342, 0.0
      %v2441 = vmax.f32 %v2343, 0.0
      %v2442 = vmax.f32 %v2344, 0.0
      %v2443 = vmax.f32 %v2345, 0.0
      %v2444 = vmax.f32 %v2346, 0.0
      %v2445 = vmax.f32 %v2347, 0.0
      %v2446 = vmax.f32 %v2348, 0.0
      %v2447 = vmax.f32 %v2349, 0.0
      %v2448 = vmax.f32 %v2350, 0.0
      %v2449 = vmax.f32 %v2351, 0.0
      %v2450 = vmax.f32 %v2352, 0.0
      %v2451 = vmax.f32 %v2353, 0.0
      %v2452 = vmax.f32 %v2354, 0.0
      %v2453 = vmax.f32 %v2355, 0.0
      %v2454 = vmax.f32 %v2356, 0.0
      %v2455 = vmax.f32 %v2357, 0.0
      %v2456 = vmax.f32 %v2358, 0.0
      %v2457 = vmax.f32 %v2359, 0.0
      %v2458 = vmax.f32 %v2360, 0.0
      %v2459 = vmax.f32 %v2361, 0.0
      %v2460 = vmax.f32 %v2362, 0.0
      %v2461 = vmax.f32 %v2363, 0.0
      %v2462 = vmax.f32 %v2364, 0.0
      %v2463 = vmax.f32 %v2365, 0.0
      %v2464 = vmax.f32 %v2366, 0.0
      %v2465 = vmax.f32 %v2367, 0.0
      %v2466 = vmax.f32 %v2368, 0.0
      %v2467 = vmax.f32 %v2369, 0.0
      %v2468 = vmax.f32 %v2370, 0.0
      %v2469 = vmax.f32 %v2371, 0.0
      %v2470 = vmax.f32 %v2372, 0.0
      %v2471 = vmax.f32 %v2373, 0.0
      %v2472 = vmax.f32 %v2374, 0.0
      %v2473 = vmax.f32 %v2375, 0.0
      %v2474 = vmax.f32 %v2376, 0.0
      %v2475 = vmax.f32 %v2377, 0.0
      %v2476 = vmax.f32 %v2378, 0.0
      %v2477 = vmax.f32 %v2379, 0.0
      %v2478 = vmax.f32 %v2380, 0.0
      %v2479 = vmax.f32 %v2381, 0.0
      %v2480 = vmax.f32 %v2382, 0.0
      %v2481 = vmax.f32 %v2383, 0.0
      %v2482 = vmax.f32 %v2384, 0.0
      %v2483 = vmax.f32 %v2385, 0.0
      %v2484 = vmax.f32 %v2386, 0.0
      %v2485 = vsel %vm1701, 1, 0
      %v2486 = vsel %vm1702, 1, 0
      %v2487 = vsel %vm1703, 1, 0
      %v2488 = vsel %vm1704, 1, 0
      %v2489 = vsel %vm1705, 1, 0
      %v2490 = vsel %vm1706, 1, 0
      %v2491 = vsel %vm1707, 1, 0
      %v2492 = vsel %vm1708, 1, 0
      %v2493 = vsel %vm1709, 1, 0
      %v2494 = vsel %vm1710, 1, 0
      %v2495 = vsel %vm1711, 1, 0
      %v2496 = vsel %vm1712, 1, 0
      %v2497 = vsel %vm1713, 1, 0
      %v2498 = vsel %vm1714, 1, 0
      %v2499 = vsel %vm1715, 1, 0
      %v2500 = vsel %vm1716, 1, 0
      %v2501 = vsel %vm1717, 1, 0
      %v2502 = vsel %vm1718, 1, 0
      %v2503 = vsel %vm1719, 1, 0
      %v2504 = vsel %vm1720, 1, 0
      %v2505 = vsel %vm1721, 1, 0
      %v2506 = vsel %vm1722, 1, 0
      %v2507 = vsel %vm1723, 1, 0
      %v2508 = vsel %vm1724, 1, 0
      %v2509 = vsel %vm1725, 1, 0
      %v2510 = vsel %vm1726, 1, 0
      %v2511 = vsel %vm1727, 1, 0
      %v2512 = vsel %vm1728, 1, 0
      %v2513 = vsel %vm1729, 1, 0
      %v2514 = vsel %vm1730, 1, 0
      %v2515 = vsel %vm1731, 1, 0
      %v2516 = vsel %vm1732, 1, 0
      %v2517 = vsel %vm1733, 1, 0
      %v2518 = vsel %vm1734, 1, 0
      %v2519 = vsel %vm1735, 1, 0
      %v2520 = vsel %vm1736, 1, 0
      %v2521 = vsel %vm1737, 1, 0
      %v2522 = vsel %vm1738, 1, 0
      %v2523 = vsel %vm1739, 1, 0
      %v2524 = vsel %vm1740, 1, 0
      %v2525 = vsel %vm1741, 1, 0
      %v2526 = vsel %vm1742, 1, 0
      %v2527 = vsel %vm1743, 1, 0
      %v2528 = vsel %vm1744, 1, 0
      %v2529 = vsel %vm1745, 1, 0
      %v2530 = vsel %vm1746, 1, 0
      %v2531 = vsel %vm1747, 1, 0
      %v2532 = vsel %vm1748, 1, 0
      %v2533 = vsel %vm1749, 1, 0
      %2534 = vset.pattern.permute.xlu0 0
      %2535 = vperm.xlu0 %2534, %v2485
      %v2536 = vpop.permute.xlu0 %2535
      %2537 = vset.pattern.permute.xlu0 0
      %2538 = vperm.xlu0 %2537, %v2486
      %v2539 = vpop.permute.xlu0 %2538
      %2540 = vset.pattern.permute.xlu0 0
      %2541 = vperm.xlu0 %2540, %v2487
      %v2542 = vpop.permute.xlu0 %2541
      %2543 = vset.pattern.permute.xlu0 0
      %2544 = vperm.xlu0 %2543, %v2488
      %v2545 = vpop.permute.xlu0 %2544
      %2546 = vset.pattern.permute.xlu0 0
      %2547 = vperm.xlu0 %2546, %v2489
      %v2548 = vpop.permute.xlu0 %2547
      %2549 = vset.pattern.permute.xlu0 0
      %2550 = vperm.xlu0 %2549, %v2490
      %v2551 = vpop.permute.xlu0 %2550
      %2552 = vset.pattern.permute.xlu0 0
      %2553 = vperm.xlu0 %2552, %v2491
      %v2554 = vpop.permute.xlu0 %2553
      %2555 = vset.pattern.permute.xlu0 0
      %2556 = vperm.xlu0 %2555, %v2492
      %v2557 = vpop.permute.xlu0 %2556
      %2558 = vset.pattern.permute.xlu0 0
      %2559 = vperm.xlu0 %2558, %v2493
      %v2560 = vpop.permute.xlu0 %2559
      %2561 = vset.pattern.permute.xlu0 0
      %2562 = vperm.xlu0 %2561, %v2494
      %v2563 = vpop.permute.xlu0 %2562
      %2564 = vset.pattern.permute.xlu0 0
      %2565 = vperm.xlu0 %2564, %v2495
      %v2566 = vpop.permute.xlu0 %2565
      %2567 = vset.pattern.permute.xlu0 0
      %2568 = vperm.xlu0 %2567, %v2496
      %v2569 = vpop.permute.xlu0 %2568
      %2570 = vset.pattern.permute.xlu0 0
      %2571 = vperm.xlu0 %2570, %v2497
      %v2572 = vpop.permute.xlu0 %2571
      %2573 = vset.pattern.permute.xlu0 0
      %2574 = vperm.xlu0 %2573, %v2498
      %v2575 = vpop.permute.xlu0 %2574
      %2576 = vset.pattern.permute.xlu0 0
      %2577 = vperm.xlu0 %2576, %v2499
      %v2578 = vpop.permute.xlu0 %2577
      %2579 = vset.pattern.permute.xlu0 0
      %2580 = vperm.xlu0 %2579, %v2500
      %v2581 = vpop.permute.xlu0 %2580
      %2582 = vset.pattern.permute.xlu0 0
      %2583 = vperm.xlu0 %2582, %v2501
      %v2584 = vpop.permute.xlu0 %2583
      %2585 = vset.pattern.permute.xlu0 0
      %2586 = vperm.xlu0 %2585, %v2502
      %v2587 = vpop.permute.xlu0 %2586
      %2588 = vset.pattern.permute.xlu0 0
      %2589 = vperm.xlu0 %2588, %v2503
      %v2590 = vpop.permute.xlu0 %2589
      %2591 = vset.pattern.permute.xlu0 0
      %2592 = vperm.xlu0 %2591, %v2504
      %v2593 = vpop.permute.xlu0 %2592
      %2594 = vset.pattern.permute.xlu0 0
      %2595 = vperm.xlu0 %2594, %v2505
      %v2596 = vpop.permute.xlu0 %2595
      %2597 = vset.pattern.permute.xlu0 0
      %2598 = vperm.xlu0 %2597, %v2506
      %v2599 = vpop.permute.xlu0 %2598
      %2600 = vset.pattern.permute.xlu0 0
      %2601 = vperm.xlu0 %2600, %v2507
      %v2602 = vpop.permute.xlu0 %2601
      %2603 = vset.pattern.permute.xlu0 0
      %2604 = vperm.xlu0 %2603, %v2508
      %v2605 = vpop.permute.xlu0 %2604
      %2606 = vset.pattern.permute.xlu0 0
      %2607 = vperm.xlu0 %2606, %v2509
      %v2608 = vpop.permute.xlu0 %2607
      %2609 = vset.pattern.permute.xlu0 0
      %2610 = vperm.xlu0 %2609, %v2510
      %v2611 = vpop.permute.xlu0 %2610
      %2612 = vset.pattern.permute.xlu0 0
      %2613 = vperm.xlu0 %2612, %v2511
      %v2614 = vpop.permute.xlu0 %2613
      %2615 = vset.pattern.permute.xlu0 0
      %2616 = vperm.xlu0 %2615, %v2512
      %v2617 = vpop.permute.xlu0 %2616
      %2618 = vset.pattern.permute.xlu0 0
      %2619 = vperm.xlu0 %2618, %v2513
      %v2620 = vpop.permute.xlu0 %2619
      %2621 = vset.pattern.permute.xlu0 0
      %2622 = vperm.xlu0 %2621, %v2514
      %v2623 = vpop.permute.xlu0 %2622
      %2624 = vset.pattern.permute.xlu0 0
      %2625 = vperm.xlu0 %2624, %v2515
      %v2626 = vpop.permute.xlu0 %2625
      %2627 = vset.pattern.permute.xlu0 0
      %2628 = vperm.xlu0 %2627, %v2516
      %v2629 = vpop.permute.xlu0 %2628
      %2630 = vset.pattern.permute.xlu0 0
      %2631 = vperm.xlu0 %2630, %v2517
      %v2632 = vpop.permute.xlu0 %2631
      %2633 = vset.pattern.permute.xlu0 0
      %2634 = vperm.xlu0 %2633, %v2518
      %v2635 = vpop.permute.xlu0 %2634
      %2636 = vset.pattern.permute.xlu0 0
      %2637 = vperm.xlu0 %2636, %v2519
      %v2638 = vpop.permute.xlu0 %2637
      %2639 = vset.pattern.permute.xlu0 0
      %2640 = vperm.xlu0 %2639, %v2520
      %v2641 = vpop.permute.xlu0 %2640
      %2642 = vset.pattern.permute.xlu0 0
      %2643 = vperm.xlu0 %2642, %v2521
      %v2644 = vpop.permute.xlu0 %2643
      %2645 = vset.pattern.permute.xlu0 0
      %2646 = vperm.xlu0 %2645, %v2522
      %v2647 = vpop.permute.xlu0 %2646
      %2648 = vset.pattern.permute.xlu0 0
      %2649 = vperm.xlu0 %2648, %v2523
      %v2650 = vpop.permute.xlu0 %2649
      %2651 = vset.pattern.permute.xlu0 0
      %2652 = vperm.xlu0 %2651, %v2524
      %v2653 = vpop.permute.xlu0 %2652
      %2654 = vset.pattern.permute.xlu0 0
      %2655 = vperm.xlu0 %2654, %v2525
      %v2656 = vpop.permute.xlu0 %2655
      %2657 = vset.pattern.permute.xlu0 0
      %2658 = vperm.xlu0 %2657, %v2526
      %v2659 = vpop.permute.xlu0 %2658
      %2660 = vset.pattern.permute.xlu0 0
      %2661 = vperm.xlu0 %2660, %v2527
      %v2662 = vpop.permute.xlu0 %2661
      %2663 = vset.pattern.permute.xlu0 0
      %2664 = vperm.xlu0 %2663, %v2528
      %v2665 = vpop.permute.xlu0 %2664
      %2666 = vset.pattern.permute.xlu0 0
      %2667 = vperm.xlu0 %2666, %v2529
      %v2668 = vpop.permute.xlu0 %2667
      %2669 = vset.pattern.permute.xlu0 0
      %2670 = vperm.xlu0 %2669, %v2530
      %v2671 = vpop.permute.xlu0 %2670
      %2672 = vset.pattern.permute.xlu0 0
      %2673 = vperm.xlu0 %2672, %v2531
      %v2674 = vpop.permute.xlu0 %2673
      %2675 = vset.pattern.permute.xlu0 0
      %2676 = vperm.xlu0 %2675, %v2532
      %v2677 = vpop.permute.xlu0 %2676
      %2678 = vset.pattern.permute.xlu0 0
      %2679 = vperm.xlu0 %2678, %v2533
      %v2680 = vpop.permute.xlu0 %2679
      %vm2681 = vcmp.eq.s32.totalorder %v2536, 1
      %vm2682 = vcmp.eq.s32.totalorder %v2539, 1
      %vm2683 = vcmp.eq.s32.totalorder %v2542, 1
      %vm2684 = vcmp.eq.s32.totalorder %v2545, 1
      %vm2685 = vcmp.eq.s32.totalorder %v2548, 1
      %vm2686 = vcmp.eq.s32.totalorder %v2551, 1
      %vm2687 = vcmp.eq.s32.totalorder %v2554, 1
      %vm2688 = vcmp.eq.s32.totalorder %v2557, 1
      %vm2689 = vcmp.eq.s32.totalorder %v2560, 1
      %vm2690 = vcmp.eq.s32.totalorder %v2563, 1
      %vm2691 = vcmp.eq.s32.totalorder %v2566, 1
      %vm2692 = vcmp.eq.s32.totalorder %v2569, 1
      %vm2693 = vcmp.eq.s32.totalorder %v2572, 1
      %vm2694 = vcmp.eq.s32.totalorder %v2575, 1
      %vm2695 = vcmp.eq.s32.totalorder %v2578, 1
      %vm2696 = vcmp.eq.s32.totalorder %v2581, 1
      %vm2697 = vcmp.eq.s32.totalorder %v2584, 1
      %vm2698 = vcmp.eq.s32.totalorder %v2587, 1
      %vm2699 = vcmp.eq.s32.totalorder %v2590, 1
      %vm2700 = vcmp.eq.s32.totalorder %v2593, 1
      %vm2701 = vcmp.eq.s32.totalorder %v2596, 1
      %vm2702 = vcmp.eq.s32.totalorder %v2599, 1
      %vm2703 = vcmp.eq.s32.totalorder %v2602, 1
      %vm2704 = vcmp.eq.s32.totalorder %v2605, 1
      %vm2705 = vcmp.eq.s32.totalorder %v2608, 1
      %vm2706 = vcmp.eq.s32.totalorder %v2611, 1
      %vm2707 = vcmp.eq.s32.totalorder %v2614, 1
      %vm2708 = vcmp.eq.s32.totalorder %v2617, 1
      %vm2709 = vcmp.eq.s32.totalorder %v2620, 1
      %vm2710 = vcmp.eq.s32.totalorder %v2623, 1
      %vm2711 = vcmp.eq.s32.totalorder %v2626, 1
      %vm2712 = vcmp.eq.s32.totalorder %v2629, 1
      %vm2713 = vcmp.eq.s32.totalorder %v2632, 1
      %vm2714 = vcmp.eq.s32.totalorder %v2635, 1
      %vm2715 = vcmp.eq.s32.totalorder %v2638, 1
      %vm2716 = vcmp.eq.s32.totalorder %v2641, 1
      %vm2717 = vcmp.eq.s32.totalorder %v2644, 1
      %vm2718 = vcmp.eq.s32.totalorder %v2647, 1
      %vm2719 = vcmp.eq.s32.totalorder %v2650, 1
      %vm2720 = vcmp.eq.s32.totalorder %v2653, 1
      %vm2721 = vcmp.eq.s32.totalorder %v2656, 1
      %vm2722 = vcmp.eq.s32.totalorder %v2659, 1
      %vm2723 = vcmp.eq.s32.totalorder %v2662, 1
      %vm2724 = vcmp.eq.s32.totalorder %v2665, 1
      %vm2725 = vcmp.eq.s32.totalorder %v2668, 1
      %vm2726 = vcmp.eq.s32.totalorder %v2671, 1
      %vm2727 = vcmp.eq.s32.totalorder %v2674, 1
      %vm2728 = vcmp.eq.s32.totalorder %v2677, 1
      %vm2729 = vcmp.eq.s32.totalorder %v2680, 1
      %v2730 = vsel %vm2681, %v2387, 0.0
      %v2731 = vsel %vm2681, %v2388, 0.0
      %v2732 = vsel %vm2682, %v2389, 0.0
      %v2733 = vsel %vm2682, %v2390, 0.0
      %v2734 = vsel %vm2683, %v2391, 0.0
      %v2735 = vsel %vm2683, %v2392, 0.0
      %v2736 = vsel %vm2684, %v2393, 0.0
      %v2737 = vsel %vm2684, %v2394, 0.0
      %v2738 = vsel %vm2685, %v2395, 0.0
      %v2739 = vsel %vm2685, %v2396, 0.0
      %v2740 = vsel %vm2686, %v2397, 0.0
      %v2741 = vsel %vm2686, %v2398, 0.0
      %v2742 = vsel %vm2687, %v2399, 0.0
      %v2743 = vsel %vm2687, %v2400, 0.0
      %v2744 = vsel %vm2688, %v2401, 0.0
      %v2745 = vsel %vm2688, %v2402, 0.0
      %v2746 = vsel %vm2689, %v2403, 0.0
      %v2747 = vsel %vm2689, %v2404, 0.0
      %v2748 = vsel %vm2690, %v2405, 0.0
      %v2749 = vsel %vm2690, %v2406, 0.0
      %v2750 = vsel %vm2691, %v2407, 0.0
      %v2751 = vsel %vm2691, %v2408, 0.0
      %v2752 = vsel %vm2692, %v2409, 0.0
      %v2753 = vsel %vm2692, %v2410, 0.0
      %v2754 = vsel %vm2693, %v2411, 0.0
      %v2755 = vsel %vm2693, %v2412, 0.0
      %v2756 = vsel %vm2694, %v2413, 0.0
      %v2757 = vsel %vm2694, %v2414, 0.0
      %v2758 = vsel %vm2695, %v2415, 0.0
      %v2759 = vsel %vm2695, %v2416, 0.0
      %v2760 = vsel %vm2696, %v2417, 0.0
      %v2761 = vsel %vm2696, %v2418, 0.0
      %v2762 = vsel %vm2697, %v2419, 0.0
      %v2763 = vsel %vm2697, %v2420, 0.0
      %v2764 = vsel %vm2698, %v2421, 0.0
      %v2765 = vsel %vm2698, %v2422, 0.0
      %v2766 = vsel %vm2699, %v2423, 0.0
      %v2767 = vsel %vm2699, %v2424, 0.0
      %v2768 = vsel %vm2700, %v2425, 0.0
      %v2769 = vsel %vm2700, %v2426, 0.0
      %v2770 = vsel %vm2701, %v2427, 0.0
      %v2771 = vsel %vm2701, %v2428, 0.0
      %v2772 = vsel %vm2702, %v2429, 0.0
      %v2773 = vsel %vm2702, %v2430, 0.0
      %v2774 = vsel %vm2703, %v2431, 0.0
      %v2775 = vsel %vm2703, %v2432, 0.0
      %v2776 = vsel %vm2704, %v2433, 0.0
      %v2777 = vsel %vm2704, %v2434, 0.0
      %v2778 = vsel %vm2705, %v2435, 0.0
      %v2779 = vsel %vm2705, %v2436, 0.0
      %v2780 = vsel %vm2706, %v2437, 0.0
      %v2781 = vsel %vm2706, %v2438, 0.0
      %v2782 = vsel %vm2707, %v2439, 0.0
      %v2783 = vsel %vm2707, %v2440, 0.0
      %v2784 = vsel %vm2708, %v2441, 0.0
      %v2785 = vsel %vm2708, %v2442, 0.0
      %v2786 = vsel %vm2709, %v2443, 0.0
      %v2787 = vsel %vm2709, %v2444, 0.0
      %v2788 = vsel %vm2710, %v2445, 0.0
      %v2789 = vsel %vm2710, %v2446, 0.0
      %v2790 = vsel %vm2711, %v2447, 0.0
      %v2791 = vsel %vm2711, %v2448, 0.0
      %v2792 = vsel %vm2712, %v2449, 0.0
      %v2793 = vsel %vm2712, %v2450, 0.0
      %v2794 = vsel %vm2713, %v2451, 0.0
      %v2795 = vsel %vm2713, %v2452, 0.0
      %v2796 = vsel %vm2714, %v2453, 0.0
      %v2797 = vsel %vm2714, %v2454, 0.0
      %v2798 = vsel %vm2715, %v2455, 0.0
      %v2799 = vsel %vm2715, %v2456, 0.0
      %v2800 = vsel %vm2716, %v2457, 0.0
      %v2801 = vsel %vm2716, %v2458, 0.0
      %v2802 = vsel %vm2717, %v2459, 0.0
      %v2803 = vsel %vm2717, %v2460, 0.0
      %v2804 = vsel %vm2718, %v2461, 0.0
      %v2805 = vsel %vm2718, %v2462, 0.0
      %v2806 = vsel %vm2719, %v2463, 0.0
      %v2807 = vsel %vm2719, %v2464, 0.0
      %v2808 = vsel %vm2720, %v2465, 0.0
      %v2809 = vsel %vm2720, %v2466, 0.0
      %v2810 = vsel %vm2721, %v2467, 0.0
      %v2811 = vsel %vm2721, %v2468, 0.0
      %v2812 = vsel %vm2722, %v2469, 0.0
      %v2813 = vsel %vm2722, %v2470, 0.0
      %v2814 = vsel %vm2723, %v2471, 0.0
      %v2815 = vsel %vm2723, %v2472, 0.0
      %v2816 = vsel %vm2724, %v2473, 0.0
      %v2817 = vsel %vm2724, %v2474, 0.0
      %v2818 = vsel %vm2725, %v2475, 0.0
      %v2819 = vsel %vm2725, %v2476, 0.0
      %v2820 = vsel %vm2726, %v2477, 0.0
      %v2821 = vsel %vm2726, %v2478, 0.0
      %v2822 = vsel %vm2727, %v2479, 0.0
      %v2823 = vsel %vm2727, %v2480, 0.0
      %v2824 = vsel %vm2728, %v2481, 0.0
      %v2825 = vsel %vm2728, %v2482, 0.0
      %v2826 = vsel %vm2729, %v2483, 0.0
      %v2827 = vsel %vm2729, %v2484, 0.0
      %v2828 = vadd.f32 %v1455, %v2730
      %v2829 = vadd.f32 %v1456, %v2731
      %v2830 = vadd.f32 %v1457, %v2732
      %v2831 = vadd.f32 %v1458, %v2733
      %v2832 = vadd.f32 %v1459, %v2734
      %v2833 = vadd.f32 %v1460, %v2735
      %v2834 = vadd.f32 %v1461, %v2736
      %v2835 = vadd.f32 %v1462, %v2737
      %v2836 = vadd.f32 %v1463, %v2738
      %v2837 = vadd.f32 %v1464, %v2739
      %v2838 = vadd.f32 %v1465, %v2740
      %v2839 = vadd.f32 %v1466, %v2741
      %v2840 = vadd.f32 %v1467, %v2742
      %v2841 = vadd.f32 %v1468, %v2743
      %v2842 = vadd.f32 %v1469, %v2744
      %v2843 = vadd.f32 %v1470, %v2745
      %v2844 = vadd.f32 %v1471, %v2746
      %v2845 = vadd.f32 %v1472, %v2747
      %v2846 = vadd.f32 %v1473, %v2748
      %v2847 = vadd.f32 %v1474, %v2749
      %v2848 = vadd.f32 %v1475, %v2750
      %v2849 = vadd.f32 %v1476, %v2751
      %v2850 = vadd.f32 %v1477, %v2752
      %v2851 = vadd.f32 %v1478, %v2753
      %v2852 = vadd.f32 %v1479, %v2754
      %v2853 = vadd.f32 %v1480, %v2755
      %v2854 = vadd.f32 %v1481, %v2756
      %v2855 = vadd.f32 %v1482, %v2757
      %v2856 = vadd.f32 %v1483, %v2758
      %v2857 = vadd.f32 %v1484, %v2759
      %v2858 = vadd.f32 %v1485, %v2760
      %v2859 = vadd.f32 %v1486, %v2761
      %v2860 = vadd.f32 %v1487, %v2762
      %v2861 = vadd.f32 %v1488, %v2763
      %v2862 = vadd.f32 %v1489, %v2764
      %v2863 = vadd.f32 %v1490, %v2765
      %v2864 = vadd.f32 %v1491, %v2766
      %v2865 = vadd.f32 %v1492, %v2767
      %v2866 = vadd.f32 %v1493, %v2768
      %v2867 = vadd.f32 %v1494, %v2769
      %v2868 = vadd.f32 %v1495, %v2770
      %v2869 = vadd.f32 %v1496, %v2771
      %v2870 = vadd.f32 %v1497, %v2772
      %v2871 = vadd.f32 %v1498, %v2773
      %v2872 = vadd.f32 %v1499, %v2774
      %v2873 = vadd.f32 %v1500, %v2775
      %v2874 = vadd.f32 %v1501, %v2776
      %v2875 = vadd.f32 %v1502, %v2777
      %v2876 = vadd.f32 %v1503, %v2778
      %v2877 = vadd.f32 %v1504, %v2779
      %v2878 = vadd.f32 %v1505, %v2780
      %v2879 = vadd.f32 %v1506, %v2781
      %v2880 = vadd.f32 %v1507, %v2782
      %v2881 = vadd.f32 %v1508, %v2783
      %v2882 = vadd.f32 %v1509, %v2784
      %v2883 = vadd.f32 %v1510, %v2785
      %v2884 = vadd.f32 %v1511, %v2786
      %v2885 = vadd.f32 %v1512, %v2787
      %v2886 = vadd.f32 %v1513, %v2788
      %v2887 = vadd.f32 %v1514, %v2789
      %v2888 = vadd.f32 %v1515, %v2790
      %v2889 = vadd.f32 %v1516, %v2791
      %v2890 = vadd.f32 %v1517, %v2792
      %v2891 = vadd.f32 %v1518, %v2793
      %v2892 = vadd.f32 %v1519, %v2794
      %v2893 = vadd.f32 %v1520, %v2795
      %v2894 = vadd.f32 %v1521, %v2796
      %v2895 = vadd.f32 %v1522, %v2797
      %v2896 = vadd.f32 %v1523, %v2798
      %v2897 = vadd.f32 %v1524, %v2799
      %v2898 = vadd.f32 %v1525, %v2800
      %v2899 = vadd.f32 %v1526, %v2801
      %v2900 = vadd.f32 %v1527, %v2802
      %v2901 = vadd.f32 %v1528, %v2803
      %v2902 = vadd.f32 %v1529, %v2804
      %v2903 = vadd.f32 %v1530, %v2805
      %v2904 = vadd.f32 %v1531, %v2806
      %v2905 = vadd.f32 %v1532, %v2807
      %v2906 = vadd.f32 %v1533, %v2808
      %v2907 = vadd.f32 %v1534, %v2809
      %v2908 = vadd.f32 %v1535, %v2810
      %v2909 = vadd.f32 %v1536, %v2811
      %v2910 = vadd.f32 %v1537, %v2812
      %v2911 = vadd.f32 %v1538, %v2813
      %v2912 = vadd.f32 %v1539, %v2814
      %v2913 = vadd.f32 %v1540, %v2815
      %v2914 = vadd.f32 %v1541, %v2816
      %v2915 = vadd.f32 %v1542, %v2817
      %v2916 = vadd.f32 %v1543, %v2818
      %v2917 = vadd.f32 %v1544, %v2819
      %v2918 = vadd.f32 %v1545, %v2820
      %v2919 = vadd.f32 %v1546, %v2821
      %v2920 = vadd.f32 %v1547, %v2822
      %v2921 = vadd.f32 %v1548, %v2823
      %v2922 = vadd.f32 %v1549, %v2824
      %v2923 = vadd.f32 %v1550, %v2825
      %v2924 = vadd.f32 %v1551, %v2826
      %v2925 = vadd.f32 %v1552, %v2827
      %v2926 = vmul.f32 %v2828, 0.25
      %v2927 = vmul.f32 %v2829, 0.25
      %v2928 = vmul.f32 %v2830, 0.25
      %v2929 = vmul.f32 %v2831, 0.25
      %v2930 = vmul.f32 %v2832, 0.25
      %v2931 = vmul.f32 %v2833, 0.25
      %v2932 = vmul.f32 %v2834, 0.25
      %v2933 = vmul.f32 %v2835, 0.25
      %v2934 = vmul.f32 %v2836, 0.25
      %v2935 = vmul.f32 %v2837, 0.25
      %v2936 = vmul.f32 %v2838, 0.25
      %v2937 = vmul.f32 %v2839, 0.25
      %v2938 = vmul.f32 %v2840, 0.25
      %v2939 = vmul.f32 %v2841, 0.25
      %v2940 = vmul.f32 %v2842, 0.25
      %v2941 = vmul.f32 %v2843, 0.25
      %v2942 = vmul.f32 %v2844, 0.25
      %v2943 = vmul.f32 %v2845, 0.25
      %v2944 = vmul.f32 %v2846, 0.25
      %v2945 = vmul.f32 %v2847, 0.25
      %v2946 = vmul.f32 %v2848, 0.25
      %v2947 = vmul.f32 %v2849, 0.25
      %v2948 = vmul.f32 %v2850, 0.25
      %v2949 = vmul.f32 %v2851, 0.25
      %v2950 = vmul.f32 %v2852, 0.25
      %v2951 = vmul.f32 %v2853, 0.25
      %v2952 = vmul.f32 %v2854, 0.25
      %v2953 = vmul.f32 %v2855, 0.25
      %v2954 = vmul.f32 %v2856, 0.25
      %v2955 = vmul.f32 %v2857, 0.25
      %v2956 = vmul.f32 %v2858, 0.25
      %v2957 = vmul.f32 %v2859, 0.25
      %v2958 = vmul.f32 %v2860, 0.25
      %v2959 = vmul.f32 %v2861, 0.25
      %v2960 = vmul.f32 %v2862, 0.25
      %v2961 = vmul.f32 %v2863, 0.25
      %v2962 = vmul.f32 %v2864, 0.25
      %v2963 = vmul.f32 %v2865, 0.25
      %v2964 = vmul.f32 %v2866, 0.25
      %v2965 = vmul.f32 %v2867, 0.25
      %v2966 = vmul.f32 %v2868, 0.25
      %v2967 = vmul.f32 %v2869, 0.25
      %v2968 = vmul.f32 %v2870, 0.25
      %v2969 = vmul.f32 %v2871, 0.25
      %v2970 = vmul.f32 %v2872, 0.25
      %v2971 = vmul.f32 %v2873, 0.25
      %v2972 = vmul.f32 %v2874, 0.25
      %v2973 = vmul.f32 %v2875, 0.25
      %v2974 = vmul.f32 %v2876, 0.25
      %v2975 = vmul.f32 %v2877, 0.25
      %v2976 = vmul.f32 %v2878, 0.25
      %v2977 = vmul.f32 %v2879, 0.25
      %v2978 = vmul.f32 %v2880, 0.25
      %v2979 = vmul.f32 %v2881, 0.25
      %v2980 = vmul.f32 %v2882, 0.25
      %v2981 = vmul.f32 %v2883, 0.25
      %v2982 = vmul.f32 %v2884, 0.25
      %v2983 = vmul.f32 %v2885, 0.25
      %v2984 = vmul.f32 %v2886, 0.25
      %v2985 = vmul.f32 %v2887, 0.25
      %v2986 = vmul.f32 %v2888, 0.25
      %v2987 = vmul.f32 %v2889, 0.25
      %v2988 = vmul.f32 %v2890, 0.25
      %v2989 = vmul.f32 %v2891, 0.25
      %v2990 = vmul.f32 %v2892, 0.25
      %v2991 = vmul.f32 %v2893, 0.25
      %v2992 = vmul.f32 %v2894, 0.25
      %v2993 = vmul.f32 %v2895, 0.25
      %v2994 = vmul.f32 %v2896, 0.25
      %v2995 = vmul.f32 %v2897, 0.25
      %v2996 = vmul.f32 %v2898, 0.25
      %v2997 = vmul.f32 %v2899, 0.25
      %v2998 = vmul.f32 %v2900, 0.25
      %v2999 = vmul.f32 %v2901, 0.25
      %v3000 = vmul.f32 %v2902, 0.25
      %v3001 = vmul.f32 %v2903, 0.25
      %v3002 = vmul.f32 %v2904, 0.25
      %v3003 = vmul.f32 %v2905, 0.25
      %v3004 = vmul.f32 %v2906, 0.25
      %v3005 = vmul.f32 %v2907, 0.25
      %v3006 = vmul.f32 %v2908, 0.25
      %v3007 = vmul.f32 %v2909, 0.25
      %v3008 = vmul.f32 %v2910, 0.25
      %v3009 = vmul.f32 %v2911, 0.25
      %v3010 = vmul.f32 %v2912, 0.25
      %v3011 = vmul.f32 %v2913, 0.25
      %v3012 = vmul.f32 %v2914, 0.25
      %v3013 = vmul.f32 %v2915, 0.25
      %v3014 = vmul.f32 %v2916, 0.25
      %v3015 = vmul.f32 %v2917, 0.25
      %v3016 = vmul.f32 %v2918, 0.25
      %v3017 = vmul.f32 %v2919, 0.25
      %v3018 = vmul.f32 %v2920, 0.25
      %v3019 = vmul.f32 %v2921, 0.25
      %v3020 = vmul.f32 %v2922, 0.25
      %v3021 = vmul.f32 %v2923, 0.25
      %v3022 = vmul.f32 %v2924, 0.25
      %v3023 = vmul.f32 %v2925, 0.25
      %v3024 = vld [vmem:[%s259] sm:$0xff]
      %v3025 = vld [vmem:[%s259 + $0x8] sm:$0xff]
      %v3026 = vld [vmem:[%s259 + $0x10] sm:$0xff]
      %v3027 = vld [vmem:[%s259 + $0x18] sm:$0xff]
      %v3028 = vld [vmem:[%s259 + $0x20] sm:$0xff]
      %v3029 = vld [vmem:[%s259 + $0x28] sm:$0xff]
      %v3030 = vld [vmem:[%s259 + $0x30] sm:$0xff]
      %v3031 = vld [vmem:[%s259 + $0x38] sm:$0xff]
      %v3032 = vld [vmem:[%s259 + $0x40] sm:$0xff]
      %v3033 = vld [vmem:[%s259 + $0x48] sm:$0xff]
      %v3034 = vld [vmem:[%s259 + $0x50] sm:$0xff]
      %v3035 = vld [vmem:[%s259 + $0x58] sm:$0xff]
      %v3036 = vld [vmem:[%s259 + $0x60] sm:$0xff]
      %v3037 = vld [vmem:[%s259 + $0x68] sm:$0xff]
      %v3038 = vld [vmem:[%s259 + $0x70] sm:$0xff]
      %v3039 = vld [vmem:[%s259 + $0x78] sm:$0xff]
      %v3040 = vld [vmem:[%s259 + $0x80] sm:$0xff]
      %v3041 = vld [vmem:[%s259 + $0x88] sm:$0xff]
      %v3042 = vld [vmem:[%s259 + $0x90] sm:$0xff]
      %v3043 = vld [vmem:[%s259 + $0x98] sm:$0xff]
      %v3044 = vld [vmem:[%s259 + $0xa0] sm:$0xff]
      %v3045 = vld [vmem:[%s259 + $0xa8] sm:$0xff]
      %v3046 = vld [vmem:[%s259 + $0xb0] sm:$0xff]
      %v3047 = vld [vmem:[%s259 + $0xb8] sm:$0xff]
      %v3048 = vld [vmem:[%s259 + $0xc0] sm:$0xff]
      %v3049 = vld [vmem:[%s259 + $0xc8] sm:$0xff]
      %v3050 = vld [vmem:[%s259 + $0xd0] sm:$0xff]
      %v3051 = vld [vmem:[%s259 + $0xd8] sm:$0xff]
      %v3052 = vld [vmem:[%s259 + $0xe0] sm:$0xff]
      %v3053 = vld [vmem:[%s259 + $0xe8] sm:$0xff]
      %v3054 = vld [vmem:[%s259 + $0xf0] sm:$0xff]
      %v3055 = vld [vmem:[%s259 + $0xf8] sm:$0xff]
      %v3056 = vld [vmem:[%s259 + $0x100] sm:$0xff]
      %v3057 = vld [vmem:[%s259 + $0x108] sm:$0xff]
      %v3058 = vld [vmem:[%s259 + $0x110] sm:$0xff]
      %v3059 = vld [vmem:[%s259 + $0x118] sm:$0xff]
      %v3060 = vld [vmem:[%s259 + $0x120] sm:$0xff]
      %v3061 = vld [vmem:[%s259 + $0x128] sm:$0xff]
      %v3062 = vld [vmem:[%s259 + $0x130] sm:$0xff]
      %v3063 = vld [vmem:[%s259 + $0x138] sm:$0xff]
      %v3064 = vld [vmem:[%s259 + $0x140] sm:$0xff]
      %v3065 = vld [vmem:[%s259 + $0x148] sm:$0xff]
      %v3066 = vld [vmem:[%s259 + $0x150] sm:$0xff]
      %v3067 = vld [vmem:[%s259 + $0x158] sm:$0xff]
      %v3068 = vld [vmem:[%s259 + $0x160] sm:$0xff]
      %v3069 = vld [vmem:[%s259 + $0x168] sm:$0xff]
      %v3070 = vld [vmem:[%s259 + $0x170] sm:$0xff]
      %v3071 = vld [vmem:[%s259 + $0x178] sm:$0xff]
      %v3072 = vld [vmem:[%s259 + $0x180] sm:$0xff]
      %vm3073 = vcmp.ge.f32.partialorder %v3024, -1.0
      %vm3074 = vcmp.ge.f32.partialorder %v3025, -1.0
      %vm3075 = vcmp.ge.f32.partialorder %v3026, -1.0
      %vm3076 = vcmp.ge.f32.partialorder %v3027, -1.0
      %vm3077 = vcmp.ge.f32.partialorder %v3028, -1.0
      %vm3078 = vcmp.ge.f32.partialorder %v3029, -1.0
      %vm3079 = vcmp.ge.f32.partialorder %v3030, -1.0
      %vm3080 = vcmp.ge.f32.partialorder %v3031, -1.0
      %vm3081 = vcmp.ge.f32.partialorder %v3032, -1.0
      %vm3082 = vcmp.ge.f32.partialorder %v3033, -1.0
      %vm3083 = vcmp.ge.f32.partialorder %v3034, -1.0
      %vm3084 = vcmp.ge.f32.partialorder %v3035, -1.0
      %vm3085 = vcmp.ge.f32.partialorder %v3036, -1.0
      %vm3086 = vcmp.ge.f32.partialorder %v3037, -1.0
      %vm3087 = vcmp.ge.f32.partialorder %v3038, -1.0
      %vm3088 = vcmp.ge.f32.partialorder %v3039, -1.0
      %vm3089 = vcmp.ge.f32.partialorder %v3040, -1.0
      %vm3090 = vcmp.ge.f32.partialorder %v3041, -1.0
      %vm3091 = vcmp.ge.f32.partialorder %v3042, -1.0
      %vm3092 = vcmp.ge.f32.partialorder %v3043, -1.0
      %vm3093 = vcmp.ge.f32.partialorder %v3044, -1.0
      %vm3094 = vcmp.ge.f32.partialorder %v3045, -1.0
      %vm3095 = vcmp.ge.f32.partialorder %v3046, -1.0
      %vm3096 = vcmp.ge.f32.partialorder %v3047, -1.0
      %vm3097 = vcmp.ge.f32.partialorder %v3048, -1.0
      %vm3098 = vcmp.ge.f32.partialorder %v3049, -1.0
      %vm3099 = vcmp.ge.f32.partialorder %v3050, -1.0
      %vm3100 = vcmp.ge.f32.partialorder %v3051, -1.0
      %vm3101 = vcmp.ge.f32.partialorder %v3052, -1.0
      %vm3102 = vcmp.ge.f32.partialorder %v3053, -1.0
      %vm3103 = vcmp.ge.f32.partialorder %v3054, -1.0
      %vm3104 = vcmp.ge.f32.partialorder %v3055, -1.0
      %vm3105 = vcmp.ge.f32.partialorder %v3056, -1.0
      %vm3106 = vcmp.ge.f32.partialorder %v3057, -1.0
      %vm3107 = vcmp.ge.f32.partialorder %v3058, -1.0
      %vm3108 = vcmp.ge.f32.partialorder %v3059, -1.0
      %vm3109 = vcmp.ge.f32.partialorder %v3060, -1.0
      %vm3110 = vcmp.ge.f32.partialorder %v3061, -1.0
      %vm3111 = vcmp.ge.f32.partialorder %v3062, -1.0
      %vm3112 = vcmp.ge.f32.partialorder %v3063, -1.0
      %vm3113 = vcmp.ge.f32.partialorder %v3064, -1.0
      %vm3114 = vcmp.ge.f32.partialorder %v3065, -1.0
      %vm3115 = vcmp.ge.f32.partialorder %v3066, -1.0
      %vm3116 = vcmp.ge.f32.partialorder %v3067, -1.0
      %vm3117 = vcmp.ge.f32.partialorder %v3068, -1.0
      %vm3118 = vcmp.ge.f32.partialorder %v3069, -1.0
      %vm3119 = vcmp.ge.f32.partialorder %v3070, -1.0
      %vm3120 = vcmp.ge.f32.partialorder %v3071, -1.0
      %vm3121 = vcmp.ge.f32.partialorder %v3072, -1.0
      %vm3122 = vcmp.le.f32.partialorder %v3024, 16.0
      %vm3123 = vcmp.le.f32.partialorder %v3025, 16.0
      %vm3124 = vcmp.le.f32.partialorder %v3026, 16.0
      %vm3125 = vcmp.le.f32.partialorder %v3027, 16.0
      %vm3126 = vcmp.le.f32.partialorder %v3028, 16.0
      %vm3127 = vcmp.le.f32.partialorder %v3029, 16.0
      %vm3128 = vcmp.le.f32.partialorder %v3030, 16.0
      %vm3129 = vcmp.le.f32.partialorder %v3031, 16.0
      %vm3130 = vcmp.le.f32.partialorder %v3032, 16.0
      %vm3131 = vcmp.le.f32.partialorder %v3033, 16.0
      %vm3132 = vcmp.le.f32.partialorder %v3034, 16.0
      %vm3133 = vcmp.le.f32.partialorder %v3035, 16.0
      %vm3134 = vcmp.le.f32.partialorder %v3036, 16.0
      %vm3135 = vcmp.le.f32.partialorder %v3037, 16.0
      %vm3136 = vcmp.le.f32.partialorder %v3038, 16.0
      %vm3137 = vcmp.le.f32.partialorder %v3039, 16.0
      %vm3138 = vcmp.le.f32.partialorder %v3040, 16.0
      %vm3139 = vcmp.le.f32.partialorder %v3041, 16.0
      %vm3140 = vcmp.le.f32.partialorder %v3042, 16.0
      %vm3141 = vcmp.le.f32.partialorder %v3043, 16.0
      %vm3142 = vcmp.le.f32.partialorder %v3044, 16.0
      %vm3143 = vcmp.le.f32.partialorder %v3045, 16.0
      %vm3144 = vcmp.le.f32.partialorder %v3046, 16.0
      %vm3145 = vcmp.le.f32.partialorder %v3047, 16.0
      %vm3146 = vcmp.le.f32.partialorder %v3048, 16.0
      %vm3147 = vcmp.le.f32.partialorder %v3049, 16.0
      %vm3148 = vcmp.le.f32.partialorder %v3050, 16.0
      %vm3149 = vcmp.le.f32.partialorder %v3051, 16.0
      %vm3150 = vcmp.le.f32.partialorder %v3052, 16.0
      %vm3151 = vcmp.le.f32.partialorder %v3053, 16.0
      %vm3152 = vcmp.le.f32.partialorder %v3054, 16.0
      %vm3153 = vcmp.le.f32.partialorder %v3055, 16.0
      %vm3154 = vcmp.le.f32.partialorder %v3056, 16.0
      %vm3155 = vcmp.le.f32.partialorder %v3057, 16.0
      %vm3156 = vcmp.le.f32.partialorder %v3058, 16.0
      %vm3157 = vcmp.le.f32.partialorder %v3059, 16.0
      %vm3158 = vcmp.le.f32.partialorder %v3060, 16.0
      %vm3159 = vcmp.le.f32.partialorder %v3061, 16.0
      %vm3160 = vcmp.le.f32.partialorder %v3062, 16.0
      %vm3161 = vcmp.le.f32.partialorder %v3063, 16.0
      %vm3162 = vcmp.le.f32.partialorder %v3064, 16.0
      %vm3163 = vcmp.le.f32.partialorder %v3065, 16.0
      %vm3164 = vcmp.le.f32.partialorder %v3066, 16.0
      %vm3165 = vcmp.le.f32.partialorder %v3067, 16.0
      %vm3166 = vcmp.le.f32.partialorder %v3068, 16.0
      %vm3167 = vcmp.le.f32.partialorder %v3069, 16.0
      %vm3168 = vcmp.le.f32.partialorder %v3070, 16.0
      %vm3169 = vcmp.le.f32.partialorder %v3071, 16.0
      %vm3170 = vcmp.le.f32.partialorder %v3072, 16.0
      %vm3171 = vmand %vm3073, %vm3122
      %vm3172 = vmand %vm3074, %vm3123
      %vm3173 = vmand %vm3075, %vm3124
      %vm3174 = vmand %vm3076, %vm3125
      %vm3175 = vmand %vm3077, %vm3126
      %vm3176 = vmand %vm3078, %vm3127
      %vm3177 = vmand %vm3079, %vm3128
      %vm3178 = vmand %vm3080, %vm3129
      %vm3179 = vmand %vm3081, %vm3130
      %vm3180 = vmand %vm3082, %vm3131
      %vm3181 = vmand %vm3083, %vm3132
      %vm3182 = vmand %vm3084, %vm3133
      %vm3183 = vmand %vm3085, %vm3134
      %vm3184 = vmand %vm3086, %vm3135
      %vm3185 = vmand %vm3087, %vm3136
      %vm3186 = vmand %vm3088, %vm3137
      %vm3187 = vmand %vm3089, %vm3138
      %vm3188 = vmand %vm3090, %vm3139
      %vm3189 = vmand %vm3091, %vm3140
      %vm3190 = vmand %vm3092, %vm3141
      %vm3191 = vmand %vm3093, %vm3142
      %vm3192 = vmand %vm3094, %vm3143
      %vm3193 = vmand %vm3095, %vm3144
      %vm3194 = vmand %vm3096, %vm3145
      %vm3195 = vmand %vm3097, %vm3146
      %vm3196 = vmand %vm3098, %vm3147
      %vm3197 = vmand %vm3099, %vm3148
      %vm3198 = vmand %vm3100, %vm3149
      %vm3199 = vmand %vm3101, %vm3150
      %vm3200 = vmand %vm3102, %vm3151
      %vm3201 = vmand %vm3103, %vm3152
      %vm3202 = vmand %vm3104, %vm3153
      %vm3203 = vmand %vm3105, %vm3154
      %vm3204 = vmand %vm3106, %vm3155
      %vm3205 = vmand %vm3107, %vm3156
      %vm3206 = vmand %vm3108, %vm3157
      %vm3207 = vmand %vm3109, %vm3158
      %vm3208 = vmand %vm3110, %vm3159
      %vm3209 = vmand %vm3111, %vm3160
      %vm3210 = vmand %vm3112, %vm3161
      %vm3211 = vmand %vm3113, %vm3162
      %vm3212 = vmand %vm3114, %vm3163
      %vm3213 = vmand %vm3115, %vm3164
      %vm3214 = vmand %vm3116, %vm3165
      %vm3215 = vmand %vm3117, %vm3166
      %vm3216 = vmand %vm3118, %vm3167
      %vm3217 = vmand %vm3119, %vm3168
      %vm3218 = vmand %vm3120, %vm3169
      %vm3219 = vmand %vm3121, %vm3170
      %v3220 = vmax.f32 %v3024, 0.0
      %v3221 = vmax.f32 %v3025, 0.0
      %v3222 = vmax.f32 %v3026, 0.0
      %v3223 = vmax.f32 %v3027, 0.0
      %v3224 = vmax.f32 %v3028, 0.0
      %v3225 = vmax.f32 %v3029, 0.0
      %v3226 = vmax.f32 %v3030, 0.0
      %v3227 = vmax.f32 %v3031, 0.0
      %v3228 = vmax.f32 %v3032, 0.0
      %v3229 = vmax.f32 %v3033, 0.0
      %v3230 = vmax.f32 %v3034, 0.0
      %v3231 = vmax.f32 %v3035, 0.0
      %v3232 = vmax.f32 %v3036, 0.0
      %v3233 = vmax.f32 %v3037, 0.0
      %v3234 = vmax.f32 %v3038, 0.0
      %v3235 = vmax.f32 %v3039, 0.0
      %v3236 = vmax.f32 %v3040, 0.0
      %v3237 = vmax.f32 %v3041, 0.0
      %v3238 = vmax.f32 %v3042, 0.0
      %v3239 = vmax.f32 %v3043, 0.0
      %v3240 = vmax.f32 %v3044, 0.0
      %v3241 = vmax.f32 %v3045, 0.0
      %v3242 = vmax.f32 %v3046, 0.0
      %v3243 = vmax.f32 %v3047, 0.0
      %v3244 = vmax.f32 %v3048, 0.0
      %v3245 = vmax.f32 %v3049, 0.0
      %v3246 = vmax.f32 %v3050, 0.0
      %v3247 = vmax.f32 %v3051, 0.0
      %v3248 = vmax.f32 %v3052, 0.0
      %v3249 = vmax.f32 %v3053, 0.0
      %v3250 = vmax.f32 %v3054, 0.0
      %v3251 = vmax.f32 %v3055, 0.0
      %v3252 = vmax.f32 %v3056, 0.0
      %v3253 = vmax.f32 %v3057, 0.0
      %v3254 = vmax.f32 %v3058, 0.0
      %v3255 = vmax.f32 %v3059, 0.0
      %v3256 = vmax.f32 %v3060, 0.0
      %v3257 = vmax.f32 %v3061, 0.0
      %v3258 = vmax.f32 %v3062, 0.0
      %v3259 = vmax.f32 %v3063, 0.0
      %v3260 = vmax.f32 %v3064, 0.0
      %v3261 = vmax.f32 %v3065, 0.0
      %v3262 = vmax.f32 %v3066, 0.0
      %v3263 = vmax.f32 %v3067, 0.0
      %v3264 = vmax.f32 %v3068, 0.0
      %v3265 = vmax.f32 %v3069, 0.0
      %v3266 = vmax.f32 %v3070, 0.0
      %v3267 = vmax.f32 %v3071, 0.0
      %v3268 = vmax.f32 %v3072, 0.0
      %v3269 = vmin.f32 %v3220, 15.0
      %v3270 = vmin.f32 %v3221, 15.0
      %v3271 = vmin.f32 %v3222, 15.0
      %v3272 = vmin.f32 %v3223, 15.0
      %v3273 = vmin.f32 %v3224, 15.0
      %v3274 = vmin.f32 %v3225, 15.0
      %v3275 = vmin.f32 %v3226, 15.0
      %v3276 = vmin.f32 %v3227, 15.0
      %v3277 = vmin.f32 %v3228, 15.0
      %v3278 = vmin.f32 %v3229, 15.0
      %v3279 = vmin.f32 %v3230, 15.0
      %v3280 = vmin.f32 %v3231, 15.0
      %v3281 = vmin.f32 %v3232, 15.0
      %v3282 = vmin.f32 %v3233, 15.0
      %v3283 = vmin.f32 %v3234, 15.0
      %v3284 = vmin.f32 %v3235, 15.0
      %v3285 = vmin.f32 %v3236, 15.0
      %v3286 = vmin.f32 %v3237, 15.0
      %v3287 = vmin.f32 %v3238, 15.0
      %v3288 = vmin.f32 %v3239, 15.0
      %v3289 = vmin.f32 %v3240, 15.0
      %v3290 = vmin.f32 %v3241, 15.0
      %v3291 = vmin.f32 %v3242, 15.0
      %v3292 = vmin.f32 %v3243, 15.0
      %v3293 = vmin.f32 %v3244, 15.0
      %v3294 = vmin.f32 %v3245, 15.0
      %v3295 = vmin.f32 %v3246, 15.0
      %v3296 = vmin.f32 %v3247, 15.0
      %v3297 = vmin.f32 %v3248, 15.0
      %v3298 = vmin.f32 %v3249, 15.0
      %v3299 = vmin.f32 %v3250, 15.0
      %v3300 = vmin.f32 %v3251, 15.0
      %v3301 = vmin.f32 %v3252, 15.0
      %v3302 = vmin.f32 %v3253, 15.0
      %v3303 = vmin.f32 %v3254, 15.0
      %v3304 = vmin.f32 %v3255, 15.0
      %v3305 = vmin.f32 %v3256, 15.0
      %v3306 = vmin.f32 %v3257, 15.0
      %v3307 = vmin.f32 %v3258, 15.0
      %v3308 = vmin.f32 %v3259, 15.0
      %v3309 = vmin.f32 %v3260, 15.0
      %v3310 = vmin.f32 %v3261, 15.0
      %v3311 = vmin.f32 %v3262, 15.0
      %v3312 = vmin.f32 %v3263, 15.0
      %v3313 = vmin.f32 %v3264, 15.0
      %v3314 = vmin.f32 %v3265, 15.0
      %v3315 = vmin.f32 %v3266, 15.0
      %v3316 = vmin.f32 %v3267, 15.0
      %v3317 = vmin.f32 %v3268, 15.0
      %3319 = vset.pattern.permute.xlu0 0
      %3320 = vperm.xlu0 %3319, %v3269
      %v3321 = vpop.permute.xlu0 %3320
      %3324 = vset.pattern.permute.xlu0 0
      %3325 = vperm.xlu0 %3324, %v3270
      %v3326 = vpop.permute.xlu0 %3325
      %3329 = vset.pattern.permute.xlu0 0
      %3330 = vperm.xlu0 %3329, %v3271
      %v3331 = vpop.permute.xlu0 %3330
      %3334 = vset.pattern.permute.xlu0 0
      %3335 = vperm.xlu0 %3334, %v3272
      %v3336 = vpop.permute.xlu0 %3335
      %3339 = vset.pattern.permute.xlu0 0
      %3340 = vperm.xlu0 %3339, %v3273
      %v3341 = vpop.permute.xlu0 %3340
      %3344 = vset.pattern.permute.xlu0 0
      %3345 = vperm.xlu0 %3344, %v3274
      %v3346 = vpop.permute.xlu0 %3345
      %3349 = vset.pattern.permute.xlu0 0
      %3350 = vperm.xlu0 %3349, %v3275
      %v3351 = vpop.permute.xlu0 %3350
      %3354 = vset.pattern.permute.xlu0 0
      %3355 = vperm.xlu0 %3354, %v3276
      %v3356 = vpop.permute.xlu0 %3355
      %3359 = vset.pattern.permute.xlu0 0
      %3360 = vperm.xlu0 %3359, %v3277
      %v3361 = vpop.permute.xlu0 %3360
      %3364 = vset.pattern.permute.xlu0 0
      %3365 = vperm.xlu0 %3364, %v3278
      %v3366 = vpop.permute.xlu0 %3365
      %3369 = vset.pattern.permute.xlu0 0
      %3370 = vperm.xlu0 %3369, %v3279
      %v3371 = vpop.permute.xlu0 %3370
      %3374 = vset.pattern.permute.xlu0 0
      %3375 = vperm.xlu0 %3374, %v3280
      %v3376 = vpop.permute.xlu0 %3375
      %3379 = vset.pattern.permute.xlu0 0
      %3380 = vperm.xlu0 %3379, %v3281
      %v3381 = vpop.permute.xlu0 %3380
      %3384 = vset.pattern.permute.xlu0 0
      %3385 = vperm.xlu0 %3384, %v3282
      %v3386 = vpop.permute.xlu0 %3385
      %3389 = vset.pattern.permute.xlu0 0
      %3390 = vperm.xlu0 %3389, %v3283
      %v3391 = vpop.permute.xlu0 %3390
      %3394 = vset.pattern.permute.xlu0 0
      %3395 = vperm.xlu0 %3394, %v3284
      %v3396 = vpop.permute.xlu0 %3395
      %3399 = vset.pattern.permute.xlu0 0
      %3400 = vperm.xlu0 %3399, %v3285
      %v3401 = vpop.permute.xlu0 %3400
      %3404 = vset.pattern.permute.xlu0 0
      %3405 = vperm.xlu0 %3404, %v3286
      %v3406 = vpop.permute.xlu0 %3405
      %3409 = vset.pattern.permute.xlu0 0
      %3410 = vperm.xlu0 %3409, %v3287
      %v3411 = vpop.permute.xlu0 %3410
      %3414 = vset.pattern.permute.xlu0 0
      %3415 = vperm.xlu0 %3414, %v3288
      %v3416 = vpop.permute.xlu0 %3415
      %3419 = vset.pattern.permute.xlu0 0
      %3420 = vperm.xlu0 %3419, %v3289
      %v3421 = vpop.permute.xlu0 %3420
      %3424 = vset.pattern.permute.xlu0 0
      %3425 = vperm.xlu0 %3424, %v3290
      %v3426 = vpop.permute.xlu0 %3425
      %3429 = vset.pattern.permute.xlu0 0
      %3430 = vperm.xlu0 %3429, %v3291
      %v3431 = vpop.permute.xlu0 %3430
      %3434 = vset.pattern.permute.xlu0 0
      %3435 = vperm.xlu0 %3434, %v3292
      %v3436 = vpop.permute.xlu0 %3435
      %3439 = vset.pattern.permute.xlu0 0
      %3440 = vperm.xlu0 %3439, %v3293
      %v3441 = vpop.permute.xlu0 %3440
      %3444 = vset.pattern.permute.xlu0 0
      %3445 = vperm.xlu0 %3444, %v3294
      %v3446 = vpop.permute.xlu0 %3445
      %3449 = vset.pattern.permute.xlu0 0
      %3450 = vperm.xlu0 %3449, %v3295
      %v3451 = vpop.permute.xlu0 %3450
      %3454 = vset.pattern.permute.xlu0 0
      %3455 = vperm.xlu0 %3454, %v3296
      %v3456 = vpop.permute.xlu0 %3455
      %3459 = vset.pattern.permute.xlu0 0
      %3460 = vperm.xlu0 %3459, %v3297
      %v3461 = vpop.permute.xlu0 %3460
      %3464 = vset.pattern.permute.xlu0 0
      %3465 = vperm.xlu0 %3464, %v3298
      %v3466 = vpop.permute.xlu0 %3465
      %3469 = vset.pattern.permute.xlu0 0
      %3470 = vperm.xlu0 %3469, %v3299
      %v3471 = vpop.permute.xlu0 %3470
      %3474 = vset.pattern.permute.xlu0 0
      %3475 = vperm.xlu0 %3474, %v3300
      %v3476 = vpop.permute.xlu0 %3475
      %3479 = vset.pattern.permute.xlu0 0
      %3480 = vperm.xlu0 %3479, %v3301
      %v3481 = vpop.permute.xlu0 %3480
      %3484 = vset.pattern.permute.xlu0 0
      %3485 = vperm.xlu0 %3484, %v3302
      %v3486 = vpop.permute.xlu0 %3485
      %3489 = vset.pattern.permute.xlu0 0
      %3490 = vperm.xlu0 %3489, %v3303
      %v3491 = vpop.permute.xlu0 %3490
      %3494 = vset.pattern.permute.xlu0 0
      %3495 = vperm.xlu0 %3494, %v3304
      %v3496 = vpop.permute.xlu0 %3495
      %3499 = vset.pattern.permute.xlu0 0
      %3500 = vperm.xlu0 %3499, %v3305
      %v3501 = vpop.permute.xlu0 %3500
      %3504 = vset.pattern.permute.xlu0 0
      %3505 = vperm.xlu0 %3504, %v3306
      %v3506 = vpop.permute.xlu0 %3505
      %3509 = vset.pattern.permute.xlu0 0
      %3510 = vperm.xlu0 %3509, %v3307
      %v3511 = vpop.permute.xlu0 %3510
      %3514 = vset.pattern.permute.xlu0 0
      %3515 = vperm.xlu0 %3514, %v3308
      %v3516 = vpop.permute.xlu0 %3515
      %3519 = vset.pattern.permute.xlu0 0
      %3520 = vperm.xlu0 %3519, %v3309
      %v3521 = vpop.permute.xlu0 %3520
      %3524 = vset.pattern.permute.xlu0 0
      %3525 = vperm.xlu0 %3524, %v3310
      %v3526 = vpop.permute.xlu0 %3525
      %3529 = vset.pattern.permute.xlu0 0
      %3530 = vperm.xlu0 %3529, %v3311
      %v3531 = vpop.permute.xlu0 %3530
      %3534 = vset.pattern.permute.xlu0 0
      %3535 = vperm.xlu0 %3534, %v3312
      %v3536 = vpop.permute.xlu0 %3535
      %3539 = vset.pattern.permute.xlu0 0
      %3540 = vperm.xlu0 %3539, %v3313
      %v3541 = vpop.permute.xlu0 %3540
      %3544 = vset.pattern.permute.xlu0 0
      %3545 = vperm.xlu0 %3544, %v3314
      %v3546 = vpop.permute.xlu0 %3545
      %3549 = vset.pattern.permute.xlu0 0
      %3550 = vperm.xlu0 %3549, %v3315
      %v3551 = vpop.permute.xlu0 %3550
      %3554 = vset.pattern.permute.xlu0 0
      %3555 = vperm.xlu0 %3554, %v3316
      %v3556 = vpop.permute.xlu0 %3555
      %3559 = vset.pattern.permute.xlu0 0
      %3560 = vperm.xlu0 %3559, %v3317
      %v3561 = vpop.permute.xlu0 %3560
      %v3564 = vlaneseq
      %v3565 = vshrl.u32 %v3564, 7
      %v3566 = vsub.s32 0, %v3565
      %v3567 = vrot.slane %v267, %v3566
      %v3568 = vlaneseq
      %v3569 = vshrl.u32 %v3568, 7
      %v3570 = vsub.s32 1, %v3569
      %v3571 = vrot.slane %v267, %v3570
      %v3574 = vsub.f32 %v3321, %v3567
      %v3575 = vsub.f32 %v3321, %v3571
      %v3576 = vsub.f32 %v3326, %v3567
      %v3577 = vsub.f32 %v3326, %v3571
      %v3578 = vsub.f32 %v3331, %v3567
      %v3579 = vsub.f32 %v3331, %v3571
      %v3580 = vsub.f32 %v3336, %v3567
      %v3581 = vsub.f32 %v3336, %v3571
      %v3582 = vsub.f32 %v3341, %v3567
      %v3583 = vsub.f32 %v3341, %v3571
      %v3584 = vsub.f32 %v3346, %v3567
      %v3585 = vsub.f32 %v3346, %v3571
      %v3586 = vsub.f32 %v3351, %v3567
      %v3587 = vsub.f32 %v3351, %v3571
      %v3588 = vsub.f32 %v3356, %v3567
      %v3589 = vsub.f32 %v3356, %v3571
      %v3590 = vsub.f32 %v3361, %v3567
      %v3591 = vsub.f32 %v3361, %v3571
      %v3592 = vsub.f32 %v3366, %v3567
      %v3593 = vsub.f32 %v3366, %v3571
      %v3594 = vsub.f32 %v3371, %v3567
      %v3595 = vsub.f32 %v3371, %v3571
      %v3596 = vsub.f32 %v3376, %v3567
      %v3597 = vsub.f32 %v3376, %v3571
      %v3598 = vsub.f32 %v3381, %v3567
      %v3599 = vsub.f32 %v3381, %v3571
      %v3600 = vsub.f32 %v3386, %v3567
      %v3601 = vsub.f32 %v3386, %v3571
      %v3602 = vsub.f32 %v3391, %v3567
      %v3603 = vsub.f32 %v3391, %v3571
      %v3604 = vsub.f32 %v3396, %v3567
      %v3605 = vsub.f32 %v3396, %v3571
      %v3606 = vsub.f32 %v3401, %v3567
      %v3607 = vsub.f32 %v3401, %v3571
      %v3608 = vsub.f32 %v3406, %v3567
      %v3609 = vsub.f32 %v3406, %v3571
      %v3610 = vsub.f32 %v3411, %v3567
      %v3611 = vsub.f32 %v3411, %v3571
      %v3612 = vsub.f32 %v3416, %v3567
      %v3613 = vsub.f32 %v3416, %v3571
      %v3614 = vsub.f32 %v3421, %v3567
      %v3615 = vsub.f32 %v3421, %v3571
      %v3616 = vsub.f32 %v3426, %v3567
      %v3617 = vsub.f32 %v3426, %v3571
      %v3618 = vsub.f32 %v3431, %v3567
      %v3619 = vsub.f32 %v3431, %v3571
      %v3620 = vsub.f32 %v3436, %v3567
      %v3621 = vsub.f32 %v3436, %v3571
      %v3622 = vsub.f32 %v3441, %v3567
      %v3623 = vsub.f32 %v3441, %v3571
      %v3624 = vsub.f32 %v3446, %v3567
      %v3625 = vsub.f32 %v3446, %v3571
      %v3626 = vsub.f32 %v3451, %v3567
      %v3627 = vsub.f32 %v3451, %v3571
      %v3628 = vsub.f32 %v3456, %v3567
      %v3629 = vsub.f32 %v3456, %v3571
      %v3630 = vsub.f32 %v3461, %v3567
      %v3631 = vsub.f32 %v3461, %v3571
      %v3632 = vsub.f32 %v3466, %v3567
      %v3633 = vsub.f32 %v3466, %v3571
      %v3634 = vsub.f32 %v3471, %v3567
      %v3635 = vsub.f32 %v3471, %v3571
      %v3636 = vsub.f32 %v3476, %v3567
      %v3637 = vsub.f32 %v3476, %v3571
      %v3638 = vsub.f32 %v3481, %v3567
      %v3639 = vsub.f32 %v3481, %v3571
      %v3640 = vsub.f32 %v3486, %v3567
      %v3641 = vsub.f32 %v3486, %v3571
      %v3642 = vsub.f32 %v3491, %v3567
      %v3643 = vsub.f32 %v3491, %v3571
      %v3644 = vsub.f32 %v3496, %v3567
      %v3645 = vsub.f32 %v3496, %v3571
      %v3646 = vsub.f32 %v3501, %v3567
      %v3647 = vsub.f32 %v3501, %v3571
      %v3648 = vsub.f32 %v3506, %v3567
      %v3649 = vsub.f32 %v3506, %v3571
      %v3650 = vsub.f32 %v3511, %v3567
      %v3651 = vsub.f32 %v3511, %v3571
      %v3652 = vsub.f32 %v3516, %v3567
      %v3653 = vsub.f32 %v3516, %v3571
      %v3654 = vsub.f32 %v3521, %v3567
      %v3655 = vsub.f32 %v3521, %v3571
      %v3656 = vsub.f32 %v3526, %v3567
      %v3657 = vsub.f32 %v3526, %v3571
      %v3658 = vsub.f32 %v3531, %v3567
      %v3659 = vsub.f32 %v3531, %v3571
      %v3660 = vsub.f32 %v3536, %v3567
      %v3661 = vsub.f32 %v3536, %v3571
      %v3662 = vsub.f32 %v3541, %v3567
      %v3663 = vsub.f32 %v3541, %v3571
      %v3664 = vsub.f32 %v3546, %v3567
      %v3665 = vsub.f32 %v3546, %v3571
      %v3666 = vsub.f32 %v3551, %v3567
      %v3667 = vsub.f32 %v3551, %v3571
      %v3668 = vsub.f32 %v3556, %v3567
      %v3669 = vsub.f32 %v3556, %v3571
      %v3670 = vsub.f32 %v3561, %v3567
      %v3671 = vsub.f32 %v3561, %v3571
      %v3672 = vand.u32 2147483647, %v3574
      %v3673 = vand.u32 2147483647, %v3575
      %v3674 = vand.u32 2147483647, %v3576
      %v3675 = vand.u32 2147483647, %v3577
      %v3676 = vand.u32 2147483647, %v3578
      %v3677 = vand.u32 2147483647, %v3579
      %v3678 = vand.u32 2147483647, %v3580
      %v3679 = vand.u32 2147483647, %v3581
      %v3680 = vand.u32 2147483647, %v3582
      %v3681 = vand.u32 2147483647, %v3583
      %v3682 = vand.u32 2147483647, %v3584
      %v3683 = vand.u32 2147483647, %v3585
      %v3684 = vand.u32 2147483647, %v3586
      %v3685 = vand.u32 2147483647, %v3587
      %v3686 = vand.u32 2147483647, %v3588
      %v3687 = vand.u32 2147483647, %v3589
      %v3688 = vand.u32 2147483647, %v3590
      %v3689 = vand.u32 2147483647, %v3591
      %v3690 = vand.u32 2147483647, %v3592
      %v3691 = vand.u32 2147483647, %v3593
      %v3692 = vand.u32 2147483647, %v3594
      %v3693 = vand.u32 2147483647, %v3595
      %v3694 = vand.u32 2147483647, %v3596
      %v3695 = vand.u32 2147483647, %v3597
      %v3696 = vand.u32 2147483647, %v3598
      %v3697 = vand.u32 2147483647, %v3599
      %v3698 = vand.u32 2147483647, %v3600
      %v3699 = vand.u32 2147483647, %v3601
      %v3700 = vand.u32 2147483647, %v3602
      %v3701 = vand.u32 2147483647, %v3603
      %v3702 = vand.u32 2147483647, %v3604
      %v3703 = vand.u32 2147483647, %v3605
      %v3704 = vand.u32 2147483647, %v3606
      %v3705 = vand.u32 2147483647, %v3607
      %v3706 = vand.u32 2147483647, %v3608
      %v3707 = vand.u32 2147483647, %v3609
      %v3708 = vand.u32 2147483647, %v3610
      %v3709 = vand.u32 2147483647, %v3611
      %v3710 = vand.u32 2147483647, %v3612
      %v3711 = vand.u32 2147483647, %v3613
      %v3712 = vand.u32 2147483647, %v3614
      %v3713 = vand.u32 2147483647, %v3615
      %v3714 = vand.u32 2147483647, %v3616
      %v3715 = vand.u32 2147483647, %v3617
      %v3716 = vand.u32 2147483647, %v3618
      %v3717 = vand.u32 2147483647, %v3619
      %v3718 = vand.u32 2147483647, %v3620
      %v3719 = vand.u32 2147483647, %v3621
      %v3720 = vand.u32 2147483647, %v3622
      %v3721 = vand.u32 2147483647, %v3623
      %v3722 = vand.u32 2147483647, %v3624
      %v3723 = vand.u32 2147483647, %v3625
      %v3724 = vand.u32 2147483647, %v3626
      %v3725 = vand.u32 2147483647, %v3627
      %v3726 = vand.u32 2147483647, %v3628
      %v3727 = vand.u32 2147483647, %v3629
      %v3728 = vand.u32 2147483647, %v3630
      %v3729 = vand.u32 2147483647, %v3631
      %v3730 = vand.u32 2147483647, %v3632
      %v3731 = vand.u32 2147483647, %v3633
      %v3732 = vand.u32 2147483647, %v3634
      %v3733 = vand.u32 2147483647, %v3635
      %v3734 = vand.u32 2147483647, %v3636
      %v3735 = vand.u32 2147483647, %v3637
      %v3736 = vand.u32 2147483647, %v3638
      %v3737 = vand.u32 2147483647, %v3639
      %v3738 = vand.u32 2147483647, %v3640
      %v3739 = vand.u32 2147483647, %v3641
      %v3740 = vand.u32 2147483647, %v3642
      %v3741 = vand.u32 2147483647, %v3643
      %v3742 = vand.u32 2147483647, %v3644
      %v3743 = vand.u32 2147483647, %v3645
      %v3744 = vand.u32 2147483647, %v3646
      %v3745 = vand.u32 2147483647, %v3647
      %v3746 = vand.u32 2147483647, %v3648
      %v3747 = vand.u32 2147483647, %v3649
      %v3748 = vand.u32 2147483647, %v3650
      %v3749 = vand.u32 2147483647, %v3651
      %v3750 = vand.u32 2147483647, %v3652
      %v3751 = vand.u32 2147483647, %v3653
      %v3752 = vand.u32 2147483647, %v3654
      %v3753 = vand.u32 2147483647, %v3655
      %v3754 = vand.u32 2147483647, %v3656
      %v3755 = vand.u32 2147483647, %v3657
      %v3756 = vand.u32 2147483647, %v3658
      %v3757 = vand.u32 2147483647, %v3659
      %v3758 = vand.u32 2147483647, %v3660
      %v3759 = vand.u32 2147483647, %v3661
      %v3760 = vand.u32 2147483647, %v3662
      %v3761 = vand.u32 2147483647, %v3663
      %v3762 = vand.u32 2147483647, %v3664
      %v3763 = vand.u32 2147483647, %v3665
      %v3764 = vand.u32 2147483647, %v3666
      %v3765 = vand.u32 2147483647, %v3667
      %v3766 = vand.u32 2147483647, %v3668
      %v3767 = vand.u32 2147483647, %v3669
      %v3768 = vand.u32 2147483647, %v3670
      %v3769 = vand.u32 2147483647, %v3671
      %v3770 = vsub.f32 1.0, %v3672
      %v3771 = vsub.f32 1.0, %v3673
      %v3772 = vsub.f32 1.0, %v3674
      %v3773 = vsub.f32 1.0, %v3675
      %v3774 = vsub.f32 1.0, %v3676
      %v3775 = vsub.f32 1.0, %v3677
      %v3776 = vsub.f32 1.0, %v3678
      %v3777 = vsub.f32 1.0, %v3679
      %v3778 = vsub.f32 1.0, %v3680
      %v3779 = vsub.f32 1.0, %v3681
      %v3780 = vsub.f32 1.0, %v3682
      %v3781 = vsub.f32 1.0, %v3683
      %v3782 = vsub.f32 1.0, %v3684
      %v3783 = vsub.f32 1.0, %v3685
      %v3784 = vsub.f32 1.0, %v3686
      %v3785 = vsub.f32 1.0, %v3687
      %v3786 = vsub.f32 1.0, %v3688
      %v3787 = vsub.f32 1.0, %v3689
      %v3788 = vsub.f32 1.0, %v3690
      %v3789 = vsub.f32 1.0, %v3691
      %v3790 = vsub.f32 1.0, %v3692
      %v3791 = vsub.f32 1.0, %v3693
      %v3792 = vsub.f32 1.0, %v3694
      %v3793 = vsub.f32 1.0, %v3695
      %v3794 = vsub.f32 1.0, %v3696
      %v3795 = vsub.f32 1.0, %v3697
      %v3796 = vsub.f32 1.0, %v3698
      %v3797 = vsub.f32 1.0, %v3699
      %v3798 = vsub.f32 1.0, %v3700
      %v3799 = vsub.f32 1.0, %v3701
      %v3800 = vsub.f32 1.0, %v3702
      %v3801 = vsub.f32 1.0, %v3703
      %v3802 = vsub.f32 1.0, %v3704
      %v3803 = vsub.f32 1.0, %v3705
      %v3804 = vsub.f32 1.0, %v3706
      %v3805 = vsub.f32 1.0, %v3707
      %v3806 = vsub.f32 1.0, %v3708
      %v3807 = vsub.f32 1.0, %v3709
      %v3808 = vsub.f32 1.0, %v3710
      %v3809 = vsub.f32 1.0, %v3711
      %v3810 = vsub.f32 1.0, %v3712
      %v3811 = vsub.f32 1.0, %v3713
      %v3812 = vsub.f32 1.0, %v3714
      %v3813 = vsub.f32 1.0, %v3715
      %v3814 = vsub.f32 1.0, %v3716
      %v3815 = vsub.f32 1.0, %v3717
      %v3816 = vsub.f32 1.0, %v3718
      %v3817 = vsub.f32 1.0, %v3719
      %v3818 = vsub.f32 1.0, %v3720
      %v3819 = vsub.f32 1.0, %v3721
      %v3820 = vsub.f32 1.0, %v3722
      %v3821 = vsub.f32 1.0, %v3723
      %v3822 = vsub.f32 1.0, %v3724
      %v3823 = vsub.f32 1.0, %v3725
      %v3824 = vsub.f32 1.0, %v3726
      %v3825 = vsub.f32 1.0, %v3727
      %v3826 = vsub.f32 1.0, %v3728
      %v3827 = vsub.f32 1.0, %v3729
      %v3828 = vsub.f32 1.0, %v3730
      %v3829 = vsub.f32 1.0, %v3731
      %v3830 = vsub.f32 1.0, %v3732
      %v3831 = vsub.f32 1.0, %v3733
      %v3832 = vsub.f32 1.0, %v3734
      %v3833 = vsub.f32 1.0, %v3735
      %v3834 = vsub.f32 1.0, %v3736
      %v3835 = vsub.f32 1.0, %v3737
      %v3836 = vsub.f32 1.0, %v3738
      %v3837 = vsub.f32 1.0, %v3739
      %v3838 = vsub.f32 1.0, %v3740
      %v3839 = vsub.f32 1.0, %v3741
      %v3840 = vsub.f32 1.0, %v3742
      %v3841 = vsub.f32 1.0, %v3743
      %v3842 = vsub.f32 1.0, %v3744
      %v3843 = vsub.f32 1.0, %v3745
      %v3844 = vsub.f32 1.0, %v3746
      %v3845 = vsub.f32 1.0, %v3747
      %v3846 = vsub.f32 1.0, %v3748
      %v3847 = vsub.f32 1.0, %v3749
      %v3848 = vsub.f32 1.0, %v3750
      %v3849 = vsub.f32 1.0, %v3751
      %v3850 = vsub.f32 1.0, %v3752
      %v3851 = vsub.f32 1.0, %v3753
      %v3852 = vsub.f32 1.0, %v3754
      %v3853 = vsub.f32 1.0, %v3755
      %v3854 = vsub.f32 1.0, %v3756
      %v3855 = vsub.f32 1.0, %v3757
      %v3856 = vsub.f32 1.0, %v3758
      %v3857 = vsub.f32 1.0, %v3759
      %v3858 = vsub.f32 1.0, %v3760
      %v3859 = vsub.f32 1.0, %v3761
      %v3860 = vsub.f32 1.0, %v3762
      %v3861 = vsub.f32 1.0, %v3763
      %v3862 = vsub.f32 1.0, %v3764
      %v3863 = vsub.f32 1.0, %v3765
      %v3864 = vsub.f32 1.0, %v3766
      %v3865 = vsub.f32 1.0, %v3767
      %v3866 = vsub.f32 1.0, %v3768
      %v3867 = vsub.f32 1.0, %v3769
      %v3868 = vmax.f32 %v3770, 0.0
      %v3869 = vmax.f32 %v3771, 0.0
      %v3870 = vmax.f32 %v3772, 0.0
      %v3871 = vmax.f32 %v3773, 0.0
      %v3872 = vmax.f32 %v3774, 0.0
      %v3873 = vmax.f32 %v3775, 0.0
      %v3874 = vmax.f32 %v3776, 0.0
      %v3875 = vmax.f32 %v3777, 0.0
      %v3876 = vmax.f32 %v3778, 0.0
      %v3877 = vmax.f32 %v3779, 0.0
      %v3878 = vmax.f32 %v3780, 0.0
      %v3879 = vmax.f32 %v3781, 0.0
      %v3880 = vmax.f32 %v3782, 0.0
      %v3881 = vmax.f32 %v3783, 0.0
      %v3882 = vmax.f32 %v3784, 0.0
      %v3883 = vmax.f32 %v3785, 0.0
      %v3884 = vmax.f32 %v3786, 0.0
      %v3885 = vmax.f32 %v3787, 0.0
      %v3886 = vmax.f32 %v3788, 0.0
      %v3887 = vmax.f32 %v3789, 0.0
      %v3888 = vmax.f32 %v3790, 0.0
      %v3889 = vmax.f32 %v3791, 0.0
      %v3890 = vmax.f32 %v3792, 0.0
      %v3891 = vmax.f32 %v3793, 0.0
      %v3892 = vmax.f32 %v3794, 0.0
      %v3893 = vmax.f32 %v3795, 0.0
      %v3894 = vmax.f32 %v3796, 0.0
      %v3895 = vmax.f32 %v3797, 0.0
      %v3896 = vmax.f32 %v3798, 0.0
      %v3897 = vmax.f32 %v3799, 0.0
      %v3898 = vmax.f32 %v3800, 0.0
      %v3899 = vmax.f32 %v3801, 0.0
      %v3900 = vmax.f32 %v3802, 0.0
      %v3901 = vmax.f32 %v3803, 0.0
      %v3902 = vmax.f32 %v3804, 0.0
      %v3903 = vmax.f32 %v3805, 0.0
      %v3904 = vmax.f32 %v3806, 0.0
      %v3905 = vmax.f32 %v3807, 0.0
      %v3906 = vmax.f32 %v3808, 0.0
      %v3907 = vmax.f32 %v3809, 0.0
      %v3908 = vmax.f32 %v3810, 0.0
      %v3909 = vmax.f32 %v3811, 0.0
      %v3910 = vmax.f32 %v3812, 0.0
      %v3911 = vmax.f32 %v3813, 0.0
      %v3912 = vmax.f32 %v3814, 0.0
      %v3913 = vmax.f32 %v3815, 0.0
      %v3914 = vmax.f32 %v3816, 0.0
      %v3915 = vmax.f32 %v3817, 0.0
      %v3916 = vmax.f32 %v3818, 0.0
      %v3917 = vmax.f32 %v3819, 0.0
      %v3918 = vmax.f32 %v3820, 0.0
      %v3919 = vmax.f32 %v3821, 0.0
      %v3920 = vmax.f32 %v3822, 0.0
      %v3921 = vmax.f32 %v3823, 0.0
      %v3922 = vmax.f32 %v3824, 0.0
      %v3923 = vmax.f32 %v3825, 0.0
      %v3924 = vmax.f32 %v3826, 0.0
      %v3925 = vmax.f32 %v3827, 0.0
      %v3926 = vmax.f32 %v3828, 0.0
      %v3927 = vmax.f32 %v3829, 0.0
      %v3928 = vmax.f32 %v3830, 0.0
      %v3929 = vmax.f32 %v3831, 0.0
      %v3930 = vmax.f32 %v3832, 0.0
      %v3931 = vmax.f32 %v3833, 0.0
      %v3932 = vmax.f32 %v3834, 0.0
      %v3933 = vmax.f32 %v3835, 0.0
      %v3934 = vmax.f32 %v3836, 0.0
      %v3935 = vmax.f32 %v3837, 0.0
      %v3936 = vmax.f32 %v3838, 0.0
      %v3937 = vmax.f32 %v3839, 0.0
      %v3938 = vmax.f32 %v3840, 0.0
      %v3939 = vmax.f32 %v3841, 0.0
      %v3940 = vmax.f32 %v3842, 0.0
      %v3941 = vmax.f32 %v3843, 0.0
      %v3942 = vmax.f32 %v3844, 0.0
      %v3943 = vmax.f32 %v3845, 0.0
      %v3944 = vmax.f32 %v3846, 0.0
      %v3945 = vmax.f32 %v3847, 0.0
      %v3946 = vmax.f32 %v3848, 0.0
      %v3947 = vmax.f32 %v3849, 0.0
      %v3948 = vmax.f32 %v3850, 0.0
      %v3949 = vmax.f32 %v3851, 0.0
      %v3950 = vmax.f32 %v3852, 0.0
      %v3951 = vmax.f32 %v3853, 0.0
      %v3952 = vmax.f32 %v3854, 0.0
      %v3953 = vmax.f32 %v3855, 0.0
      %v3954 = vmax.f32 %v3856, 0.0
      %v3955 = vmax.f32 %v3857, 0.0
      %v3956 = vmax.f32 %v3858, 0.0
      %v3957 = vmax.f32 %v3859, 0.0
      %v3958 = vmax.f32 %v3860, 0.0
      %v3959 = vmax.f32 %v3861, 0.0
      %v3960 = vmax.f32 %v3862, 0.0
      %v3961 = vmax.f32 %v3863, 0.0
      %v3962 = vmax.f32 %v3864, 0.0
      %v3963 = vmax.f32 %v3865, 0.0
      %v3964 = vmax.f32 %v3866, 0.0
      %v3965 = vmax.f32 %v3867, 0.0
      %v3966 = vsel %vm3171, 1, 0
      %v3967 = vsel %vm3172, 1, 0
      %v3968 = vsel %vm3173, 1, 0
      %v3969 = vsel %vm3174, 1, 0
      %v3970 = vsel %vm3175, 1, 0
      %v3971 = vsel %vm3176, 1, 0
      %v3972 = vsel %vm3177, 1, 0
      %v3973 = vsel %vm3178, 1, 0
      %v3974 = vsel %vm3179, 1, 0
      %v3975 = vsel %vm3180, 1, 0
      %v3976 = vsel %vm3181, 1, 0
      %v3977 = vsel %vm3182, 1, 0
      %v3978 = vsel %vm3183, 1, 0
      %v3979 = vsel %vm3184, 1, 0
      %v3980 = vsel %vm3185, 1, 0
      %v3981 = vsel %vm3186, 1, 0
      %v3982 = vsel %vm3187, 1, 0
      %v3983 = vsel %vm3188, 1, 0
      %v3984 = vsel %vm3189, 1, 0
      %v3985 = vsel %vm3190, 1, 0
      %v3986 = vsel %vm3191, 1, 0
      %v3987 = vsel %vm3192, 1, 0
      %v3988 = vsel %vm3193, 1, 0
      %v3989 = vsel %vm3194, 1, 0
      %v3990 = vsel %vm3195, 1, 0
      %v3991 = vsel %vm3196, 1, 0
      %v3992 = vsel %vm3197, 1, 0
      %v3993 = vsel %vm3198, 1, 0
      %v3994 = vsel %vm3199, 1, 0
      %v3995 = vsel %vm3200, 1, 0
      %v3996 = vsel %vm3201, 1, 0
      %v3997 = vsel %vm3202, 1, 0
      %v3998 = vsel %vm3203, 1, 0
      %v3999 = vsel %vm3204, 1, 0
      %v4000 = vsel %vm3205, 1, 0
      %v4001 = vsel %vm3206, 1, 0
      %v4002 = vsel %vm3207, 1, 0
      %v4003 = vsel %vm3208, 1, 0
      %v4004 = vsel %vm3209, 1, 0
      %v4005 = vsel %vm3210, 1, 0
      %v4006 = vsel %vm3211, 1, 0
      %v4007 = vsel %vm3212, 1, 0
      %v4008 = vsel %vm3213, 1, 0
      %v4009 = vsel %vm3214, 1, 0
      %v4010 = vsel %vm3215, 1, 0
      %v4011 = vsel %vm3216, 1, 0
      %v4012 = vsel %vm3217, 1, 0
      %v4013 = vsel %vm3218, 1, 0
      %v4014 = vsel %vm3219, 1, 0
      %4015 = vset.pattern.permute.xlu0 0
      %4016 = vperm.xlu0 %4015, %v3966
      %v4017 = vpop.permute.xlu0 %4016
      %4018 = vset.pattern.permute.xlu0 0
      %4019 = vperm.xlu0 %4018, %v3967
      %v4020 = vpop.permute.xlu0 %4019
      %4021 = vset.pattern.permute.xlu0 0
      %4022 = vperm.xlu0 %4021, %v3968
      %v4023 = vpop.permute.xlu0 %4022
      %4024 = vset.pattern.permute.xlu0 0
      %4025 = vperm.xlu0 %4024, %v3969
      %v4026 = vpop.permute.xlu0 %4025
      %4027 = vset.pattern.permute.xlu0 0
      %4028 = vperm.xlu0 %4027, %v3970
      %v4029 = vpop.permute.xlu0 %4028
      %4030 = vset.pattern.permute.xlu0 0
      %4031 = vperm.xlu0 %4030, %v3971
      %v4032 = vpop.permute.xlu0 %4031
      %4033 = vset.pattern.permute.xlu0 0
      %4034 = vperm.xlu0 %4033, %v3972
      %v4035 = vpop.permute.xlu0 %4034
      %4036 = vset.pattern.permute.xlu0 0
      %4037 = vperm.xlu0 %4036, %v3973
      %v4038 = vpop.permute.xlu0 %4037
      %4039 = vset.pattern.permute.xlu0 0
      %4040 = vperm.xlu0 %4039, %v3974
      %v4041 = vpop.permute.xlu0 %4040
      %4042 = vset.pattern.permute.xlu0 0
      %4043 = vperm.xlu0 %4042, %v3975
      %v4044 = vpop.permute.xlu0 %4043
      %4045 = vset.pattern.permute.xlu0 0
      %4046 = vperm.xlu0 %4045, %v3976
      %v4047 = vpop.permute.xlu0 %4046
      %4048 = vset.pattern.permute.xlu0 0
      %4049 = vperm.xlu0 %4048, %v3977
      %v4050 = vpop.permute.xlu0 %4049
      %4051 = vset.pattern.permute.xlu0 0
      %4052 = vperm.xlu0 %4051, %v3978
      %v4053 = vpop.permute.xlu0 %4052
      %4054 = vset.pattern.permute.xlu0 0
      %4055 = vperm.xlu0 %4054, %v3979
      %v4056 = vpop.permute.xlu0 %4055
      %4057 = vset.pattern.permute.xlu0 0
      %4058 = vperm.xlu0 %4057, %v3980
      %v4059 = vpop.permute.xlu0 %4058
      %4060 = vset.pattern.permute.xlu0 0
      %4061 = vperm.xlu0 %4060, %v3981
      %v4062 = vpop.permute.xlu0 %4061
      %4063 = vset.pattern.permute.xlu0 0
      %4064 = vperm.xlu0 %4063, %v3982
      %v4065 = vpop.permute.xlu0 %4064
      %4066 = vset.pattern.permute.xlu0 0
      %4067 = vperm.xlu0 %4066, %v3983
      %v4068 = vpop.permute.xlu0 %4067
      %4069 = vset.pattern.permute.xlu0 0
      %4070 = vperm.xlu0 %4069, %v3984
      %v4071 = vpop.permute.xlu0 %4070
      %4072 = vset.pattern.permute.xlu0 0
      %4073 = vperm.xlu0 %4072, %v3985
      %v4074 = vpop.permute.xlu0 %4073
      %4075 = vset.pattern.permute.xlu0 0
      %4076 = vperm.xlu0 %4075, %v3986
      %v4077 = vpop.permute.xlu0 %4076
      %4078 = vset.pattern.permute.xlu0 0
      %4079 = vperm.xlu0 %4078, %v3987
      %v4080 = vpop.permute.xlu0 %4079
      %4081 = vset.pattern.permute.xlu0 0
      %4082 = vperm.xlu0 %4081, %v3988
      %v4083 = vpop.permute.xlu0 %4082
      %4084 = vset.pattern.permute.xlu0 0
      %4085 = vperm.xlu0 %4084, %v3989
      %v4086 = vpop.permute.xlu0 %4085
      %4087 = vset.pattern.permute.xlu0 0
      %4088 = vperm.xlu0 %4087, %v3990
      %v4089 = vpop.permute.xlu0 %4088
      %4090 = vset.pattern.permute.xlu0 0
      %4091 = vperm.xlu0 %4090, %v3991
      %v4092 = vpop.permute.xlu0 %4091
      %4093 = vset.pattern.permute.xlu0 0
      %4094 = vperm.xlu0 %4093, %v3992
      %v4095 = vpop.permute.xlu0 %4094
      %4096 = vset.pattern.permute.xlu0 0
      %4097 = vperm.xlu0 %4096, %v3993
      %v4098 = vpop.permute.xlu0 %4097
      %4099 = vset.pattern.permute.xlu0 0
      %4100 = vperm.xlu0 %4099, %v3994
      %v4101 = vpop.permute.xlu0 %4100
      %4102 = vset.pattern.permute.xlu0 0
      %4103 = vperm.xlu0 %4102, %v3995
      %v4104 = vpop.permute.xlu0 %4103
      %4105 = vset.pattern.permute.xlu0 0
      %4106 = vperm.xlu0 %4105, %v3996
      %v4107 = vpop.permute.xlu0 %4106
      %4108 = vset.pattern.permute.xlu0 0
      %4109 = vperm.xlu0 %4108, %v3997
      %v4110 = vpop.permute.xlu0 %4109
      %4111 = vset.pattern.permute.xlu0 0
      %4112 = vperm.xlu0 %4111, %v3998
      %v4113 = vpop.permute.xlu0 %4112
      %4114 = vset.pattern.permute.xlu0 0
      %4115 = vperm.xlu0 %4114, %v3999
      %v4116 = vpop.permute.xlu0 %4115
      %4117 = vset.pattern.permute.xlu0 0
      %4118 = vperm.xlu0 %4117, %v4000
      %v4119 = vpop.permute.xlu0 %4118
      %4120 = vset.pattern.permute.xlu0 0
      %4121 = vperm.xlu0 %4120, %v4001
      %v4122 = vpop.permute.xlu0 %4121
      %4123 = vset.pattern.permute.xlu0 0
      %4124 = vperm.xlu0 %4123, %v4002
      %v4125 = vpop.permute.xlu0 %4124
      %4126 = vset.pattern.permute.xlu0 0
      %4127 = vperm.xlu0 %4126, %v4003
      %v4128 = vpop.permute.xlu0 %4127
      %4129 = vset.pattern.permute.xlu0 0
      %4130 = vperm.xlu0 %4129, %v4004
      %v4131 = vpop.permute.xlu0 %4130
      %4132 = vset.pattern.permute.xlu0 0
      %4133 = vperm.xlu0 %4132, %v4005
      %v4134 = vpop.permute.xlu0 %4133
      %4135 = vset.pattern.permute.xlu0 0
      %4136 = vperm.xlu0 %4135, %v4006
      %v4137 = vpop.permute.xlu0 %4136
      %4138 = vset.pattern.permute.xlu0 0
      %4139 = vperm.xlu0 %4138, %v4007
      %v4140 = vpop.permute.xlu0 %4139
      %4141 = vset.pattern.permute.xlu0 0
      %4142 = vperm.xlu0 %4141, %v4008
      %v4143 = vpop.permute.xlu0 %4142
      %4144 = vset.pattern.permute.xlu0 0
      %4145 = vperm.xlu0 %4144, %v4009
      %v4146 = vpop.permute.xlu0 %4145
      %4147 = vset.pattern.permute.xlu0 0
      %4148 = vperm.xlu0 %4147, %v4010
      %v4149 = vpop.permute.xlu0 %4148
      %4150 = vset.pattern.permute.xlu0 0
      %4151 = vperm.xlu0 %4150, %v4011
      %v4152 = vpop.permute.xlu0 %4151
      %4153 = vset.pattern.permute.xlu0 0
      %4154 = vperm.xlu0 %4153, %v4012
      %v4155 = vpop.permute.xlu0 %4154
      %4156 = vset.pattern.permute.xlu0 0
      %4157 = vperm.xlu0 %4156, %v4013
      %v4158 = vpop.permute.xlu0 %4157
      %4159 = vset.pattern.permute.xlu0 0
      %4160 = vperm.xlu0 %4159, %v4014
      %v4161 = vpop.permute.xlu0 %4160
      %vm4162 = vcmp.eq.s32.totalorder %v4017, 1
      %vm4163 = vcmp.eq.s32.totalorder %v4020, 1
      %vm4164 = vcmp.eq.s32.totalorder %v4023, 1
      %vm4165 = vcmp.eq.s32.totalorder %v4026, 1
      %vm4166 = vcmp.eq.s32.totalorder %v4029, 1
      %vm4167 = vcmp.eq.s32.totalorder %v4032, 1
      %vm4168 = vcmp.eq.s32.totalorder %v4035, 1
      %vm4169 = vcmp.eq.s32.totalorder %v4038, 1
      %vm4170 = vcmp.eq.s32.totalorder %v4041, 1
      %vm4171 = vcmp.eq.s32.totalorder %v4044, 1
      %vm4172 = vcmp.eq.s32.totalorder %v4047, 1
      %vm4173 = vcmp.eq.s32.totalorder %v4050, 1
      %vm4174 = vcmp.eq.s32.totalorder %v4053, 1
      %vm4175 = vcmp.eq.s32.totalorder %v4056, 1
      %vm4176 = vcmp.eq.s32.totalorder %v4059, 1
      %vm4177 = vcmp.eq.s32.totalorder %v4062, 1
      %vm4178 = vcmp.eq.s32.totalorder %v4065, 1
      %vm4179 = vcmp.eq.s32.totalorder %v4068, 1
      %vm4180 = vcmp.eq.s32.totalorder %v4071, 1
      %vm4181 = vcmp.eq.s32.totalorder %v4074, 1
      %vm4182 = vcmp.eq.s32.totalorder %v4077, 1
      %vm4183 = vcmp.eq.s32.totalorder %v4080, 1
      %vm4184 = vcmp.eq.s32.totalorder %v4083, 1
      %vm4185 = vcmp.eq.s32.totalorder %v4086, 1
      %vm4186 = vcmp.eq.s32.totalorder %v4089, 1
      %vm4187 = vcmp.eq.s32.totalorder %v4092, 1
      %vm4188 = vcmp.eq.s32.totalorder %v4095, 1
      %vm4189 = vcmp.eq.s32.totalorder %v4098, 1
      %vm4190 = vcmp.eq.s32.totalorder %v4101, 1
      %vm4191 = vcmp.eq.s32.totalorder %v4104, 1
      %vm4192 = vcmp.eq.s32.totalorder %v4107, 1
      %vm4193 = vcmp.eq.s32.totalorder %v4110, 1
      %vm4194 = vcmp.eq.s32.totalorder %v4113, 1
      %vm4195 = vcmp.eq.s32.totalorder %v4116, 1
      %vm4196 = vcmp.eq.s32.totalorder %v4119, 1
      %vm4197 = vcmp.eq.s32.totalorder %v4122, 1
      %vm4198 = vcmp.eq.s32.totalorder %v4125, 1
      %vm4199 = vcmp.eq.s32.totalorder %v4128, 1
      %vm4200 = vcmp.eq.s32.totalorder %v4131, 1
      %vm4201 = vcmp.eq.s32.totalorder %v4134, 1
      %vm4202 = vcmp.eq.s32.totalorder %v4137, 1
      %vm4203 = vcmp.eq.s32.totalorder %v4140, 1
      %vm4204 = vcmp.eq.s32.totalorder %v4143, 1
      %vm4205 = vcmp.eq.s32.totalorder %v4146, 1
      %vm4206 = vcmp.eq.s32.totalorder %v4149, 1
      %vm4207 = vcmp.eq.s32.totalorder %v4152, 1
      %vm4208 = vcmp.eq.s32.totalorder %v4155, 1
      %vm4209 = vcmp.eq.s32.totalorder %v4158, 1
      %vm4210 = vcmp.eq.s32.totalorder %v4161, 1
      %v4211 = vsel %vm4162, %v3868, 0.0
      %v4212 = vsel %vm4162, %v3869, 0.0
      %v4213 = vsel %vm4163, %v3870, 0.0
      %v4214 = vsel %vm4163, %v3871, 0.0
      %v4215 = vsel %vm4164, %v3872, 0.0
      %v4216 = vsel %vm4164, %v3873, 0.0
      %v4217 = vsel %vm4165, %v3874, 0.0
      %v4218 = vsel %vm4165, %v3875, 0.0
      %v4219 = vsel %vm4166, %v3876, 0.0
      %v4220 = vsel %vm4166, %v3877, 0.0
      %v4221 = vsel %vm4167, %v3878, 0.0
      %v4222 = vsel %vm4167, %v3879, 0.0
      %v4223 = vsel %vm4168, %v3880, 0.0
      %v4224 = vsel %vm4168, %v3881, 0.0
      %v4225 = vsel %vm4169, %v3882, 0.0
      %v4226 = vsel %vm4169, %v3883, 0.0
      %v4227 = vsel %vm4170, %v3884, 0.0
      %v4228 = vsel %vm4170, %v3885, 0.0
      %v4229 = vsel %vm4171, %v3886, 0.0
      %v4230 = vsel %vm4171, %v3887, 0.0
      %v4231 = vsel %vm4172, %v3888, 0.0
      %v4232 = vsel %vm4172, %v3889, 0.0
      %v4233 = vsel %vm4173, %v3890, 0.0
      %v4234 = vsel %vm4173, %v3891, 0.0
      %v4235 = vsel %vm4174, %v3892, 0.0
      %v4236 = vsel %vm4174, %v3893, 0.0
      %v4237 = vsel %vm4175, %v3894, 0.0
      %v4238 = vsel %vm4175, %v3895, 0.0
      %v4239 = vsel %vm4176, %v3896, 0.0
      %v4240 = vsel %vm4176, %v3897, 0.0
      %v4241 = vsel %vm4177, %v3898, 0.0
      %v4242 = vsel %vm4177, %v3899, 0.0
      %v4243 = vsel %vm4178, %v3900, 0.0
      %v4244 = vsel %vm4178, %v3901, 0.0
      %v4245 = vsel %vm4179, %v3902, 0.0
      %v4246 = vsel %vm4179, %v3903, 0.0
      %v4247 = vsel %vm4180, %v3904, 0.0
      %v4248 = vsel %vm4180, %v3905, 0.0
      %v4249 = vsel %vm4181, %v3906, 0.0
      %v4250 = vsel %vm4181, %v3907, 0.0
      %v4251 = vsel %vm4182, %v3908, 0.0
      %v4252 = vsel %vm4182, %v3909, 0.0
      %v4253 = vsel %vm4183, %v3910, 0.0
      %v4254 = vsel %vm4183, %v3911, 0.0
      %v4255 = vsel %vm4184, %v3912, 0.0
      %v4256 = vsel %vm4184, %v3913, 0.0
      %v4257 = vsel %vm4185, %v3914, 0.0
      %v4258 = vsel %vm4185, %v3915, 0.0
      %v4259 = vsel %vm4186, %v3916, 0.0
      %v4260 = vsel %vm4186, %v3917, 0.0
      %v4261 = vsel %vm4187, %v3918, 0.0
      %v4262 = vsel %vm4187, %v3919, 0.0
      %v4263 = vsel %vm4188, %v3920, 0.0
      %v4264 = vsel %vm4188, %v3921, 0.0
      %v4265 = vsel %vm4189, %v3922, 0.0
      %v4266 = vsel %vm4189, %v3923, 0.0
      %v4267 = vsel %vm4190, %v3924, 0.0
      %v4268 = vsel %vm4190, %v3925, 0.0
      %v4269 = vsel %vm4191, %v3926, 0.0
      %v4270 = vsel %vm4191, %v3927, 0.0
      %v4271 = vsel %vm4192, %v3928, 0.0
      %v4272 = vsel %vm4192, %v3929, 0.0
      %v4273 = vsel %vm4193, %v3930, 0.0
      %v4274 = vsel %vm4193, %v3931, 0.0
      %v4275 = vsel %vm4194, %v3932, 0.0
      %v4276 = vsel %vm4194, %v3933, 0.0
      %v4277 = vsel %vm4195, %v3934, 0.0
      %v4278 = vsel %vm4195, %v3935, 0.0
      %v4279 = vsel %vm4196, %v3936, 0.0
      %v4280 = vsel %vm4196, %v3937, 0.0
      %v4281 = vsel %vm4197, %v3938, 0.0
      %v4282 = vsel %vm4197, %v3939, 0.0
      %v4283 = vsel %vm4198, %v3940, 0.0
      %v4284 = vsel %vm4198, %v3941, 0.0
      %v4285 = vsel %vm4199, %v3942, 0.0
      %v4286 = vsel %vm4199, %v3943, 0.0
      %v4287 = vsel %vm4200, %v3944, 0.0
      %v4288 = vsel %vm4200, %v3945, 0.0
      %v4289 = vsel %vm4201, %v3946, 0.0
      %v4290 = vsel %vm4201, %v3947, 0.0
      %v4291 = vsel %vm4202, %v3948, 0.0
      %v4292 = vsel %vm4202, %v3949, 0.0
      %v4293 = vsel %vm4203, %v3950, 0.0
      %v4294 = vsel %vm4203, %v3951, 0.0
      %v4295 = vsel %vm4204, %v3952, 0.0
      %v4296 = vsel %vm4204, %v3953, 0.0
      %v4297 = vsel %vm4205, %v3954, 0.0
      %v4298 = vsel %vm4205, %v3955, 0.0
      %v4299 = vsel %vm4206, %v3956, 0.0
      %v4300 = vsel %vm4206, %v3957, 0.0
      %v4301 = vsel %vm4207, %v3958, 0.0
      %v4302 = vsel %vm4207, %v3959, 0.0
      %v4303 = vsel %vm4208, %v3960, 0.0
      %v4304 = vsel %vm4208, %v3961, 0.0
      %v4305 = vsel %vm4209, %v3962, 0.0
      %v4306 = vsel %vm4209, %v3963, 0.0
      %v4307 = vsel %vm4210, %v3964, 0.0
      %v4308 = vsel %vm4210, %v3965, 0.0
      %s4309 = scalar_lea.vmem %s259, 392
      %v4310 = vld [vmem:[%s4309] sm:$0xff]
      %v4311 = vld [vmem:[%s4309 + $0x8] sm:$0xff]
      %v4312 = vld [vmem:[%s4309 + $0x10] sm:$0xff]
      %v4313 = vld [vmem:[%s4309 + $0x18] sm:$0xff]
      %v4314 = vld [vmem:[%s4309 + $0x20] sm:$0xff]
      %v4315 = vld [vmem:[%s4309 + $0x28] sm:$0xff]
      %v4316 = vld [vmem:[%s4309 + $0x30] sm:$0xff]
      %v4317 = vld [vmem:[%s4309 + $0x38] sm:$0xff]
      %v4318 = vld [vmem:[%s4309 + $0x40] sm:$0xff]
      %v4319 = vld [vmem:[%s4309 + $0x48] sm:$0xff]
      %v4320 = vld [vmem:[%s4309 + $0x50] sm:$0xff]
      %v4321 = vld [vmem:[%s4309 + $0x58] sm:$0xff]
      %v4322 = vld [vmem:[%s4309 + $0x60] sm:$0xff]
      %v4323 = vld [vmem:[%s4309 + $0x68] sm:$0xff]
      %v4324 = vld [vmem:[%s4309 + $0x70] sm:$0xff]
      %v4325 = vld [vmem:[%s4309 + $0x78] sm:$0xff]
      %v4326 = vld [vmem:[%s4309 + $0x80] sm:$0xff]
      %v4327 = vld [vmem:[%s4309 + $0x88] sm:$0xff]
      %v4328 = vld [vmem:[%s4309 + $0x90] sm:$0xff]
      %v4329 = vld [vmem:[%s4309 + $0x98] sm:$0xff]
      %v4330 = vld [vmem:[%s4309 + $0xa0] sm:$0xff]
      %v4331 = vld [vmem:[%s4309 + $0xa8] sm:$0xff]
      %v4332 = vld [vmem:[%s4309 + $0xb0] sm:$0xff]
      %v4333 = vld [vmem:[%s4309 + $0xb8] sm:$0xff]
      %v4334 = vld [vmem:[%s4309 + $0xc0] sm:$0xff]
      %v4335 = vld [vmem:[%s4309 + $0xc8] sm:$0xff]
      %v4336 = vld [vmem:[%s4309 + $0xd0] sm:$0xff]
      %v4337 = vld [vmem:[%s4309 + $0xd8] sm:$0xff]
      %v4338 = vld [vmem:[%s4309 + $0xe0] sm:$0xff]
      %v4339 = vld [vmem:[%s4309 + $0xe8] sm:$0xff]
      %v4340 = vld [vmem:[%s4309 + $0xf0] sm:$0xff]
      %v4341 = vld [vmem:[%s4309 + $0xf8] sm:$0xff]
      %v4342 = vld [vmem:[%s4309 + $0x100] sm:$0xff]
      %v4343 = vld [vmem:[%s4309 + $0x108] sm:$0xff]
      %v4344 = vld [vmem:[%s4309 + $0x110] sm:$0xff]
      %v4345 = vld [vmem:[%s4309 + $0x118] sm:$0xff]
      %v4346 = vld [vmem:[%s4309 + $0x120] sm:$0xff]
      %v4347 = vld [vmem:[%s4309 + $0x128] sm:$0xff]
      %v4348 = vld [vmem:[%s4309 + $0x130] sm:$0xff]
      %v4349 = vld [vmem:[%s4309 + $0x138] sm:$0xff]
      %v4350 = vld [vmem:[%s4309 + $0x140] sm:$0xff]
      %v4351 = vld [vmem:[%s4309 + $0x148] sm:$0xff]
      %v4352 = vld [vmem:[%s4309 + $0x150] sm:$0xff]
      %v4353 = vld [vmem:[%s4309 + $0x158] sm:$0xff]
      %v4354 = vld [vmem:[%s4309 + $0x160] sm:$0xff]
      %v4355 = vld [vmem:[%s4309 + $0x168] sm:$0xff]
      %v4356 = vld [vmem:[%s4309 + $0x170] sm:$0xff]
      %v4357 = vld [vmem:[%s4309 + $0x178] sm:$0xff]
      %v4358 = vld [vmem:[%s4309 + $0x180] sm:$0xff]
      %vm4359 = vcmp.ge.f32.partialorder %v4310, -1.0
      %vm4360 = vcmp.ge.f32.partialorder %v4311, -1.0
      %vm4361 = vcmp.ge.f32.partialorder %v4312, -1.0
      %vm4362 = vcmp.ge.f32.partialorder %v4313, -1.0
      %vm4363 = vcmp.ge.f32.partialorder %v4314, -1.0
      %vm4364 = vcmp.ge.f32.partialorder %v4315, -1.0
      %vm4365 = vcmp.ge.f32.partialorder %v4316, -1.0
      %vm4366 = vcmp.ge.f32.partialorder %v4317, -1.0
      %vm4367 = vcmp.ge.f32.partialorder %v4318, -1.0
      %vm4368 = vcmp.ge.f32.partialorder %v4319, -1.0
      %vm4369 = vcmp.ge.f32.partialorder %v4320, -1.0
      %vm4370 = vcmp.ge.f32.partialorder %v4321, -1.0
      %vm4371 = vcmp.ge.f32.partialorder %v4322, -1.0
      %vm4372 = vcmp.ge.f32.partialorder %v4323, -1.0
      %vm4373 = vcmp.ge.f32.partialorder %v4324, -1.0
      %vm4374 = vcmp.ge.f32.partialorder %v4325, -1.0
      %vm4375 = vcmp.ge.f32.partialorder %v4326, -1.0
      %vm4376 = vcmp.ge.f32.partialorder %v4327, -1.0
      %vm4377 = vcmp.ge.f32.partialorder %v4328, -1.0
      %vm4378 = vcmp.ge.f32.partialorder %v4329, -1.0
      %vm4379 = vcmp.ge.f32.partialorder %v4330, -1.0
      %vm4380 = vcmp.ge.f32.partialorder %v4331, -1.0
      %vm4381 = vcmp.ge.f32.partialorder %v4332, -1.0
      %vm4382 = vcmp.ge.f32.partialorder %v4333, -1.0
      %vm4383 = vcmp.ge.f32.partialorder %v4334, -1.0
      %vm4384 = vcmp.ge.f32.partialorder %v4335, -1.0
      %vm4385 = vcmp.ge.f32.partialorder %v4336, -1.0
      %vm4386 = vcmp.ge.f32.partialorder %v4337, -1.0
      %vm4387 = vcmp.ge.f32.partialorder %v4338, -1.0
      %vm4388 = vcmp.ge.f32.partialorder %v4339, -1.0
      %vm4389 = vcmp.ge.f32.partialorder %v4340, -1.0
      %vm4390 = vcmp.ge.f32.partialorder %v4341, -1.0
      %vm4391 = vcmp.ge.f32.partialorder %v4342, -1.0
      %vm4392 = vcmp.ge.f32.partialorder %v4343, -1.0
      %vm4393 = vcmp.ge.f32.partialorder %v4344, -1.0
      %vm4394 = vcmp.ge.f32.partialorder %v4345, -1.0
      %vm4395 = vcmp.ge.f32.partialorder %v4346, -1.0
      %vm4396 = vcmp.ge.f32.partialorder %v4347, -1.0
      %vm4397 = vcmp.ge.f32.partialorder %v4348, -1.0
      %vm4398 = vcmp.ge.f32.partialorder %v4349, -1.0
      %vm4399 = vcmp.ge.f32.partialorder %v4350, -1.0
      %vm4400 = vcmp.ge.f32.partialorder %v4351, -1.0
      %vm4401 = vcmp.ge.f32.partialorder %v4352, -1.0
      %vm4402 = vcmp.ge.f32.partialorder %v4353, -1.0
      %vm4403 = vcmp.ge.f32.partialorder %v4354, -1.0
      %vm4404 = vcmp.ge.f32.partialorder %v4355, -1.0
      %vm4405 = vcmp.ge.f32.partialorder %v4356, -1.0
      %vm4406 = vcmp.ge.f32.partialorder %v4357, -1.0
      %vm4407 = vcmp.ge.f32.partialorder %v4358, -1.0
      %vm4408 = vcmp.le.f32.partialorder %v4310, 16.0
      %vm4409 = vcmp.le.f32.partialorder %v4311, 16.0
      %vm4410 = vcmp.le.f32.partialorder %v4312, 16.0
      %vm4411 = vcmp.le.f32.partialorder %v4313, 16.0
      %vm4412 = vcmp.le.f32.partialorder %v4314, 16.0
      %vm4413 = vcmp.le.f32.partialorder %v4315, 16.0
      %vm4414 = vcmp.le.f32.partialorder %v4316, 16.0
      %vm4415 = vcmp.le.f32.partialorder %v4317, 16.0
      %vm4416 = vcmp.le.f32.partialorder %v4318, 16.0
      %vm4417 = vcmp.le.f32.partialorder %v4319, 16.0
      %vm4418 = vcmp.le.f32.partialorder %v4320, 16.0
      %vm4419 = vcmp.le.f32.partialorder %v4321, 16.0
      %vm4420 = vcmp.le.f32.partialorder %v4322, 16.0
      %vm4421 = vcmp.le.f32.partialorder %v4323, 16.0
      %vm4422 = vcmp.le.f32.partialorder %v4324, 16.0
      %vm4423 = vcmp.le.f32.partialorder %v4325, 16.0
      %vm4424 = vcmp.le.f32.partialorder %v4326, 16.0
      %vm4425 = vcmp.le.f32.partialorder %v4327, 16.0
      %vm4426 = vcmp.le.f32.partialorder %v4328, 16.0
      %vm4427 = vcmp.le.f32.partialorder %v4329, 16.0
      %vm4428 = vcmp.le.f32.partialorder %v4330, 16.0
      %vm4429 = vcmp.le.f32.partialorder %v4331, 16.0
      %vm4430 = vcmp.le.f32.partialorder %v4332, 16.0
      %vm4431 = vcmp.le.f32.partialorder %v4333, 16.0
      %vm4432 = vcmp.le.f32.partialorder %v4334, 16.0
      %vm4433 = vcmp.le.f32.partialorder %v4335, 16.0
      %vm4434 = vcmp.le.f32.partialorder %v4336, 16.0
      %vm4435 = vcmp.le.f32.partialorder %v4337, 16.0
      %vm4436 = vcmp.le.f32.partialorder %v4338, 16.0
      %vm4437 = vcmp.le.f32.partialorder %v4339, 16.0
      %vm4438 = vcmp.le.f32.partialorder %v4340, 16.0
      %vm4439 = vcmp.le.f32.partialorder %v4341, 16.0
      %vm4440 = vcmp.le.f32.partialorder %v4342, 16.0
      %vm4441 = vcmp.le.f32.partialorder %v4343, 16.0
      %vm4442 = vcmp.le.f32.partialorder %v4344, 16.0
      %vm4443 = vcmp.le.f32.partialorder %v4345, 16.0
      %vm4444 = vcmp.le.f32.partialorder %v4346, 16.0
      %vm4445 = vcmp.le.f32.partialorder %v4347, 16.0
      %vm4446 = vcmp.le.f32.partialorder %v4348, 16.0
      %vm4447 = vcmp.le.f32.partialorder %v4349, 16.0
      %vm4448 = vcmp.le.f32.partialorder %v4350, 16.0
      %vm4449 = vcmp.le.f32.partialorder %v4351, 16.0
      %vm4450 = vcmp.le.f32.partialorder %v4352, 16.0
      %vm4451 = vcmp.le.f32.partialorder %v4353, 16.0
      %vm4452 = vcmp.le.f32.partialorder %v4354, 16.0
      %vm4453 = vcmp.le.f32.partialorder %v4355, 16.0
      %vm4454 = vcmp.le.f32.partialorder %v4356, 16.0
      %vm4455 = vcmp.le.f32.partialorder %v4357, 16.0
      %vm4456 = vcmp.le.f32.partialorder %v4358, 16.0
      %vm4457 = vmand %vm4359, %vm4408
      %vm4458 = vmand %vm4360, %vm4409
      %vm4459 = vmand %vm4361, %vm4410
      %vm4460 = vmand %vm4362, %vm4411
      %vm4461 = vmand %vm4363, %vm4412
      %vm4462 = vmand %vm4364, %vm4413
      %vm4463 = vmand %vm4365, %vm4414
      %vm4464 = vmand %vm4366, %vm4415
      %vm4465 = vmand %vm4367, %vm4416
      %vm4466 = vmand %vm4368, %vm4417
      %vm4467 = vmand %vm4369, %vm4418
      %vm4468 = vmand %vm4370, %vm4419
      %vm4469 = vmand %vm4371, %vm4420
      %vm4470 = vmand %vm4372, %vm4421
      %vm4471 = vmand %vm4373, %vm4422
      %vm4472 = vmand %vm4374, %vm4423
      %vm4473 = vmand %vm4375, %vm4424
      %vm4474 = vmand %vm4376, %vm4425
      %vm4475 = vmand %vm4377, %vm4426
      %vm4476 = vmand %vm4378, %vm4427
      %vm4477 = vmand %vm4379, %vm4428
      %vm4478 = vmand %vm4380, %vm4429
      %vm4479 = vmand %vm4381, %vm4430
      %vm4480 = vmand %vm4382, %vm4431
      %vm4481 = vmand %vm4383, %vm4432
      %vm4482 = vmand %vm4384, %vm4433
      %vm4483 = vmand %vm4385, %vm4434
      %vm4484 = vmand %vm4386, %vm4435
      %vm4485 = vmand %vm4387, %vm4436
      %vm4486 = vmand %vm4388, %vm4437
      %vm4487 = vmand %vm4389, %vm4438
      %vm4488 = vmand %vm4390, %vm4439
      %vm4489 = vmand %vm4391, %vm4440
      %vm4490 = vmand %vm4392, %vm4441
      %vm4491 = vmand %vm4393, %vm4442
      %vm4492 = vmand %vm4394, %vm4443
      %vm4493 = vmand %vm4395, %vm4444
      %vm4494 = vmand %vm4396, %vm4445
      %vm4495 = vmand %vm4397, %vm4446
      %vm4496 = vmand %vm4398, %vm4447
      %vm4497 = vmand %vm4399, %vm4448
      %vm4498 = vmand %vm4400, %vm4449
      %vm4499 = vmand %vm4401, %vm4450
      %vm4500 = vmand %vm4402, %vm4451
      %vm4501 = vmand %vm4403, %vm4452
      %vm4502 = vmand %vm4404, %vm4453
      %vm4503 = vmand %vm4405, %vm4454
      %vm4504 = vmand %vm4406, %vm4455
      %vm4505 = vmand %vm4407, %vm4456
      %v4506 = vmax.f32 %v4310, 0.0
      %v4507 = vmax.f32 %v4311, 0.0
      %v4508 = vmax.f32 %v4312, 0.0
      %v4509 = vmax.f32 %v4313, 0.0
      %v4510 = vmax.f32 %v4314, 0.0
      %v4511 = vmax.f32 %v4315, 0.0
      %v4512 = vmax.f32 %v4316, 0.0
      %v4513 = vmax.f32 %v4317, 0.0
      %v4514 = vmax.f32 %v4318, 0.0
      %v4515 = vmax.f32 %v4319, 0.0
      %v4516 = vmax.f32 %v4320, 0.0
      %v4517 = vmax.f32 %v4321, 0.0
      %v4518 = vmax.f32 %v4322, 0.0
      %v4519 = vmax.f32 %v4323, 0.0
      %v4520 = vmax.f32 %v4324, 0.0
      %v4521 = vmax.f32 %v4325, 0.0
      %v4522 = vmax.f32 %v4326, 0.0
      %v4523 = vmax.f32 %v4327, 0.0
      %v4524 = vmax.f32 %v4328, 0.0
      %v4525 = vmax.f32 %v4329, 0.0
      %v4526 = vmax.f32 %v4330, 0.0
      %v4527 = vmax.f32 %v4331, 0.0
      %v4528 = vmax.f32 %v4332, 0.0
      %v4529 = vmax.f32 %v4333, 0.0
      %v4530 = vmax.f32 %v4334, 0.0
      %v4531 = vmax.f32 %v4335, 0.0
      %v4532 = vmax.f32 %v4336, 0.0
      %v4533 = vmax.f32 %v4337, 0.0
      %v4534 = vmax.f32 %v4338, 0.0
      %v4535 = vmax.f32 %v4339, 0.0
      %v4536 = vmax.f32 %v4340, 0.0
      %v4537 = vmax.f32 %v4341, 0.0
      %v4538 = vmax.f32 %v4342, 0.0
      %v4539 = vmax.f32 %v4343, 0.0
      %v4540 = vmax.f32 %v4344, 0.0
      %v4541 = vmax.f32 %v4345, 0.0
      %v4542 = vmax.f32 %v4346, 0.0
      %v4543 = vmax.f32 %v4347, 0.0
      %v4544 = vmax.f32 %v4348, 0.0
      %v4545 = vmax.f32 %v4349, 0.0
      %v4546 = vmax.f32 %v4350, 0.0
      %v4547 = vmax.f32 %v4351, 0.0
      %v4548 = vmax.f32 %v4352, 0.0
      %v4549 = vmax.f32 %v4353, 0.0
      %v4550 = vmax.f32 %v4354, 0.0
      %v4551 = vmax.f32 %v4355, 0.0
      %v4552 = vmax.f32 %v4356, 0.0
      %v4553 = vmax.f32 %v4357, 0.0
      %v4554 = vmax.f32 %v4358, 0.0
      %v4555 = vmin.f32 %v4506, 15.0
      %v4556 = vmin.f32 %v4507, 15.0
      %v4557 = vmin.f32 %v4508, 15.0
      %v4558 = vmin.f32 %v4509, 15.0
      %v4559 = vmin.f32 %v4510, 15.0
      %v4560 = vmin.f32 %v4511, 15.0
      %v4561 = vmin.f32 %v4512, 15.0
      %v4562 = vmin.f32 %v4513, 15.0
      %v4563 = vmin.f32 %v4514, 15.0
      %v4564 = vmin.f32 %v4515, 15.0
      %v4565 = vmin.f32 %v4516, 15.0
      %v4566 = vmin.f32 %v4517, 15.0
      %v4567 = vmin.f32 %v4518, 15.0
      %v4568 = vmin.f32 %v4519, 15.0
      %v4569 = vmin.f32 %v4520, 15.0
      %v4570 = vmin.f32 %v4521, 15.0
      %v4571 = vmin.f32 %v4522, 15.0
      %v4572 = vmin.f32 %v4523, 15.0
      %v4573 = vmin.f32 %v4524, 15.0
      %v4574 = vmin.f32 %v4525, 15.0
      %v4575 = vmin.f32 %v4526, 15.0
      %v4576 = vmin.f32 %v4527, 15.0
      %v4577 = vmin.f32 %v4528, 15.0
      %v4578 = vmin.f32 %v4529, 15.0
      %v4579 = vmin.f32 %v4530, 15.0
      %v4580 = vmin.f32 %v4531, 15.0
      %v4581 = vmin.f32 %v4532, 15.0
      %v4582 = vmin.f32 %v4533, 15.0
      %v4583 = vmin.f32 %v4534, 15.0
      %v4584 = vmin.f32 %v4535, 15.0
      %v4585 = vmin.f32 %v4536, 15.0
      %v4586 = vmin.f32 %v4537, 15.0
      %v4587 = vmin.f32 %v4538, 15.0
      %v4588 = vmin.f32 %v4539, 15.0
      %v4589 = vmin.f32 %v4540, 15.0
      %v4590 = vmin.f32 %v4541, 15.0
      %v4591 = vmin.f32 %v4542, 15.0
      %v4592 = vmin.f32 %v4543, 15.0
      %v4593 = vmin.f32 %v4544, 15.0
      %v4594 = vmin.f32 %v4545, 15.0
      %v4595 = vmin.f32 %v4546, 15.0
      %v4596 = vmin.f32 %v4547, 15.0
      %v4597 = vmin.f32 %v4548, 15.0
      %v4598 = vmin.f32 %v4549, 15.0
      %v4599 = vmin.f32 %v4550, 15.0
      %v4600 = vmin.f32 %v4551, 15.0
      %v4601 = vmin.f32 %v4552, 15.0
      %v4602 = vmin.f32 %v4553, 15.0
      %v4603 = vmin.f32 %v4554, 15.0
      %4605 = vset.pattern.permute.xlu0 0
      %4606 = vperm.xlu0 %4605, %v4555
      %v4607 = vpop.permute.xlu0 %4606
      %4610 = vset.pattern.permute.xlu0 0
      %4611 = vperm.xlu0 %4610, %v4556
      %v4612 = vpop.permute.xlu0 %4611
      %4615 = vset.pattern.permute.xlu0 0
      %4616 = vperm.xlu0 %4615, %v4557
      %v4617 = vpop.permute.xlu0 %4616
      %4620 = vset.pattern.permute.xlu0 0
      %4621 = vperm.xlu0 %4620, %v4558
      %v4622 = vpop.permute.xlu0 %4621
      %4625 = vset.pattern.permute.xlu0 0
      %4626 = vperm.xlu0 %4625, %v4559
      %v4627 = vpop.permute.xlu0 %4626
      %4630 = vset.pattern.permute.xlu0 0
      %4631 = vperm.xlu0 %4630, %v4560
      %v4632 = vpop.permute.xlu0 %4631
      %4635 = vset.pattern.permute.xlu0 0
      %4636 = vperm.xlu0 %4635, %v4561
      %v4637 = vpop.permute.xlu0 %4636
      %4640 = vset.pattern.permute.xlu0 0
      %4641 = vperm.xlu0 %4640, %v4562
      %v4642 = vpop.permute.xlu0 %4641
      %4645 = vset.pattern.permute.xlu0 0
      %4646 = vperm.xlu0 %4645, %v4563
      %v4647 = vpop.permute.xlu0 %4646
      %4650 = vset.pattern.permute.xlu0 0
      %4651 = vperm.xlu0 %4650, %v4564
      %v4652 = vpop.permute.xlu0 %4651
      %4655 = vset.pattern.permute.xlu0 0
      %4656 = vperm.xlu0 %4655, %v4565
      %v4657 = vpop.permute.xlu0 %4656
      %4660 = vset.pattern.permute.xlu0 0
      %4661 = vperm.xlu0 %4660, %v4566
      %v4662 = vpop.permute.xlu0 %4661
      %4665 = vset.pattern.permute.xlu0 0
      %4666 = vperm.xlu0 %4665, %v4567
      %v4667 = vpop.permute.xlu0 %4666
      %4670 = vset.pattern.permute.xlu0 0
      %4671 = vperm.xlu0 %4670, %v4568
      %v4672 = vpop.permute.xlu0 %4671
      %4675 = vset.pattern.permute.xlu0 0
      %4676 = vperm.xlu0 %4675, %v4569
      %v4677 = vpop.permute.xlu0 %4676
      %4680 = vset.pattern.permute.xlu0 0
      %4681 = vperm.xlu0 %4680, %v4570
      %v4682 = vpop.permute.xlu0 %4681
      %4685 = vset.pattern.permute.xlu0 0
      %4686 = vperm.xlu0 %4685, %v4571
      %v4687 = vpop.permute.xlu0 %4686
      %4690 = vset.pattern.permute.xlu0 0
      %4691 = vperm.xlu0 %4690, %v4572
      %v4692 = vpop.permute.xlu0 %4691
      %4695 = vset.pattern.permute.xlu0 0
      %4696 = vperm.xlu0 %4695, %v4573
      %v4697 = vpop.permute.xlu0 %4696
      %4700 = vset.pattern.permute.xlu0 0
      %4701 = vperm.xlu0 %4700, %v4574
      %v4702 = vpop.permute.xlu0 %4701
      %4705 = vset.pattern.permute.xlu0 0
      %4706 = vperm.xlu0 %4705, %v4575
      %v4707 = vpop.permute.xlu0 %4706
      %4710 = vset.pattern.permute.xlu0 0
      %4711 = vperm.xlu0 %4710, %v4576
      %v4712 = vpop.permute.xlu0 %4711
      %4715 = vset.pattern.permute.xlu0 0
      %4716 = vperm.xlu0 %4715, %v4577
      %v4717 = vpop.permute.xlu0 %4716
      %4720 = vset.pattern.permute.xlu0 0
      %4721 = vperm.xlu0 %4720, %v4578
      %v4722 = vpop.permute.xlu0 %4721
      %4725 = vset.pattern.permute.xlu0 0
      %4726 = vperm.xlu0 %4725, %v4579
      %v4727 = vpop.permute.xlu0 %4726
      %4730 = vset.pattern.permute.xlu0 0
      %4731 = vperm.xlu0 %4730, %v4580
      %v4732 = vpop.permute.xlu0 %4731
      %4735 = vset.pattern.permute.xlu0 0
      %4736 = vperm.xlu0 %4735, %v4581
      %v4737 = vpop.permute.xlu0 %4736
      %4740 = vset.pattern.permute.xlu0 0
      %4741 = vperm.xlu0 %4740, %v4582
      %v4742 = vpop.permute.xlu0 %4741
      %4745 = vset.pattern.permute.xlu0 0
      %4746 = vperm.xlu0 %4745, %v4583
      %v4747 = vpop.permute.xlu0 %4746
      %4750 = vset.pattern.permute.xlu0 0
      %4751 = vperm.xlu0 %4750, %v4584
      %v4752 = vpop.permute.xlu0 %4751
      %4755 = vset.pattern.permute.xlu0 0
      %4756 = vperm.xlu0 %4755, %v4585
      %v4757 = vpop.permute.xlu0 %4756
      %4760 = vset.pattern.permute.xlu0 0
      %4761 = vperm.xlu0 %4760, %v4586
      %v4762 = vpop.permute.xlu0 %4761
      %4765 = vset.pattern.permute.xlu0 0
      %4766 = vperm.xlu0 %4765, %v4587
      %v4767 = vpop.permute.xlu0 %4766
      %4770 = vset.pattern.permute.xlu0 0
      %4771 = vperm.xlu0 %4770, %v4588
      %v4772 = vpop.permute.xlu0 %4771
      %4775 = vset.pattern.permute.xlu0 0
      %4776 = vperm.xlu0 %4775, %v4589
      %v4777 = vpop.permute.xlu0 %4776
      %4780 = vset.pattern.permute.xlu0 0
      %4781 = vperm.xlu0 %4780, %v4590
      %v4782 = vpop.permute.xlu0 %4781
      %4785 = vset.pattern.permute.xlu0 0
      %4786 = vperm.xlu0 %4785, %v4591
      %v4787 = vpop.permute.xlu0 %4786
      %4790 = vset.pattern.permute.xlu0 0
      %4791 = vperm.xlu0 %4790, %v4592
      %v4792 = vpop.permute.xlu0 %4791
      %4795 = vset.pattern.permute.xlu0 0
      %4796 = vperm.xlu0 %4795, %v4593
      %v4797 = vpop.permute.xlu0 %4796
      %4800 = vset.pattern.permute.xlu0 0
      %4801 = vperm.xlu0 %4800, %v4594
      %v4802 = vpop.permute.xlu0 %4801
      %4805 = vset.pattern.permute.xlu0 0
      %4806 = vperm.xlu0 %4805, %v4595
      %v4807 = vpop.permute.xlu0 %4806
      %4810 = vset.pattern.permute.xlu0 0
      %4811 = vperm.xlu0 %4810, %v4596
      %v4812 = vpop.permute.xlu0 %4811
      %4815 = vset.pattern.permute.xlu0 0
      %4816 = vperm.xlu0 %4815, %v4597
      %v4817 = vpop.permute.xlu0 %4816
      %4820 = vset.pattern.permute.xlu0 0
      %4821 = vperm.xlu0 %4820, %v4598
      %v4822 = vpop.permute.xlu0 %4821
      %4825 = vset.pattern.permute.xlu0 0
      %4826 = vperm.xlu0 %4825, %v4599
      %v4827 = vpop.permute.xlu0 %4826
      %4830 = vset.pattern.permute.xlu0 0
      %4831 = vperm.xlu0 %4830, %v4600
      %v4832 = vpop.permute.xlu0 %4831
      %4835 = vset.pattern.permute.xlu0 0
      %4836 = vperm.xlu0 %4835, %v4601
      %v4837 = vpop.permute.xlu0 %4836
      %4840 = vset.pattern.permute.xlu0 0
      %4841 = vperm.xlu0 %4840, %v4602
      %v4842 = vpop.permute.xlu0 %4841
      %4845 = vset.pattern.permute.xlu0 0
      %4846 = vperm.xlu0 %4845, %v4603
      %v4847 = vpop.permute.xlu0 %4846
      %v4849 = vsub.f32 %v4607, %v3567
      %v4850 = vsub.f32 %v4607, %v3571
      %v4851 = vsub.f32 %v4612, %v3567
      %v4852 = vsub.f32 %v4612, %v3571
      %v4853 = vsub.f32 %v4617, %v3567
      %v4854 = vsub.f32 %v4617, %v3571
      %v4855 = vsub.f32 %v4622, %v3567
      %v4856 = vsub.f32 %v4622, %v3571
      %v4857 = vsub.f32 %v4627, %v3567
      %v4858 = vsub.f32 %v4627, %v3571
      %v4859 = vsub.f32 %v4632, %v3567
      %v4860 = vsub.f32 %v4632, %v3571
      %v4861 = vsub.f32 %v4637, %v3567
      %v4862 = vsub.f32 %v4637, %v3571
      %v4863 = vsub.f32 %v4642, %v3567
      %v4864 = vsub.f32 %v4642, %v3571
      %v4865 = vsub.f32 %v4647, %v3567
      %v4866 = vsub.f32 %v4647, %v3571
      %v4867 = vsub.f32 %v4652, %v3567
      %v4868 = vsub.f32 %v4652, %v3571
      %v4869 = vsub.f32 %v4657, %v3567
      %v4870 = vsub.f32 %v4657, %v3571
      %v4871 = vsub.f32 %v4662, %v3567
      %v4872 = vsub.f32 %v4662, %v3571
      %v4873 = vsub.f32 %v4667, %v3567
      %v4874 = vsub.f32 %v4667, %v3571
      %v4875 = vsub.f32 %v4672, %v3567
      %v4876 = vsub.f32 %v4672, %v3571
      %v4877 = vsub.f32 %v4677, %v3567
      %v4878 = vsub.f32 %v4677, %v3571
      %v4879 = vsub.f32 %v4682, %v3567
      %v4880 = vsub.f32 %v4682, %v3571
      %v4881 = vsub.f32 %v4687, %v3567
      %v4882 = vsub.f32 %v4687, %v3571
      %v4883 = vsub.f32 %v4692, %v3567
      %v4884 = vsub.f32 %v4692, %v3571
      %v4885 = vsub.f32 %v4697, %v3567
      %v4886 = vsub.f32 %v4697, %v3571
      %v4887 = vsub.f32 %v4702, %v3567
      %v4888 = vsub.f32 %v4702, %v3571
      %v4889 = vsub.f32 %v4707, %v3567
      %v4890 = vsub.f32 %v4707, %v3571
      %v4891 = vsub.f32 %v4712, %v3567
      %v4892 = vsub.f32 %v4712, %v3571
      %v4893 = vsub.f32 %v4717, %v3567
      %v4894 = vsub.f32 %v4717, %v3571
      %v4895 = vsub.f32 %v4722, %v3567
      %v4896 = vsub.f32 %v4722, %v3571
      %v4897 = vsub.f32 %v4727, %v3567
      %v4898 = vsub.f32 %v4727, %v3571
      %v4899 = vsub.f32 %v4732, %v3567
      %v4900 = vsub.f32 %v4732, %v3571
      %v4901 = vsub.f32 %v4737, %v3567
      %v4902 = vsub.f32 %v4737, %v3571
      %v4903 = vsub.f32 %v4742, %v3567
      %v4904 = vsub.f32 %v4742, %v3571
      %v4905 = vsub.f32 %v4747, %v3567
      %v4906 = vsub.f32 %v4747, %v3571
      %v4907 = vsub.f32 %v4752, %v3567
      %v4908 = vsub.f32 %v4752, %v3571
      %v4909 = vsub.f32 %v4757, %v3567
      %v4910 = vsub.f32 %v4757, %v3571
      %v4911 = vsub.f32 %v4762, %v3567
      %v4912 = vsub.f32 %v4762, %v3571
      %v4913 = vsub.f32 %v4767, %v3567
      %v4914 = vsub.f32 %v4767, %v3571
      %v4915 = vsub.f32 %v4772, %v3567
      %v4916 = vsub.f32 %v4772, %v3571
      %v4917 = vsub.f32 %v4777, %v3567
      %v4918 = vsub.f32 %v4777, %v3571
      %v4919 = vsub.f32 %v4782, %v3567
      %v4920 = vsub.f32 %v4782, %v3571
      %v4921 = vsub.f32 %v4787, %v3567
      %v4922 = vsub.f32 %v4787, %v3571
      %v4923 = vsub.f32 %v4792, %v3567
      %v4924 = vsub.f32 %v4792, %v3571
      %v4925 = vsub.f32 %v4797, %v3567
      %v4926 = vsub.f32 %v4797, %v3571
      %v4927 = vsub.f32 %v4802, %v3567
      %v4928 = vsub.f32 %v4802, %v3571
      %v4929 = vsub.f32 %v4807, %v3567
      %v4930 = vsub.f32 %v4807, %v3571
      %v4931 = vsub.f32 %v4812, %v3567
      %v4932 = vsub.f32 %v4812, %v3571
      %v4933 = vsub.f32 %v4817, %v3567
      %v4934 = vsub.f32 %v4817, %v3571
      %v4935 = vsub.f32 %v4822, %v3567
      %v4936 = vsub.f32 %v4822, %v3571
      %v4937 = vsub.f32 %v4827, %v3567
      %v4938 = vsub.f32 %v4827, %v3571
      %v4939 = vsub.f32 %v4832, %v3567
      %v4940 = vsub.f32 %v4832, %v3571
      %v4941 = vsub.f32 %v4837, %v3567
      %v4942 = vsub.f32 %v4837, %v3571
      %v4943 = vsub.f32 %v4842, %v3567
      %v4944 = vsub.f32 %v4842, %v3571
      %v4945 = vsub.f32 %v4847, %v3567
      %v4946 = vsub.f32 %v4847, %v3571
      %v4947 = vand.u32 2147483647, %v4849
      %v4948 = vand.u32 2147483647, %v4850
      %v4949 = vand.u32 2147483647, %v4851
      %v4950 = vand.u32 2147483647, %v4852
      %v4951 = vand.u32 2147483647, %v4853
      %v4952 = vand.u32 2147483647, %v4854
      %v4953 = vand.u32 2147483647, %v4855
      %v4954 = vand.u32 2147483647, %v4856
      %v4955 = vand.u32 2147483647, %v4857
      %v4956 = vand.u32 2147483647, %v4858
      %v4957 = vand.u32 2147483647, %v4859
      %v4958 = vand.u32 2147483647, %v4860
      %v4959 = vand.u32 2147483647, %v4861
      %v4960 = vand.u32 2147483647, %v4862
      %v4961 = vand.u32 2147483647, %v4863
      %v4962 = vand.u32 2147483647, %v4864
      %v4963 = vand.u32 2147483647, %v4865
      %v4964 = vand.u32 2147483647, %v4866
      %v4965 = vand.u32 2147483647, %v4867
      %v4966 = vand.u32 2147483647, %v4868
      %v4967 = vand.u32 2147483647, %v4869
      %v4968 = vand.u32 2147483647, %v4870
      %v4969 = vand.u32 2147483647, %v4871
      %v4970 = vand.u32 2147483647, %v4872
      %v4971 = vand.u32 2147483647, %v4873
      %v4972 = vand.u32 2147483647, %v4874
      %v4973 = vand.u32 2147483647, %v4875
      %v4974 = vand.u32 2147483647, %v4876
      %v4975 = vand.u32 2147483647, %v4877
      %v4976 = vand.u32 2147483647, %v4878
      %v4977 = vand.u32 2147483647, %v4879
      %v4978 = vand.u32 2147483647, %v4880
      %v4979 = vand.u32 2147483647, %v4881
      %v4980 = vand.u32 2147483647, %v4882
      %v4981 = vand.u32 2147483647, %v4883
      %v4982 = vand.u32 2147483647, %v4884
      %v4983 = vand.u32 2147483647, %v4885
      %v4984 = vand.u32 2147483647, %v4886
      %v4985 = vand.u32 2147483647, %v4887
      %v4986 = vand.u32 2147483647, %v4888
      %v4987 = vand.u32 2147483647, %v4889
      %v4988 = vand.u32 2147483647, %v4890
      %v4989 = vand.u32 2147483647, %v4891
      %v4990 = vand.u32 2147483647, %v4892
      %v4991 = vand.u32 2147483647, %v4893
      %v4992 = vand.u32 2147483647, %v4894
      %v4993 = vand.u32 2147483647, %v4895
      %v4994 = vand.u32 2147483647, %v4896
      %v4995 = vand.u32 2147483647, %v4897
      %v4996 = vand.u32 2147483647, %v4898
      %v4997 = vand.u32 2147483647, %v4899
      %v4998 = vand.u32 2147483647, %v4900
      %v4999 = vand.u32 2147483647, %v4901
      %v5000 = vand.u32 2147483647, %v4902
      %v5001 = vand.u32 2147483647, %v4903
      %v5002 = vand.u32 2147483647, %v4904
      %v5003 = vand.u32 2147483647, %v4905
      %v5004 = vand.u32 2147483647, %v4906
      %v5005 = vand.u32 2147483647, %v4907
      %v5006 = vand.u32 2147483647, %v4908
      %v5007 = vand.u32 2147483647, %v4909
      %v5008 = vand.u32 2147483647, %v4910
      %v5009 = vand.u32 2147483647, %v4911
      %v5010 = vand.u32 2147483647, %v4912
      %v5011 = vand.u32 2147483647, %v4913
      %v5012 = vand.u32 2147483647, %v4914
      %v5013 = vand.u32 2147483647, %v4915
      %v5014 = vand.u32 2147483647, %v4916
      %v5015 = vand.u32 2147483647, %v4917
      %v5016 = vand.u32 2147483647, %v4918
      %v5017 = vand.u32 2147483647, %v4919
      %v5018 = vand.u32 2147483647, %v4920
      %v5019 = vand.u32 2147483647, %v4921
      %v5020 = vand.u32 2147483647, %v4922
      %v5021 = vand.u32 2147483647, %v4923
      %v5022 = vand.u32 2147483647, %v4924
      %v5023 = vand.u32 2147483647, %v4925
      %v5024 = vand.u32 2147483647, %v4926
      %v5025 = vand.u32 2147483647, %v4927
      %v5026 = vand.u32 2147483647, %v4928
      %v5027 = vand.u32 2147483647, %v4929
      %v5028 = vand.u32 2147483647, %v4930
      %v5029 = vand.u32 2147483647, %v4931
      %v5030 = vand.u32 2147483647, %v4932
      %v5031 = vand.u32 2147483647, %v4933
      %v5032 = vand.u32 2147483647, %v4934
      %v5033 = vand.u32 2147483647, %v4935
      %v5034 = vand.u32 2147483647, %v4936
      %v5035 = vand.u32 2147483647, %v4937
      %v5036 = vand.u32 2147483647, %v4938
      %v5037 = vand.u32 2147483647, %v4939
      %v5038 = vand.u32 2147483647, %v4940
      %v5039 = vand.u32 2147483647, %v4941
      %v5040 = vand.u32 2147483647, %v4942
      %v5041 = vand.u32 2147483647, %v4943
      %v5042 = vand.u32 2147483647, %v4944
      %v5043 = vand.u32 2147483647, %v4945
      %v5044 = vand.u32 2147483647, %v4946
      %v5045 = vsub.f32 1.0, %v4947
      %v5046 = vsub.f32 1.0, %v4948
      %v5047 = vsub.f32 1.0, %v4949
      %v5048 = vsub.f32 1.0, %v4950
      %v5049 = vsub.f32 1.0, %v4951
      %v5050 = vsub.f32 1.0, %v4952
      %v5051 = vsub.f32 1.0, %v4953
      %v5052 = vsub.f32 1.0, %v4954
      %v5053 = vsub.f32 1.0, %v4955
      %v5054 = vsub.f32 1.0, %v4956
      %v5055 = vsub.f32 1.0, %v4957
      %v5056 = vsub.f32 1.0, %v4958
      %v5057 = vsub.f32 1.0, %v4959
      %v5058 = vsub.f32 1.0, %v4960
      %v5059 = vsub.f32 1.0, %v4961
      %v5060 = vsub.f32 1.0, %v4962
      %v5061 = vsub.f32 1.0, %v4963
      %v5062 = vsub.f32 1.0, %v4964
      %v5063 = vsub.f32 1.0, %v4965
      %v5064 = vsub.f32 1.0, %v4966
      %v5065 = vsub.f32 1.0, %v4967
      %v5066 = vsub.f32 1.0, %v4968
      %v5067 = vsub.f32 1.0, %v4969
      %v5068 = vsub.f32 1.0, %v4970
      %v5069 = vsub.f32 1.0, %v4971
      %v5070 = vsub.f32 1.0, %v4972
      %v5071 = vsub.f32 1.0, %v4973
      %v5072 = vsub.f32 1.0, %v4974
      %v5073 = vsub.f32 1.0, %v4975
      %v5074 = vsub.f32 1.0, %v4976
      %v5075 = vsub.f32 1.0, %v4977
      %v5076 = vsub.f32 1.0, %v4978
      %v5077 = vsub.f32 1.0, %v4979
      %v5078 = vsub.f32 1.0, %v4980
      %v5079 = vsub.f32 1.0, %v4981
      %v5080 = vsub.f32 1.0, %v4982
      %v5081 = vsub.f32 1.0, %v4983
      %v5082 = vsub.f32 1.0, %v4984
      %v5083 = vsub.f32 1.0, %v4985
      %v5084 = vsub.f32 1.0, %v4986
      %v5085 = vsub.f32 1.0, %v4987
      %v5086 = vsub.f32 1.0, %v4988
      %v5087 = vsub.f32 1.0, %v4989
      %v5088 = vsub.f32 1.0, %v4990
      %v5089 = vsub.f32 1.0, %v4991
      %v5090 = vsub.f32 1.0, %v4992
      %v5091 = vsub.f32 1.0, %v4993
      %v5092 = vsub.f32 1.0, %v4994
      %v5093 = vsub.f32 1.0, %v4995
      %v5094 = vsub.f32 1.0, %v4996
      %v5095 = vsub.f32 1.0, %v4997
      %v5096 = vsub.f32 1.0, %v4998
      %v5097 = vsub.f32 1.0, %v4999
      %v5098 = vsub.f32 1.0, %v5000
      %v5099 = vsub.f32 1.0, %v5001
      %v5100 = vsub.f32 1.0, %v5002
      %v5101 = vsub.f32 1.0, %v5003
      %v5102 = vsub.f32 1.0, %v5004
      %v5103 = vsub.f32 1.0, %v5005
      %v5104 = vsub.f32 1.0, %v5006
      %v5105 = vsub.f32 1.0, %v5007
      %v5106 = vsub.f32 1.0, %v5008
      %v5107 = vsub.f32 1.0, %v5009
      %v5108 = vsub.f32 1.0, %v5010
      %v5109 = vsub.f32 1.0, %v5011
      %v5110 = vsub.f32 1.0, %v5012
      %v5111 = vsub.f32 1.0, %v5013
      %v5112 = vsub.f32 1.0, %v5014
      %v5113 = vsub.f32 1.0, %v5015
      %v5114 = vsub.f32 1.0, %v5016
      %v5115 = vsub.f32 1.0, %v5017
      %v5116 = vsub.f32 1.0, %v5018
      %v5117 = vsub.f32 1.0, %v5019
      %v5118 = vsub.f32 1.0, %v5020
      %v5119 = vsub.f32 1.0, %v5021
      %v5120 = vsub.f32 1.0, %v5022
      %v5121 = vsub.f32 1.0, %v5023
      %v5122 = vsub.f32 1.0, %v5024
      %v5123 = vsub.f32 1.0, %v5025
      %v5124 = vsub.f32 1.0, %v5026
      %v5125 = vsub.f32 1.0, %v5027
      %v5126 = vsub.f32 1.0, %v5028
      %v5127 = vsub.f32 1.0, %v5029
      %v5128 = vsub.f32 1.0, %v5030
      %v5129 = vsub.f32 1.0, %v5031
      %v5130 = vsub.f32 1.0, %v5032
      %v5131 = vsub.f32 1.0, %v5033
      %v5132 = vsub.f32 1.0, %v5034
      %v5133 = vsub.f32 1.0, %v5035
      %v5134 = vsub.f32 1.0, %v5036
      %v5135 = vsub.f32 1.0, %v5037
      %v5136 = vsub.f32 1.0, %v5038
      %v5137 = vsub.f32 1.0, %v5039
      %v5138 = vsub.f32 1.0, %v5040
      %v5139 = vsub.f32 1.0, %v5041
      %v5140 = vsub.f32 1.0, %v5042
      %v5141 = vsub.f32 1.0, %v5043
      %v5142 = vsub.f32 1.0, %v5044
      %v5143 = vmax.f32 %v5045, 0.0
      %v5144 = vmax.f32 %v5046, 0.0
      %v5145 = vmax.f32 %v5047, 0.0
      %v5146 = vmax.f32 %v5048, 0.0
      %v5147 = vmax.f32 %v5049, 0.0
      %v5148 = vmax.f32 %v5050, 0.0
      %v5149 = vmax.f32 %v5051, 0.0
      %v5150 = vmax.f32 %v5052, 0.0
      %v5151 = vmax.f32 %v5053, 0.0
      %v5152 = vmax.f32 %v5054, 0.0
      %v5153 = vmax.f32 %v5055, 0.0
      %v5154 = vmax.f32 %v5056, 0.0
      %v5155 = vmax.f32 %v5057, 0.0
      %v5156 = vmax.f32 %v5058, 0.0
      %v5157 = vmax.f32 %v5059, 0.0
      %v5158 = vmax.f32 %v5060, 0.0
      %v5159 = vmax.f32 %v5061, 0.0
      %v5160 = vmax.f32 %v5062, 0.0
      %v5161 = vmax.f32 %v5063, 0.0
      %v5162 = vmax.f32 %v5064, 0.0
      %v5163 = vmax.f32 %v5065, 0.0
      %v5164 = vmax.f32 %v5066, 0.0
      %v5165 = vmax.f32 %v5067, 0.0
      %v5166 = vmax.f32 %v5068, 0.0
      %v5167 = vmax.f32 %v5069, 0.0
      %v5168 = vmax.f32 %v5070, 0.0
      %v5169 = vmax.f32 %v5071, 0.0
      %v5170 = vmax.f32 %v5072, 0.0
      %v5171 = vmax.f32 %v5073, 0.0
      %v5172 = vmax.f32 %v5074, 0.0
      %v5173 = vmax.f32 %v5075, 0.0
      %v5174 = vmax.f32 %v5076, 0.0
      %v5175 = vmax.f32 %v5077, 0.0
      %v5176 = vmax.f32 %v5078, 0.0
      %v5177 = vmax.f32 %v5079, 0.0
      %v5178 = vmax.f32 %v5080, 0.0
      %v5179 = vmax.f32 %v5081, 0.0
      %v5180 = vmax.f32 %v5082, 0.0
      %v5181 = vmax.f32 %v5083, 0.0
      %v5182 = vmax.f32 %v5084, 0.0
      %v5183 = vmax.f32 %v5085, 0.0
      %v5184 = vmax.f32 %v5086, 0.0
      %v5185 = vmax.f32 %v5087, 0.0
      %v5186 = vmax.f32 %v5088, 0.0
      %v5187 = vmax.f32 %v5089, 0.0
      %v5188 = vmax.f32 %v5090, 0.0
      %v5189 = vmax.f32 %v5091, 0.0
      %v5190 = vmax.f32 %v5092, 0.0
      %v5191 = vmax.f32 %v5093, 0.0
      %v5192 = vmax.f32 %v5094, 0.0
      %v5193 = vmax.f32 %v5095, 0.0
      %v5194 = vmax.f32 %v5096, 0.0
      %v5195 = vmax.f32 %v5097, 0.0
      %v5196 = vmax.f32 %v5098, 0.0
      %v5197 = vmax.f32 %v5099, 0.0
      %v5198 = vmax.f32 %v5100, 0.0
      %v5199 = vmax.f32 %v5101, 0.0
      %v5200 = vmax.f32 %v5102, 0.0
      %v5201 = vmax.f32 %v5103, 0.0
      %v5202 = vmax.f32 %v5104, 0.0
      %v5203 = vmax.f32 %v5105, 0.0
      %v5204 = vmax.f32 %v5106, 0.0
      %v5205 = vmax.f32 %v5107, 0.0
      %v5206 = vmax.f32 %v5108, 0.0
      %v5207 = vmax.f32 %v5109, 0.0
      %v5208 = vmax.f32 %v5110, 0.0
      %v5209 = vmax.f32 %v5111, 0.0
      %v5210 = vmax.f32 %v5112, 0.0
      %v5211 = vmax.f32 %v5113, 0.0
      %v5212 = vmax.f32 %v5114, 0.0
      %v5213 = vmax.f32 %v5115, 0.0
      %v5214 = vmax.f32 %v5116, 0.0
      %v5215 = vmax.f32 %v5117, 0.0
      %v5216 = vmax.f32 %v5118, 0.0
      %v5217 = vmax.f32 %v5119, 0.0
      %v5218 = vmax.f32 %v5120, 0.0
      %v5219 = vmax.f32 %v5121, 0.0
      %v5220 = vmax.f32 %v5122, 0.0
      %v5221 = vmax.f32 %v5123, 0.0
      %v5222 = vmax.f32 %v5124, 0.0
      %v5223 = vmax.f32 %v5125, 0.0
      %v5224 = vmax.f32 %v5126, 0.0
      %v5225 = vmax.f32 %v5127, 0.0
      %v5226 = vmax.f32 %v5128, 0.0
      %v5227 = vmax.f32 %v5129, 0.0
      %v5228 = vmax.f32 %v5130, 0.0
      %v5229 = vmax.f32 %v5131, 0.0
      %v5230 = vmax.f32 %v5132, 0.0
      %v5231 = vmax.f32 %v5133, 0.0
      %v5232 = vmax.f32 %v5134, 0.0
      %v5233 = vmax.f32 %v5135, 0.0
      %v5234 = vmax.f32 %v5136, 0.0
      %v5235 = vmax.f32 %v5137, 0.0
      %v5236 = vmax.f32 %v5138, 0.0
      %v5237 = vmax.f32 %v5139, 0.0
      %v5238 = vmax.f32 %v5140, 0.0
      %v5239 = vmax.f32 %v5141, 0.0
      %v5240 = vmax.f32 %v5142, 0.0
      %v5241 = vsel %vm4457, 1, 0
      %v5242 = vsel %vm4458, 1, 0
      %v5243 = vsel %vm4459, 1, 0
      %v5244 = vsel %vm4460, 1, 0
      %v5245 = vsel %vm4461, 1, 0
      %v5246 = vsel %vm4462, 1, 0
      %v5247 = vsel %vm4463, 1, 0
      %v5248 = vsel %vm4464, 1, 0
      %v5249 = vsel %vm4465, 1, 0
      %v5250 = vsel %vm4466, 1, 0
      %v5251 = vsel %vm4467, 1, 0
      %v5252 = vsel %vm4468, 1, 0
      %v5253 = vsel %vm4469, 1, 0
      %v5254 = vsel %vm4470, 1, 0
      %v5255 = vsel %vm4471, 1, 0
      %v5256 = vsel %vm4472, 1, 0
      %v5257 = vsel %vm4473, 1, 0
      %v5258 = vsel %vm4474, 1, 0
      %v5259 = vsel %vm4475, 1, 0
      %v5260 = vsel %vm4476, 1, 0
      %v5261 = vsel %vm4477, 1, 0
      %v5262 = vsel %vm4478, 1, 0
      %v5263 = vsel %vm4479, 1, 0
      %v5264 = vsel %vm4480, 1, 0
      %v5265 = vsel %vm4481, 1, 0
      %v5266 = vsel %vm4482, 1, 0
      %v5267 = vsel %vm4483, 1, 0
      %v5268 = vsel %vm4484, 1, 0
      %v5269 = vsel %vm4485, 1, 0
      %v5270 = vsel %vm4486, 1, 0
      %v5271 = vsel %vm4487, 1, 0
      %v5272 = vsel %vm4488, 1, 0
      %v5273 = vsel %vm4489, 1, 0
      %v5274 = vsel %vm4490, 1, 0
      %v5275 = vsel %vm4491, 1, 0
      %v5276 = vsel %vm4492, 1, 0
      %v5277 = vsel %vm4493, 1, 0
      %v5278 = vsel %vm4494, 1, 0
      %v5279 = vsel %vm4495, 1, 0
      %v5280 = vsel %vm4496, 1, 0
      %v5281 = vsel %vm4497, 1, 0
      %v5282 = vsel %vm4498, 1, 0
      %v5283 = vsel %vm4499, 1, 0
      %v5284 = vsel %vm4500, 1, 0
      %v5285 = vsel %vm4501, 1, 0
      %v5286 = vsel %vm4502, 1, 0
      %v5287 = vsel %vm4503, 1, 0
      %v5288 = vsel %vm4504, 1, 0
      %v5289 = vsel %vm4505, 1, 0
      %5290 = vset.pattern.permute.xlu0 0
      %5291 = vperm.xlu0 %5290, %v5241
      %v5292 = vpop.permute.xlu0 %5291
      %5293 = vset.pattern.permute.xlu0 0
      %5294 = vperm.xlu0 %5293, %v5242
      %v5295 = vpop.permute.xlu0 %5294
      %5296 = vset.pattern.permute.xlu0 0
      %5297 = vperm.xlu0 %5296, %v5243
      %v5298 = vpop.permute.xlu0 %5297
      %5299 = vset.pattern.permute.xlu0 0
      %5300 = vperm.xlu0 %5299, %v5244
      %v5301 = vpop.permute.xlu0 %5300
      %5302 = vset.pattern.permute.xlu0 0
      %5303 = vperm.xlu0 %5302, %v5245
      %v5304 = vpop.permute.xlu0 %5303
      %5305 = vset.pattern.permute.xlu0 0
      %5306 = vperm.xlu0 %5305, %v5246
      %v5307 = vpop.permute.xlu0 %5306
      %5308 = vset.pattern.permute.xlu0 0
      %5309 = vperm.xlu0 %5308, %v5247
      %v5310 = vpop.permute.xlu0 %5309
      %5311 = vset.pattern.permute.xlu0 0
      %5312 = vperm.xlu0 %5311, %v5248
      %v5313 = vpop.permute.xlu0 %5312
      %5314 = vset.pattern.permute.xlu0 0
      %5315 = vperm.xlu0 %5314, %v5249
      %v5316 = vpop.permute.xlu0 %5315
      %5317 = vset.pattern.permute.xlu0 0
      %5318 = vperm.xlu0 %5317, %v5250
      %v5319 = vpop.permute.xlu0 %5318
      %5320 = vset.pattern.permute.xlu0 0
      %5321 = vperm.xlu0 %5320, %v5251
      %v5322 = vpop.permute.xlu0 %5321
      %5323 = vset.pattern.permute.xlu0 0
      %5324 = vperm.xlu0 %5323, %v5252
      %v5325 = vpop.permute.xlu0 %5324
      %5326 = vset.pattern.permute.xlu0 0
      %5327 = vperm.xlu0 %5326, %v5253
      %v5328 = vpop.permute.xlu0 %5327
      %5329 = vset.pattern.permute.xlu0 0
      %5330 = vperm.xlu0 %5329, %v5254
      %v5331 = vpop.permute.xlu0 %5330
      %5332 = vset.pattern.permute.xlu0 0
      %5333 = vperm.xlu0 %5332, %v5255
      %v5334 = vpop.permute.xlu0 %5333
      %5335 = vset.pattern.permute.xlu0 0
      %5336 = vperm.xlu0 %5335, %v5256
      %v5337 = vpop.permute.xlu0 %5336
      %5338 = vset.pattern.permute.xlu0 0
      %5339 = vperm.xlu0 %5338, %v5257
      %v5340 = vpop.permute.xlu0 %5339
      %5341 = vset.pattern.permute.xlu0 0
      %5342 = vperm.xlu0 %5341, %v5258
      %v5343 = vpop.permute.xlu0 %5342
      %5344 = vset.pattern.permute.xlu0 0
      %5345 = vperm.xlu0 %5344, %v5259
      %v5346 = vpop.permute.xlu0 %5345
      %5347 = vset.pattern.permute.xlu0 0
      %5348 = vperm.xlu0 %5347, %v5260
      %v5349 = vpop.permute.xlu0 %5348
      %5350 = vset.pattern.permute.xlu0 0
      %5351 = vperm.xlu0 %5350, %v5261
      %v5352 = vpop.permute.xlu0 %5351
      %5353 = vset.pattern.permute.xlu0 0
      %5354 = vperm.xlu0 %5353, %v5262
      %v5355 = vpop.permute.xlu0 %5354
      %5356 = vset.pattern.permute.xlu0 0
      %5357 = vperm.xlu0 %5356, %v5263
      %v5358 = vpop.permute.xlu0 %5357
      %5359 = vset.pattern.permute.xlu0 0
      %5360 = vperm.xlu0 %5359, %v5264
      %v5361 = vpop.permute.xlu0 %5360
      %5362 = vset.pattern.permute.xlu0 0
      %5363 = vperm.xlu0 %5362, %v5265
      %v5364 = vpop.permute.xlu0 %5363
      %5365 = vset.pattern.permute.xlu0 0
      %5366 = vperm.xlu0 %5365, %v5266
      %v5367 = vpop.permute.xlu0 %5366
      %5368 = vset.pattern.permute.xlu0 0
      %5369 = vperm.xlu0 %5368, %v5267
      %v5370 = vpop.permute.xlu0 %5369
      %5371 = vset.pattern.permute.xlu0 0
      %5372 = vperm.xlu0 %5371, %v5268
      %v5373 = vpop.permute.xlu0 %5372
      %5374 = vset.pattern.permute.xlu0 0
      %5375 = vperm.xlu0 %5374, %v5269
      %v5376 = vpop.permute.xlu0 %5375
      %5377 = vset.pattern.permute.xlu0 0
      %5378 = vperm.xlu0 %5377, %v5270
      %v5379 = vpop.permute.xlu0 %5378
      %5380 = vset.pattern.permute.xlu0 0
      %5381 = vperm.xlu0 %5380, %v5271
      %v5382 = vpop.permute.xlu0 %5381
      %5383 = vset.pattern.permute.xlu0 0
      %5384 = vperm.xlu0 %5383, %v5272
      %v5385 = vpop.permute.xlu0 %5384
      %5386 = vset.pattern.permute.xlu0 0
      %5387 = vperm.xlu0 %5386, %v5273
      %v5388 = vpop.permute.xlu0 %5387
      %5389 = vset.pattern.permute.xlu0 0
      %5390 = vperm.xlu0 %5389, %v5274
      %v5391 = vpop.permute.xlu0 %5390
      %5392 = vset.pattern.permute.xlu0 0
      %5393 = vperm.xlu0 %5392, %v5275
      %v5394 = vpop.permute.xlu0 %5393
      %5395 = vset.pattern.permute.xlu0 0
      %5396 = vperm.xlu0 %5395, %v5276
      %v5397 = vpop.permute.xlu0 %5396
      %5398 = vset.pattern.permute.xlu0 0
      %5399 = vperm.xlu0 %5398, %v5277
      %v5400 = vpop.permute.xlu0 %5399
      %5401 = vset.pattern.permute.xlu0 0
      %5402 = vperm.xlu0 %5401, %v5278
      %v5403 = vpop.permute.xlu0 %5402
      %5404 = vset.pattern.permute.xlu0 0
      %5405 = vperm.xlu0 %5404, %v5279
      %v5406 = vpop.permute.xlu0 %5405
      %5407 = vset.pattern.permute.xlu0 0
      %5408 = vperm.xlu0 %5407, %v5280
      %v5409 = vpop.permute.xlu0 %5408
      %5410 = vset.pattern.permute.xlu0 0
      %5411 = vperm.xlu0 %5410, %v5281
      %v5412 = vpop.permute.xlu0 %5411
      %5413 = vset.pattern.permute.xlu0 0
      %5414 = vperm.xlu0 %5413, %v5282
      %v5415 = vpop.permute.xlu0 %5414
      %5416 = vset.pattern.permute.xlu0 0
      %5417 = vperm.xlu0 %5416, %v5283
      %v5418 = vpop.permute.xlu0 %5417
      %5419 = vset.pattern.permute.xlu0 0
      %5420 = vperm.xlu0 %5419, %v5284
      %v5421 = vpop.permute.xlu0 %5420
      %5422 = vset.pattern.permute.xlu0 0
      %5423 = vperm.xlu0 %5422, %v5285
      %v5424 = vpop.permute.xlu0 %5423
      %5425 = vset.pattern.permute.xlu0 0
      %5426 = vperm.xlu0 %5425, %v5286
      %v5427 = vpop.permute.xlu0 %5426
      %5428 = vset.pattern.permute.xlu0 0
      %5429 = vperm.xlu0 %5428, %v5287
      %v5430 = vpop.permute.xlu0 %5429
      %5431 = vset.pattern.permute.xlu0 0
      %5432 = vperm.xlu0 %5431, %v5288
      %v5433 = vpop.permute.xlu0 %5432
      %5434 = vset.pattern.permute.xlu0 0
      %5435 = vperm.xlu0 %5434, %v5289
      %v5436 = vpop.permute.xlu0 %5435
      %vm5437 = vcmp.eq.s32.totalorder %v5292, 1
      %vm5438 = vcmp.eq.s32.totalorder %v5295, 1
      %vm5439 = vcmp.eq.s32.totalorder %v5298, 1
      %vm5440 = vcmp.eq.s32.totalorder %v5301, 1
      %vm5441 = vcmp.eq.s32.totalorder %v5304, 1
      %vm5442 = vcmp.eq.s32.totalorder %v5307, 1
      %vm5443 = vcmp.eq.s32.totalorder %v5310, 1
      %vm5444 = vcmp.eq.s32.totalorder %v5313, 1
      %vm5445 = vcmp.eq.s32.totalorder %v5316, 1
      %vm5446 = vcmp.eq.s32.totalorder %v5319, 1
      %vm5447 = vcmp.eq.s32.totalorder %v5322, 1
      %vm5448 = vcmp.eq.s32.totalorder %v5325, 1
      %vm5449 = vcmp.eq.s32.totalorder %v5328, 1
      %vm5450 = vcmp.eq.s32.totalorder %v5331, 1
      %vm5451 = vcmp.eq.s32.totalorder %v5334, 1
      %vm5452 = vcmp.eq.s32.totalorder %v5337, 1
      %vm5453 = vcmp.eq.s32.totalorder %v5340, 1
      %vm5454 = vcmp.eq.s32.totalorder %v5343, 1
      %vm5455 = vcmp.eq.s32.totalorder %v5346, 1
      %vm5456 = vcmp.eq.s32.totalorder %v5349, 1
      %vm5457 = vcmp.eq.s32.totalorder %v5352, 1
      %vm5458 = vcmp.eq.s32.totalorder %v5355, 1
      %vm5459 = vcmp.eq.s32.totalorder %v5358, 1
      %vm5460 = vcmp.eq.s32.totalorder %v5361, 1
      %vm5461 = vcmp.eq.s32.totalorder %v5364, 1
      %vm5462 = vcmp.eq.s32.totalorder %v5367, 1
      %vm5463 = vcmp.eq.s32.totalorder %v5370, 1
      %vm5464 = vcmp.eq.s32.totalorder %v5373, 1
      %vm5465 = vcmp.eq.s32.totalorder %v5376, 1
      %vm5466 = vcmp.eq.s32.totalorder %v5379, 1
      %vm5467 = vcmp.eq.s32.totalorder %v5382, 1
      %vm5468 = vcmp.eq.s32.totalorder %v5385, 1
      %vm5469 = vcmp.eq.s32.totalorder %v5388, 1
      %vm5470 = vcmp.eq.s32.totalorder %v5391, 1
      %vm5471 = vcmp.eq.s32.totalorder %v5394, 1
      %vm5472 = vcmp.eq.s32.totalorder %v5397, 1
      %vm5473 = vcmp.eq.s32.totalorder %v5400, 1
      %vm5474 = vcmp.eq.s32.totalorder %v5403, 1
      %vm5475 = vcmp.eq.s32.totalorder %v5406, 1
      %vm5476 = vcmp.eq.s32.totalorder %v5409, 1
      %vm5477 = vcmp.eq.s32.totalorder %v5412, 1
      %vm5478 = vcmp.eq.s32.totalorder %v5415, 1
      %vm5479 = vcmp.eq.s32.totalorder %v5418, 1
      %vm5480 = vcmp.eq.s32.totalorder %v5421, 1
      %vm5481 = vcmp.eq.s32.totalorder %v5424, 1
      %vm5482 = vcmp.eq.s32.totalorder %v5427, 1
      %vm5483 = vcmp.eq.s32.totalorder %v5430, 1
      %vm5484 = vcmp.eq.s32.totalorder %v5433, 1
      %vm5485 = vcmp.eq.s32.totalorder %v5436, 1
      %v5486 = vsel %vm5437, %v5143, 0.0
      %v5487 = vsel %vm5437, %v5144, 0.0
      %v5488 = vsel %vm5438, %v5145, 0.0
      %v5489 = vsel %vm5438, %v5146, 0.0
      %v5490 = vsel %vm5439, %v5147, 0.0
      %v5491 = vsel %vm5439, %v5148, 0.0
      %v5492 = vsel %vm5440, %v5149, 0.0
      %v5493 = vsel %vm5440, %v5150, 0.0
      %v5494 = vsel %vm5441, %v5151, 0.0
      %v5495 = vsel %vm5441, %v5152, 0.0
      %v5496 = vsel %vm5442, %v5153, 0.0
      %v5497 = vsel %vm5442, %v5154, 0.0
      %v5498 = vsel %vm5443, %v5155, 0.0
      %v5499 = vsel %vm5443, %v5156, 0.0
      %v5500 = vsel %vm5444, %v5157, 0.0
      %v5501 = vsel %vm5444, %v5158, 0.0
      %v5502 = vsel %vm5445, %v5159, 0.0
      %v5503 = vsel %vm5445, %v5160, 0.0
      %v5504 = vsel %vm5446, %v5161, 0.0
      %v5505 = vsel %vm5446, %v5162, 0.0
      %v5506 = vsel %vm5447, %v5163, 0.0
      %v5507 = vsel %vm5447, %v5164, 0.0
      %v5508 = vsel %vm5448, %v5165, 0.0
      %v5509 = vsel %vm5448, %v5166, 0.0
      %v5510 = vsel %vm5449, %v5167, 0.0
      %v5511 = vsel %vm5449, %v5168, 0.0
      %v5512 = vsel %vm5450, %v5169, 0.0
      %v5513 = vsel %vm5450, %v5170, 0.0
      %v5514 = vsel %vm5451, %v5171, 0.0
      %v5515 = vsel %vm5451, %v5172, 0.0
      %v5516 = vsel %vm5452, %v5173, 0.0
      %v5517 = vsel %vm5452, %v5174, 0.0
      %v5518 = vsel %vm5453, %v5175, 0.0
      %v5519 = vsel %vm5453, %v5176, 0.0
      %v5520 = vsel %vm5454, %v5177, 0.0
      %v5521 = vsel %vm5454, %v5178, 0.0
      %v5522 = vsel %vm5455, %v5179, 0.0
      %v5523 = vsel %vm5455, %v5180, 0.0
      %v5524 = vsel %vm5456, %v5181, 0.0
      %v5525 = vsel %vm5456, %v5182, 0.0
      %v5526 = vsel %vm5457, %v5183, 0.0
      %v5527 = vsel %vm5457, %v5184, 0.0
      %v5528 = vsel %vm5458, %v5185, 0.0
      %v5529 = vsel %vm5458, %v5186, 0.0
      %v5530 = vsel %vm5459, %v5187, 0.0
      %v5531 = vsel %vm5459, %v5188, 0.0
      %v5532 = vsel %vm5460, %v5189, 0.0
      %v5533 = vsel %vm5460, %v5190, 0.0
      %v5534 = vsel %vm5461, %v5191, 0.0
      %v5535 = vsel %vm5461, %v5192, 0.0
      %v5536 = vsel %vm5462, %v5193, 0.0
      %v5537 = vsel %vm5462, %v5194, 0.0
      %v5538 = vsel %vm5463, %v5195, 0.0
      %v5539 = vsel %vm5463, %v5196, 0.0
      %v5540 = vsel %vm5464, %v5197, 0.0
      %v5541 = vsel %vm5464, %v5198, 0.0
      %v5542 = vsel %vm5465, %v5199, 0.0
      %v5543 = vsel %vm5465, %v5200, 0.0
      %v5544 = vsel %vm5466, %v5201, 0.0
      %v5545 = vsel %vm5466, %v5202, 0.0
      %v5546 = vsel %vm5467, %v5203, 0.0
      %v5547 = vsel %vm5467, %v5204, 0.0
      %v5548 = vsel %vm5468, %v5205, 0.0
      %v5549 = vsel %vm5468, %v5206, 0.0
      %v5550 = vsel %vm5469, %v5207, 0.0
      %v5551 = vsel %vm5469, %v5208, 0.0
      %v5552 = vsel %vm5470, %v5209, 0.0
      %v5553 = vsel %vm5470, %v5210, 0.0
      %v5554 = vsel %vm5471, %v5211, 0.0
      %v5555 = vsel %vm5471, %v5212, 0.0
      %v5556 = vsel %vm5472, %v5213, 0.0
      %v5557 = vsel %vm5472, %v5214, 0.0
      %v5558 = vsel %vm5473, %v5215, 0.0
      %v5559 = vsel %vm5473, %v5216, 0.0
      %v5560 = vsel %vm5474, %v5217, 0.0
      %v5561 = vsel %vm5474, %v5218, 0.0
      %v5562 = vsel %vm5475, %v5219, 0.0
      %v5563 = vsel %vm5475, %v5220, 0.0
      %v5564 = vsel %vm5476, %v5221, 0.0
      %v5565 = vsel %vm5476, %v5222, 0.0
      %v5566 = vsel %vm5477, %v5223, 0.0
      %v5567 = vsel %vm5477, %v5224, 0.0
      %v5568 = vsel %vm5478, %v5225, 0.0
      %v5569 = vsel %vm5478, %v5226, 0.0
      %v5570 = vsel %vm5479, %v5227, 0.0
      %v5571 = vsel %vm5479, %v5228, 0.0
      %v5572 = vsel %vm5480, %v5229, 0.0
      %v5573 = vsel %vm5480, %v5230, 0.0
      %v5574 = vsel %vm5481, %v5231, 0.0
      %v5575 = vsel %vm5481, %v5232, 0.0
      %v5576 = vsel %vm5482, %v5233, 0.0
      %v5577 = vsel %vm5482, %v5234, 0.0
      %v5578 = vsel %vm5483, %v5235, 0.0
      %v5579 = vsel %vm5483, %v5236, 0.0
      %v5580 = vsel %vm5484, %v5237, 0.0
      %v5581 = vsel %vm5484, %v5238, 0.0
      %v5582 = vsel %vm5485, %v5239, 0.0
      %v5583 = vsel %vm5485, %v5240, 0.0
      %v5584 = vadd.f32 %v4211, %v5486
      %v5585 = vadd.f32 %v4212, %v5487
      %v5586 = vadd.f32 %v4213, %v5488
      %v5587 = vadd.f32 %v4214, %v5489
      %v5588 = vadd.f32 %v4215, %v5490
      %v5589 = vadd.f32 %v4216, %v5491
      %v5590 = vadd.f32 %v4217, %v5492
      %v5591 = vadd.f32 %v4218, %v5493
      %v5592 = vadd.f32 %v4219, %v5494
      %v5593 = vadd.f32 %v4220, %v5495
      %v5594 = vadd.f32 %v4221, %v5496
      %v5595 = vadd.f32 %v4222, %v5497
      %v5596 = vadd.f32 %v4223, %v5498
      %v5597 = vadd.f32 %v4224, %v5499
      %v5598 = vadd.f32 %v4225, %v5500
      %v5599 = vadd.f32 %v4226, %v5501
      %v5600 = vadd.f32 %v4227, %v5502
      %v5601 = vadd.f32 %v4228, %v5503
      %v5602 = vadd.f32 %v4229, %v5504
      %v5603 = vadd.f32 %v4230, %v5505
      %v5604 = vadd.f32 %v4231, %v5506
      %v5605 = vadd.f32 %v4232, %v5507
      %v5606 = vadd.f32 %v4233, %v5508
      %v5607 = vadd.f32 %v4234, %v5509
      %v5608 = vadd.f32 %v4235, %v5510
      %v5609 = vadd.f32 %v4236, %v5511
      %v5610 = vadd.f32 %v4237, %v5512
      %v5611 = vadd.f32 %v4238, %v5513
      %v5612 = vadd.f32 %v4239, %v5514
      %v5613 = vadd.f32 %v4240, %v5515
      %v5614 = vadd.f32 %v4241, %v5516
      %v5615 = vadd.f32 %v4242, %v5517
      %v5616 = vadd.f32 %v4243, %v5518
      %v5617 = vadd.f32 %v4244, %v5519
      %v5618 = vadd.f32 %v4245, %v5520
      %v5619 = vadd.f32 %v4246, %v5521
      %v5620 = vadd.f32 %v4247, %v5522
      %v5621 = vadd.f32 %v4248, %v5523
      %v5622 = vadd.f32 %v4249, %v5524
      %v5623 = vadd.f32 %v4250, %v5525
      %v5624 = vadd.f32 %v4251, %v5526
      %v5625 = vadd.f32 %v4252, %v5527
      %v5626 = vadd.f32 %v4253, %v5528
      %v5627 = vadd.f32 %v4254, %v5529
      %v5628 = vadd.f32 %v4255, %v5530
      %v5629 = vadd.f32 %v4256, %v5531
      %v5630 = vadd.f32 %v4257, %v5532
      %v5631 = vadd.f32 %v4258, %v5533
      %v5632 = vadd.f32 %v4259, %v5534
      %v5633 = vadd.f32 %v4260, %v5535
      %v5634 = vadd.f32 %v4261, %v5536
      %v5635 = vadd.f32 %v4262, %v5537
      %v5636 = vadd.f32 %v4263, %v5538
      %v5637 = vadd.f32 %v4264, %v5539
      %v5638 = vadd.f32 %v4265, %v5540
      %v5639 = vadd.f32 %v4266, %v5541
      %v5640 = vadd.f32 %v4267, %v5542
      %v5641 = vadd.f32 %v4268, %v5543
      %v5642 = vadd.f32 %v4269, %v5544
      %v5643 = vadd.f32 %v4270, %v5545
      %v5644 = vadd.f32 %v4271, %v5546
      %v5645 = vadd.f32 %v4272, %v5547
      %v5646 = vadd.f32 %v4273, %v5548
      %v5647 = vadd.f32 %v4274, %v5549
      %v5648 = vadd.f32 %v4275, %v5550
      %v5649 = vadd.f32 %v4276, %v5551
      %v5650 = vadd.f32 %v4277, %v5552
      %v5651 = vadd.f32 %v4278, %v5553
      %v5652 = vadd.f32 %v4279, %v5554
      %v5653 = vadd.f32 %v4280, %v5555
      %v5654 = vadd.f32 %v4281, %v5556
      %v5655 = vadd.f32 %v4282, %v5557
      %v5656 = vadd.f32 %v4283, %v5558
      %v5657 = vadd.f32 %v4284, %v5559
      %v5658 = vadd.f32 %v4285, %v5560
      %v5659 = vadd.f32 %v4286, %v5561
      %v5660 = vadd.f32 %v4287, %v5562
      %v5661 = vadd.f32 %v4288, %v5563
      %v5662 = vadd.f32 %v4289, %v5564
      %v5663 = vadd.f32 %v4290, %v5565
      %v5664 = vadd.f32 %v4291, %v5566
      %v5665 = vadd.f32 %v4292, %v5567
      %v5666 = vadd.f32 %v4293, %v5568
      %v5667 = vadd.f32 %v4294, %v5569
      %v5668 = vadd.f32 %v4295, %v5570
      %v5669 = vadd.f32 %v4296, %v5571
      %v5670 = vadd.f32 %v4297, %v5572
      %v5671 = vadd.f32 %v4298, %v5573
      %v5672 = vadd.f32 %v4299, %v5574
      %v5673 = vadd.f32 %v4300, %v5575
      %v5674 = vadd.f32 %v4301, %v5576
      %v5675 = vadd.f32 %v4302, %v5577
      %v5676 = vadd.f32 %v4303, %v5578
      %v5677 = vadd.f32 %v4304, %v5579
      %v5678 = vadd.f32 %v4305, %v5580
      %v5679 = vadd.f32 %v4306, %v5581
      %v5680 = vadd.f32 %v4307, %v5582
      %v5681 = vadd.f32 %v4308, %v5583
      %v5682 = vmul.f32 %v2926, %v5584
      %v5683 = vmul.f32 %v2927, %v5585
      %v5684 = vmul.f32 %v2928, %v5586
      %v5685 = vmul.f32 %v2929, %v5587
      %v5686 = vmul.f32 %v2930, %v5588
      %v5687 = vmul.f32 %v2931, %v5589
      %v5688 = vmul.f32 %v2932, %v5590
      %v5689 = vmul.f32 %v2933, %v5591
      %v5690 = vmul.f32 %v2934, %v5592
      %v5691 = vmul.f32 %v2935, %v5593
      %v5692 = vmul.f32 %v2936, %v5594
      %v5693 = vmul.f32 %v2937, %v5595
      %v5694 = vmul.f32 %v2938, %v5596
      %v5695 = vmul.f32 %v2939, %v5597
      %v5696 = vmul.f32 %v2940, %v5598
      %v5697 = vmul.f32 %v2941, %v5599
      %v5698 = vmul.f32 %v2942, %v5600
      %v5699 = vmul.f32 %v2943, %v5601
      %v5700 = vmul.f32 %v2944, %v5602
      %v5701 = vmul.f32 %v2945, %v5603
      %v5702 = vmul.f32 %v2946, %v5604
      %v5703 = vmul.f32 %v2947, %v5605
      %v5704 = vmul.f32 %v2948, %v5606
      %v5705 = vmul.f32 %v2949, %v5607
      %v5706 = vmul.f32 %v2950, %v5608
      %v5707 = vmul.f32 %v2951, %v5609
      %v5708 = vmul.f32 %v2952, %v5610
      %v5709 = vmul.f32 %v2953, %v5611
      %v5710 = vmul.f32 %v2954, %v5612
      %v5711 = vmul.f32 %v2955, %v5613
      %v5712 = vmul.f32 %v2956, %v5614
      %v5713 = vmul.f32 %v2957, %v5615
      %v5714 = vmul.f32 %v2958, %v5616
      %v5715 = vmul.f32 %v2959, %v5617
      %v5716 = vmul.f32 %v2960, %v5618
      %v5717 = vmul.f32 %v2961, %v5619
      %v5718 = vmul.f32 %v2962, %v5620
      %v5719 = vmul.f32 %v2963, %v5621
      %v5720 = vmul.f32 %v2964, %v5622
      %v5721 = vmul.f32 %v2965, %v5623
      %v5722 = vmul.f32 %v2966, %v5624
      %v5723 = vmul.f32 %v2967, %v5625
      %v5724 = vmul.f32 %v2968, %v5626
      %v5725 = vmul.f32 %v2969, %v5627
      %v5726 = vmul.f32 %v2970, %v5628
      %v5727 = vmul.f32 %v2971, %v5629
      %v5728 = vmul.f32 %v2972, %v5630
      %v5729 = vmul.f32 %v2973, %v5631
      %v5730 = vmul.f32 %v2974, %v5632
      %v5731 = vmul.f32 %v2975, %v5633
      %v5732 = vmul.f32 %v2976, %v5634
      %v5733 = vmul.f32 %v2977, %v5635
      %v5734 = vmul.f32 %v2978, %v5636
      %v5735 = vmul.f32 %v2979, %v5637
      %v5736 = vmul.f32 %v2980, %v5638
      %v5737 = vmul.f32 %v2981, %v5639
      %v5738 = vmul.f32 %v2982, %v5640
      %v5739 = vmul.f32 %v2983, %v5641
      %v5740 = vmul.f32 %v2984, %v5642
      %v5741 = vmul.f32 %v2985, %v5643
      %v5742 = vmul.f32 %v2986, %v5644
      %v5743 = vmul.f32 %v2987, %v5645
      %v5744 = vmul.f32 %v2988, %v5646
      %v5745 = vmul.f32 %v2989, %v5647
      %v5746 = vmul.f32 %v2990, %v5648
      %v5747 = vmul.f32 %v2991, %v5649
      %v5748 = vmul.f32 %v2992, %v5650
      %v5749 = vmul.f32 %v2993, %v5651
      %v5750 = vmul.f32 %v2994, %v5652
      %v5751 = vmul.f32 %v2995, %v5653
      %v5752 = vmul.f32 %v2996, %v5654
      %v5753 = vmul.f32 %v2997, %v5655
      %v5754 = vmul.f32 %v2998, %v5656
      %v5755 = vmul.f32 %v2999, %v5657
      %v5756 = vmul.f32 %v3000, %v5658
      %v5757 = vmul.f32 %v3001, %v5659
      %v5758 = vmul.f32 %v3002, %v5660
      %v5759 = vmul.f32 %v3003, %v5661
      %v5760 = vmul.f32 %v3004, %v5662
      %v5761 = vmul.f32 %v3005, %v5663
      %v5762 = vmul.f32 %v3006, %v5664
      %v5763 = vmul.f32 %v3007, %v5665
      %v5764 = vmul.f32 %v3008, %v5666
      %v5765 = vmul.f32 %v3009, %v5667
      %v5766 = vmul.f32 %v3010, %v5668
      %v5767 = vmul.f32 %v3011, %v5669
      %v5768 = vmul.f32 %v3012, %v5670
      %v5769 = vmul.f32 %v3013, %v5671
      %v5770 = vmul.f32 %v3014, %v5672
      %v5771 = vmul.f32 %v3015, %v5673
      %v5772 = vmul.f32 %v3016, %v5674
      %v5773 = vmul.f32 %v3017, %v5675
      %v5774 = vmul.f32 %v3018, %v5676
      %v5775 = vmul.f32 %v3019, %v5677
      %v5776 = vmul.f32 %v3020, %v5678
      %v5777 = vmul.f32 %v3021, %v5679
      %v5778 = vmul.f32 %v3022, %v5680
      %v5779 = vmul.f32 %v3023, %v5681
      %v5780 = vpack.c.bf16 %v5684, %v5682
      %v5781 = vpack.c.bf16 %v5685, %v5683
      %v5782 = vpack.c.bf16 %v5688, %v5686
      %v5783 = vpack.c.bf16 %v5689, %v5687
      %v5784 = vpack.c.bf16 %v5692, %v5690
      %v5785 = vpack.c.bf16 %v5693, %v5691
      %v5786 = vpack.c.bf16 %v5696, %v5694
      %v5787 = vpack.c.bf16 %v5697, %v5695
      %v5788 = vpack.c.bf16 %v5700, %v5698
      %v5789 = vpack.c.bf16 %v5701, %v5699
      %v5790 = vpack.c.bf16 %v5704, %v5702
      %v5791 = vpack.c.bf16 %v5705, %v5703
      %v5792 = vpack.c.bf16 %v5708, %v5706
      %v5793 = vpack.c.bf16 %v5709, %v5707
      %v5794 = vpack.c.bf16 %v5712, %v5710
      %v5795 = vpack.c.bf16 %v5713, %v5711
      %v5796 = vpack.c.bf16 %v5716, %v5714
      %v5797 = vpack.c.bf16 %v5717, %v5715
      %v5798 = vpack.c.bf16 %v5720, %v5718
      %v5799 = vpack.c.bf16 %v5721, %v5719
      %v5800 = vpack.c.bf16 %v5724, %v5722
      %v5801 = vpack.c.bf16 %v5725, %v5723
      %v5802 = vpack.c.bf16 %v5728, %v5726
      %v5803 = vpack.c.bf16 %v5729, %v5727
      %v5804 = vpack.c.bf16 %v5732, %v5730
      %v5805 = vpack.c.bf16 %v5733, %v5731
      %v5806 = vpack.c.bf16 %v5736, %v5734
      %v5807 = vpack.c.bf16 %v5737, %v5735
      %v5808 = vpack.c.bf16 %v5740, %v5738
      %v5809 = vpack.c.bf16 %v5741, %v5739
      %v5810 = vpack.c.bf16 %v5744, %v5742
      %v5811 = vpack.c.bf16 %v5745, %v5743
      %v5812 = vpack.c.bf16 %v5748, %v5746
      %v5813 = vpack.c.bf16 %v5749, %v5747
      %v5814 = vpack.c.bf16 %v5752, %v5750
      %v5815 = vpack.c.bf16 %v5753, %v5751
      %v5816 = vpack.c.bf16 %v5756, %v5754
      %v5817 = vpack.c.bf16 %v5757, %v5755
      %v5818 = vpack.c.bf16 %v5760, %v5758
      %v5819 = vpack.c.bf16 %v5761, %v5759
      %v5820 = vpack.c.bf16 %v5764, %v5762
      %v5821 = vpack.c.bf16 %v5765, %v5763
      %v5822 = vpack.c.bf16 %v5768, %v5766
      %v5823 = vpack.c.bf16 %v5769, %v5767
      %v5824 = vpack.c.bf16 %v5772, %v5770
      %v5825 = vpack.c.bf16 %v5773, %v5771
      %v5826 = vpack.c.bf16 %v5776, %v5774
      %v5827 = vpack.c.bf16 %v5777, %v5775
      %v5828 = vpack.c.bf16 %v5778, %v5778
      %v5829 = vpack.c.bf16 %v5779, %v5779
      %v5830 = vld [vmem:[%s249] sm:$0xf]
      %v5831 = vld [vmem:[%s249 + $0x4] sm:$0xf]
      %v5832 = vld [vmem:[%s249 + $0x8] sm:$0xf]
      %v5833 = vld [vmem:[%s249 + $0xc] sm:$0xf]
      %v5834 = vld [vmem:[%s249 + $0x10] sm:$0xf]
      %v5835 = vld [vmem:[%s249 + $0x14] sm:$0xf]
      %v5836 = vld [vmem:[%s249 + $0x18] sm:$0xf]
      %v5837 = vld [vmem:[%s249 + $0x1c] sm:$0xf]
      %v5838 = vld [vmem:[%s249 + $0x20] sm:$0xf]
      %v5839 = vld [vmem:[%s249 + $0x24] sm:$0xf]
      %v5840 = vld [vmem:[%s249 + $0x28] sm:$0xf]
      %v5841 = vld [vmem:[%s249 + $0x2c] sm:$0xf]
      %v5842 = vld [vmem:[%s249 + $0x30] sm:$0xf]
      %v5843 = vld [vmem:[%s249 + $0x34] sm:$0xf]
      %v5844 = vld [vmem:[%s249 + $0x38] sm:$0xf]
      %v5845 = vld [vmem:[%s249 + $0x3c] sm:$0xf]
      %v5846 = vld [vmem:[%s249 + $0x40] sm:$0xf]
      %v5847 = vld [vmem:[%s249 + $0x44] sm:$0xf]
      %v5848 = vld [vmem:[%s249 + $0x48] sm:$0xf]
      %v5849 = vld [vmem:[%s249 + $0x4c] sm:$0xf]
      %v5850 = vld [vmem:[%s249 + $0x50] sm:$0xf]
      %v5851 = vld [vmem:[%s249 + $0x54] sm:$0xf]
      %v5852 = vld [vmem:[%s249 + $0x58] sm:$0xf]
      %v5853 = vld [vmem:[%s249 + $0x5c] sm:$0xf]
      %v5854 = vld [vmem:[%s249 + $0x60] sm:$0xf]
      %v5855 = vld [vmem:[%s249 + $0x64] sm:$0xf]
      %v5856 = vld [vmem:[%s249 + $0x68] sm:$0xf]
      %v5857 = vld [vmem:[%s249 + $0x6c] sm:$0xf]
      %v5858 = vld [vmem:[%s249 + $0x70] sm:$0xf]
      %v5859 = vld [vmem:[%s249 + $0x74] sm:$0xf]
      %v5860 = vld [vmem:[%s249 + $0x78] sm:$0xf]
      %v5861 = vld [vmem:[%s249 + $0x7c] sm:$0xf]
      %v5894 = vunpack.c.l.b16 %v5830
      %v5895 = vunpack.c.l.b16 %v5831
      %v5896 = vunpack.c.l.b16 %v5832
      %v5897 = vunpack.c.l.b16 %v5833
      %v5898 = vunpack.c.l.b16 %v5834
      %v5899 = vunpack.c.l.b16 %v5835
      %v5900 = vunpack.c.l.b16 %v5836
      %v5901 = vunpack.c.l.b16 %v5837
      %v5902 = vunpack.c.l.b16 %v5838
      %v5903 = vunpack.c.l.b16 %v5839
      %v5904 = vunpack.c.l.b16 %v5840
      %v5905 = vunpack.c.l.b16 %v5841
      %v5906 = vunpack.c.l.b16 %v5842
      %v5907 = vunpack.c.l.b16 %v5843
      %v5908 = vunpack.c.l.b16 %v5844
      %v5909 = vunpack.c.l.b16 %v5845
      %v5910 = vunpack.c.l.b16 %v5846
      %v5911 = vunpack.c.l.b16 %v5847
      %v5912 = vunpack.c.l.b16 %v5848
      %v5913 = vunpack.c.l.b16 %v5849
      %v5914 = vunpack.c.l.b16 %v5850
      %v5915 = vunpack.c.l.b16 %v5851
      %v5916 = vunpack.c.l.b16 %v5852
      %v5917 = vunpack.c.l.b16 %v5853
      %v5918 = vunpack.c.l.b16 %v5854
      %v5919 = vunpack.c.l.b16 %v5855
      %v5920 = vunpack.c.l.b16 %v5856
      %v5921 = vunpack.c.l.b16 %v5857
      %v5922 = vunpack.c.l.b16 %v5858
      %v5923 = vunpack.c.l.b16 %v5859
      %v5924 = vunpack.c.l.b16 %v5860
      %v5925 = vunpack.c.l.b16 %v5861
      %v5926 = vpack.c.b16 %v5895, %v5894
      %v5927 = vpack.c.b16 %v5897, %v5896
      %v5928 = vpack.c.b16 %v5899, %v5898
      %v5929 = vpack.c.b16 %v5901, %v5900
      %v5930 = vpack.c.b16 %v5903, %v5902
      %v5931 = vpack.c.b16 %v5905, %v5904
      %v5932 = vpack.c.b16 %v5907, %v5906
      %v5933 = vpack.c.b16 %v5909, %v5908
      %v5934 = vpack.c.b16 %v5911, %v5910
      %v5935 = vpack.c.b16 %v5913, %v5912
      %v5936 = vpack.c.b16 %v5915, %v5914
      %v5937 = vpack.c.b16 %v5917, %v5916
      %v5938 = vpack.c.b16 %v5919, %v5918
      %v5939 = vpack.c.b16 %v5921, %v5920
      %v5940 = vpack.c.b16 %v5923, %v5922
      %v5941 = vpack.c.b16 %v5925, %v5924
      %5958 = vmatprep.subr.bf16.mxu0 0
      %5959 = vmatpush1.bf16.msra.mxu0 %v5926
      %5960 = vmatprep.subr.bf16.mxu0 0
      %5961 = vmatpush1.bf16.msra.mxu0 %v5927
      %5962 = vmatprep.subr.bf16.mxu0 0
      %5963 = vmatpush1.bf16.msra.mxu0 %v5928
      %5964 = vmatprep.subr.bf16.mxu0 0
      %5965 = vmatpush1.bf16.msra.mxu0 %v5929
      %5966 = vmatprep.subr.bf16.mxu0 0
      %5967 = vmatpush1.bf16.msra.mxu0 %v5930
      %5968 = vmatprep.subr.bf16.mxu0 0
      %5969 = vmatpush1.bf16.msra.mxu0 %v5931
      %5970 = vmatprep.subr.bf16.mxu0 0
      %5971 = vmatpush1.bf16.msra.mxu0 %v5932
      %5972 = vmatprep.subr.bf16.mxu0 0
      %5973 = vmatpush1.bf16.msra.mxu0 %v5933
      %5974 = vmatprep.subr.bf16.mxu0 0
      %5975 = vmatpush1.bf16.msra.mxu0 %v5934
      %5976 = vmatprep.subr.bf16.mxu0 0
      %5977 = vmatpush1.bf16.msra.mxu0 %v5935
      %5978 = vmatprep.subr.bf16.mxu0 0
      %5979 = vmatpush1.bf16.msra.mxu0 %v5936
      %5980 = vmatprep.subr.bf16.mxu0 0
      %5981 = vmatpush1.bf16.msra.mxu0 %v5937
      %5982 = vmatprep.subr.bf16.mxu0 0
      %5983 = vmatpush1.bf16.msra.mxu0 %v5938
      %5984 = vmatprep.subr.bf16.mxu0 0
      %5985 = vmatpush1.bf16.msra.mxu0 %v5939
      %5986 = vmatprep.subr.bf16.mxu0 0
      %5987 = vmatpush1.bf16.msra.mxu0 %v5940
      %5988 = vmatprep.subr.bf16.mxu0 0
      %5989 = vmatpush1.bf16.msra.mxu0 %v5941
      %5990 = vmatprep.mubr.bf16.mxu0 %v5781
      %5991 = vmatmul.mubr.bf16.gmra.mrb[0].mxu0 %v5780
      %v5992 = vpop.f32.mrb[0].mxu0
      %v5993 = vadd.f32 0.0, %v5992
      %v5994 = vpop.f32.mrb[0].mxu0
      %v5995 = vpop.f32.mrb[0].mxu0
      %v5996 = vadd.f32 0.0, %v5995
      %v5997 = vpop.f32.mrb[0].mxu0
      %5998 = vmatprep.mubr.bf16.mxu0 %v5783
      %5999 = vmatmul.mubr.bf16.gmra.mrb[0].mxu0 %v5782
      %v6000 = vpop.f32.mrb[0].mxu0
      %v6001 = vadd.f32 0.0, %v6000
      %v6002 = vpop.f32.mrb[0].mxu0
      %v6003 = vpop.f32.mrb[0].mxu0
      %v6004 = vadd.f32 0.0, %v6003
      %v6005 = vpop.f32.mrb[0].mxu0
      %6006 = vmatprep.mubr.bf16.mxu0 %v5785
      %6007 = vmatmul.mubr.bf16.gmra.mrb[0].mxu0 %v5784
      %v6008 = vpop.f32.mrb[0].mxu0
      %v6009 = vadd.f32 0.0, %v6008
      %v6010 = vpop.f32.mrb[0].mxu0
      %v6011 = vpop.f32.mrb[0].mxu0
      %v6012 = vadd.f32 0.0, %v6011
      %v6013 = vpop.f32.mrb[0].mxu0
      %6014 = vmatprep.mubr.bf16.mxu0 %v5787
      %6015 = vmatmul.mubr.bf16.gmra.mrb[0].mxu0 %v5786
      %v6016 = vpop.f32.mrb[0].mxu0
      %v6017 = vadd.f32 0.0, %v6016
      %v6018 = vpop.f32.mrb[0].mxu0
      %v6019 = vpop.f32.mrb[0].mxu0
      %v6020 = vadd.f32 0.0, %v6019
      %v6021 = vpop.f32.mrb[0].mxu0
      %6022 = vmatprep.mubr.bf16.mxu0 %v5789
      %6023 = vmatmul.mubr.bf16.gmra.mrb[0].mxu0 %v5788
      %v6024 = vpop.f32.mrb[0].mxu0
      %v6025 = vadd.f32 0.0, %v6024
      %v6026 = vpop.f32.mrb[0].mxu0
      %v6027 = vpop.f32.mrb[0].mxu0
      %v6028 = vadd.f32 0.0, %v6027
      %v6029 = vpop.f32.mrb[0].mxu0
      %6030 = vmatprep.mubr.bf16.mxu0 %v5791
      %6031 = vmatmul.mubr.bf16.gmra.mrb[0].mxu0 %v5790
      %v6032 = vpop.f32.mrb[0].mxu0
      %v6033 = vadd.f32 0.0, %v6032
      %v6034 = vpop.f32.mrb[0].mxu0
      %v6035 = vpop.f32.mrb[0].mxu0
      %v6036 = vadd.f32 0.0, %v6035
      %v6037 = vpop.f32.mrb[0].mxu0
      %6038 = vmatprep.mubr.bf16.mxu0 %v5793
      %6039 = vmatmul.mubr.bf16.gmra.mrb[0].mxu0 %v5792
      %v6040 = vpop.f32.mrb[0].mxu0
      %v6041 = vadd.f32 0.0, %v6040
      %v6042 = vpop.f32.mrb[0].mxu0
      %v6043 = vpop.f32.mrb[0].mxu0
      %v6044 = vadd.f32 0.0, %v6043
      %v6045 = vpop.f32.mrb[0].mxu0
      %6046 = vmatprep.mubr.bf16.mxu0 %v5795
      %6047 = vmatmul.mubr.bf16.gmra.mrb[0].mxu0 %v5794
      %v6048 = vpop.f32.mrb[0].mxu0
      %v6049 = vadd.f32 0.0, %v6048
      %v6050 = vpop.f32.mrb[0].mxu0
      %v6051 = vpop.f32.mrb[0].mxu0
      %v6052 = vadd.f32 0.0, %v6051
      %v6053 = vpop.f32.mrb[0].mxu0
      %6054 = vmatprep.mubr.bf16.mxu0 %v5797
      %6055 = vmatmul.mubr.bf16.gmra.mrb[0].mxu0 %v5796
      %v6056 = vpop.f32.mrb[0].mxu0
      %v6057 = vadd.f32 0.0, %v6056
      %v6058 = vpop.f32.mrb[0].mxu0
      %v6059 = vpop.f32.mrb[0].mxu0
      %v6060 = vadd.f32 0.0, %v6059
      %v6061 = vpop.f32.mrb[0].mxu0
      %6062 = vmatprep.mubr.bf16.mxu0 %v5799
      %6063 = vmatmul.mubr.bf16.gmra.mrb[0].mxu0 %v5798
      %v6064 = vpop.f32.mrb[0].mxu0
      %v6065 = vadd.f32 0.0, %v6064
      %v6066 = vpop.f32.mrb[0].mxu0
      %v6067 = vpop.f32.mrb[0].mxu0
      %v6068 = vadd.f32 0.0, %v6067
      %v6069 = vpop.f32.mrb[0].mxu0
      %6070 = vmatprep.mubr.bf16.mxu0 %v5801
      %6071 = vmatmul.mubr.bf16.gmra.mrb[0].mxu0 %v5800
      %v6072 = vpop.f32.mrb[0].mxu0
      %v6073 = vadd.f32 0.0, %v6072
      %v6074 = vpop.f32.mrb[0].mxu0
      %v6075 = vpop.f32.mrb[0].mxu0
      %v6076 = vadd.f32 0.0, %v6075
      %v6077 = vpop.f32.mrb[0].mxu0
      %6078 = vmatprep.mubr.bf16.mxu0 %v5803
      %6079 = vmatmul.mubr.bf16.gmra.mrb[0].mxu0 %v5802
      %v6080 = vpop.f32.mrb[0].mxu0
      %v6081 = vadd.f32 0.0, %v6080
      %v6082 = vpop.f32.mrb[0].mxu0
      %v6083 = vpop.f32.mrb[0].mxu0
      %v6084 = vadd.f32 0.0, %v6083
      %v6085 = vpop.f32.mrb[0].mxu0
      %6086 = vmatprep.mubr.bf16.mxu0 %v5805
      %6087 = vmatmul.mubr.bf16.gmra.mrb[0].mxu0 %v5804
      %v6088 = vpop.f32.mrb[0].mxu0
      %v6089 = vadd.f32 0.0, %v6088
      %v6090 = vpop.f32.mrb[0].mxu0
      %v6091 = vpop.f32.mrb[0].mxu0
      %v6092 = vadd.f32 0.0, %v6091
      %v6093 = vpop.f32.mrb[0].mxu0
      %6094 = vmatprep.mubr.bf16.mxu0 %v5807
      %6095 = vmatmul.mubr.bf16.gmra.mrb[0].mxu0 %v5806
      %v6096 = vpop.f32.mrb[0].mxu0
      %v6097 = vadd.f32 0.0, %v6096
      %v6098 = vpop.f32.mrb[0].mxu0
      %v6099 = vpop.f32.mrb[0].mxu0
      %v6100 = vadd.f32 0.0, %v6099
      %v6101 = vpop.f32.mrb[0].mxu0
      %6102 = vmatprep.mubr.bf16.mxu0 %v5809
      %6103 = vmatmul.mubr.bf16.gmra.mrb[0].mxu0 %v5808
      %v6104 = vpop.f32.mrb[0].mxu0
      %v6105 = vadd.f32 0.0, %v6104
      %v6106 = vpop.f32.mrb[0].mxu0
      %v6107 = vpop.f32.mrb[0].mxu0
      %v6108 = vadd.f32 0.0, %v6107
      %v6109 = vpop.f32.mrb[0].mxu0
      %6110 = vmatprep.mubr.bf16.mxu0 %v5811
      %6111 = vmatmul.mubr.bf16.gmra.mrb[0].mxu0 %v5810
      %v6112 = vpop.f32.mrb[0].mxu0
      %v6113 = vadd.f32 0.0, %v6112
      %v6114 = vpop.f32.mrb[0].mxu0
      %v6115 = vpop.f32.mrb[0].mxu0
      %v6116 = vadd.f32 0.0, %v6115
      %v6117 = vpop.f32.mrb[0].mxu0
      %6118 = vmatprep.mubr.bf16.mxu0 %v5813
      %6119 = vmatmul.mubr.bf16.gmra.mrb[0].mxu0 %v5812
      %v6120 = vpop.f32.mrb[0].mxu0
      %v6121 = vadd.f32 0.0, %v6120
      %v6122 = vpop.f32.mrb[0].mxu0
      %v6123 = vpop.f32.mrb[0].mxu0
      %v6124 = vadd.f32 0.0, %v6123
      %v6125 = vpop.f32.mrb[0].mxu0
      %6126 = vmatprep.mubr.bf16.mxu0 %v5815
      %6127 = vmatmul.mubr.bf16.gmra.mrb[0].mxu0 %v5814
      %v6128 = vpop.f32.mrb[0].mxu0
      %v6129 = vadd.f32 0.0, %v6128
      %v6130 = vpop.f32.mrb[0].mxu0
      %v6131 = vpop.f32.mrb[0].mxu0
      %v6132 = vadd.f32 0.0, %v6131
      %v6133 = vpop.f32.mrb[0].mxu0
      %6134 = vmatprep.mubr.bf16.mxu0 %v5817
      %6135 = vmatmul.mubr.bf16.gmra.mrb[0].mxu0 %v5816
      %v6136 = vpop.f32.mrb[0].mxu0
      %v6137 = vadd.f32 0.0, %v6136
      %v6138 = vpop.f32.mrb[0].mxu0
      %v6139 = vpop.f32.mrb[0].mxu0
      %v6140 = vadd.f32 0.0, %v6139
      %v6141 = vpop.f32.mrb[0].mxu0
      %6142 = vmatprep.mubr.bf16.mxu0 %v5819
      %6143 = vmatmul.mubr.bf16.gmra.mrb[0].mxu0 %v5818
      %v6144 = vpop.f32.mrb[0].mxu0
      %v6145 = vadd.f32 0.0, %v6144
      %v6146 = vpop.f32.mrb[0].mxu0
      %v6147 = vpop.f32.mrb[0].mxu0
      %v6148 = vadd.f32 0.0, %v6147
      %v6149 = vpop.f32.mrb[0].mxu0
      %6150 = vmatprep.mubr.bf16.mxu0 %v5821
      %6151 = vmatmul.mubr.bf16.gmra.mrb[0].mxu0 %v5820
      %v6152 = vpop.f32.mrb[0].mxu0
      %v6153 = vadd.f32 0.0, %v6152
      %v6154 = vpop.f32.mrb[0].mxu0
      %v6155 = vpop.f32.mrb[0].mxu0
      %v6156 = vadd.f32 0.0, %v6155
      %v6157 = vpop.f32.mrb[0].mxu0
      %6158 = vmatprep.mubr.bf16.mxu0 %v5823
      %6159 = vmatmul.mubr.bf16.gmra.mrb[0].mxu0 %v5822
      %v6160 = vpop.f32.mrb[0].mxu0
      %v6161 = vadd.f32 0.0, %v6160
      %v6162 = vpop.f32.mrb[0].mxu0
      %v6163 = vpop.f32.mrb[0].mxu0
      %v6164 = vadd.f32 0.0, %v6163
      %v6165 = vpop.f32.mrb[0].mxu0
      %6166 = vmatprep.mubr.bf16.mxu0 %v5825
      %6167 = vmatmul.mubr.bf16.gmra.mrb[0].mxu0 %v5824
      %v6168 = vpop.f32.mrb[0].mxu0
      %v6169 = vadd.f32 0.0, %v6168
      %v6170 = vpop.f32.mrb[0].mxu0
      %v6171 = vpop.f32.mrb[0].mxu0
      %v6172 = vadd.f32 0.0, %v6171
      %v6173 = vpop.f32.mrb[0].mxu0
      %6174 = vmatprep.mubr.bf16.mxu0 %v5827
      %6175 = vmatmul.mubr.bf16.gmra.mrb[0].mxu0 %v5826
      %v6176 = vpop.f32.mrb[0].mxu0
      %v6177 = vadd.f32 0.0, %v6176
      %v6178 = vpop.f32.mrb[0].mxu0
      %v6179 = vpop.f32.mrb[0].mxu0
      %v6180 = vadd.f32 0.0, %v6179
      %v6181 = vpop.f32.mrb[0].mxu0
      %6182 = vmatprep.mubr.bf16.mxu0 %v5829
      %6183 = vmatmul.mubr.bf16.gmra.mrb[0].mxu0 %v5828
      %v6184 = vpop.f32.mrb[0].mxu0
      %v6185 = vadd.f32 0.0, %v6184
      %v6186 = vpop.f32.mrb[0].mxu0
      %v6187 = vpop.f32.mrb[0].mxu0
      %v6188 = vpop.f32.mrb[0].mxu0
      %6189 = vdwg.mxu0
      %v6190 = vpack.c.bf16 %v5996, %v5993
      %v6191 = vpack.c.bf16 %v6004, %v6001
      %v6192 = vpack.c.bf16 %v6012, %v6009
      %v6193 = vpack.c.bf16 %v6020, %v6017
      %v6194 = vpack.c.bf16 %v6028, %v6025
      %v6195 = vpack.c.bf16 %v6036, %v6033
      %v6196 = vpack.c.bf16 %v6044, %v6041
      %v6197 = vpack.c.bf16 %v6052, %v6049
      %v6198 = vpack.c.bf16 %v6060, %v6057
      %v6199 = vpack.c.bf16 %v6068, %v6065
      %v6200 = vpack.c.bf16 %v6076, %v6073
      %v6201 = vpack.c.bf16 %v6084, %v6081
      %v6202 = vpack.c.bf16 %v6092, %v6089
      %v6203 = vpack.c.bf16 %v6100, %v6097
      %v6204 = vpack.c.bf16 %v6108, %v6105
      %v6205 = vpack.c.bf16 %v6116, %v6113
      %v6206 = vpack.c.bf16 %v6124, %v6121
      %v6207 = vpack.c.bf16 %v6132, %v6129
      %v6208 = vpack.c.bf16 %v6140, %v6137
      %v6209 = vpack.c.bf16 %v6148, %v6145
      %v6210 = vpack.c.bf16 %v6156, %v6153
      %v6211 = vpack.c.bf16 %v6164, %v6161
      %v6212 = vpack.c.bf16 %v6172, %v6169
      %v6213 = vpack.c.bf16 %v6180, %v6177
      %v6214 = vpack.c.bf16 %v6185, %v6185
      %v6240 = vunpack.c.l.b16 %v6190
      %v6241 = vunpack.c.h.b16 %v6190
      %v6242 = vunpack.c.l.b16 %v6191
      %v6243 = vunpack.c.h.b16 %v6191
      %v6244 = vunpack.c.l.b16 %v6192
      %v6245 = vunpack.c.h.b16 %v6192
      %v6246 = vunpack.c.l.b16 %v6193
      %v6247 = vunpack.c.h.b16 %v6193
      %v6248 = vunpack.c.l.b16 %v6194
      %v6249 = vunpack.c.h.b16 %v6194
      %v6250 = vunpack.c.l.b16 %v6195
      %v6251 = vunpack.c.h.b16 %v6195
      %v6252 = vunpack.c.l.b16 %v6196
      %v6253 = vunpack.c.h.b16 %v6196
      %v6254 = vunpack.c.l.b16 %v6197
      %v6255 = vunpack.c.h.b16 %v6197
      %v6256 = vunpack.c.l.b16 %v6198
      %v6257 = vunpack.c.h.b16 %v6198
      %v6258 = vunpack.c.l.b16 %v6199
      %v6259 = vunpack.c.h.b16 %v6199
      %v6260 = vunpack.c.l.b16 %v6200
      %v6261 = vunpack.c.h.b16 %v6200
      %v6262 = vunpack.c.l.b16 %v6201
      %v6263 = vunpack.c.h.b16 %v6201
      %v6264 = vunpack.c.l.b16 %v6202
      %v6265 = vunpack.c.h.b16 %v6202
      %v6266 = vunpack.c.l.b16 %v6203
      %v6267 = vunpack.c.h.b16 %v6203
      %v6268 = vunpack.c.l.b16 %v6204
      %v6269 = vunpack.c.h.b16 %v6204
      %v6270 = vunpack.c.l.b16 %v6205
      %v6271 = vunpack.c.h.b16 %v6205
      %v6272 = vunpack.c.l.b16 %v6206
      %v6273 = vunpack.c.h.b16 %v6206
      %v6274 = vunpack.c.l.b16 %v6207
      %v6275 = vunpack.c.h.b16 %v6207
      %v6276 = vunpack.c.l.b16 %v6208
      %v6277 = vunpack.c.h.b16 %v6208
      %v6278 = vunpack.c.l.b16 %v6209
      %v6279 = vunpack.c.h.b16 %v6209
      %v6280 = vunpack.c.l.b16 %v6210
      %v6281 = vunpack.c.h.b16 %v6210
      %v6282 = vunpack.c.l.b16 %v6211
      %v6283 = vunpack.c.h.b16 %v6211
      %v6284 = vunpack.c.l.b16 %v6212
      %v6285 = vunpack.c.h.b16 %v6212
      %v6286 = vunpack.c.l.b16 %v6213
      %v6287 = vunpack.c.h.b16 %v6213
      %v6288 = vunpack.c.l.b16 %v6214
      %v6289 = vpack.c.b16 %v6240, %v6240
      %v6290 = vpack.c.b16 %v6241, %v6241
      %v6291 = vpack.c.b16 %v6242, %v6242
      %v6292 = vpack.c.b16 %v6243, %v6243
      %v6293 = vpack.c.b16 %v6244, %v6244
      %v6294 = vpack.c.b16 %v6245, %v6245
      %v6295 = vpack.c.b16 %v6246, %v6246
      %v6296 = vpack.c.b16 %v6247, %v6247
      %v6297 = vpack.c.b16 %v6248, %v6248
      %v6298 = vpack.c.b16 %v6249, %v6249
      %v6299 = vpack.c.b16 %v6250, %v6250
      %v6300 = vpack.c.b16 %v6251, %v6251
      %v6301 = vpack.c.b16 %v6252, %v6252
      %v6302 = vpack.c.b16 %v6253, %v6253
      %v6303 = vpack.c.b16 %v6254, %v6254
      %v6304 = vpack.c.b16 %v6255, %v6255
      %v6305 = vpack.c.b16 %v6256, %v6256
      %v6306 = vpack.c.b16 %v6257, %v6257
      %v6307 = vpack.c.b16 %v6258, %v6258
      %v6308 = vpack.c.b16 %v6259, %v6259
      %v6309 = vpack.c.b16 %v6260, %v6260
      %v6310 = vpack.c.b16 %v6261, %v6261
      %v6311 = vpack.c.b16 %v6262, %v6262
      %v6312 = vpack.c.b16 %v6263, %v6263
      %v6313 = vpack.c.b16 %v6264, %v6264
      %v6314 = vpack.c.b16 %v6265, %v6265
      %v6315 = vpack.c.b16 %v6266, %v6266
      %v6316 = vpack.c.b16 %v6267, %v6267
      %v6317 = vpack.c.b16 %v6268, %v6268
      %v6318 = vpack.c.b16 %v6269, %v6269
      %v6319 = vpack.c.b16 %v6270, %v6270
      %v6320 = vpack.c.b16 %v6271, %v6271
      %v6321 = vpack.c.b16 %v6272, %v6272
      %v6322 = vpack.c.b16 %v6273, %v6273
      %v6323 = vpack.c.b16 %v6274, %v6274
      %v6324 = vpack.c.b16 %v6275, %v6275
      %v6325 = vpack.c.b16 %v6276, %v6276
      %v6326 = vpack.c.b16 %v6277, %v6277
      %v6327 = vpack.c.b16 %v6278, %v6278
      %v6328 = vpack.c.b16 %v6279, %v6279
      %v6329 = vpack.c.b16 %v6280, %v6280
      %v6330 = vpack.c.b16 %v6281, %v6281
      %v6331 = vpack.c.b16 %v6282, %v6282
      %v6332 = vpack.c.b16 %v6283, %v6283
      %v6333 = vpack.c.b16 %v6284, %v6284
      %v6334 = vpack.c.b16 %v6285, %v6285
      %v6335 = vpack.c.b16 %v6286, %v6286
      %v6336 = vpack.c.b16 %v6287, %v6287
      %v6337 = vpack.c.b16 %v6288, %v6288
      %vm6387 = vcmask 519168
      %6388 = vst.msk [vmem:[%s264] sm:$0xf] %vm6387, %v6289
      %6389 = vst.msk [vmem:[%s264 + $0x4] sm:$0xf] %vm6387, %v6290
      %6390 = vst.msk [vmem:[%s264 + $0x8] sm:$0xf] %vm6387, %v6291
      %6391 = vst.msk [vmem:[%s264 + $0xc] sm:$0xf] %vm6387, %v6292
      %6392 = vst.msk [vmem:[%s264 + $0x10] sm:$0xf] %vm6387, %v6293
      %6393 = vst.msk [vmem:[%s264 + $0x14] sm:$0xf] %vm6387, %v6294
      %6394 = vst.msk [vmem:[%s264 + $0x18] sm:$0xf] %vm6387, %v6295
      %6395 = vst.msk [vmem:[%s264 + $0x1c] sm:$0xf] %vm6387, %v6296
      %6396 = vst.msk [vmem:[%s264 + $0x20] sm:$0xf] %vm6387, %v6297
      %6397 = vst.msk [vmem:[%s264 + $0x24] sm:$0xf] %vm6387, %v6298
      %6398 = vst.msk [vmem:[%s264 + $0x28] sm:$0xf] %vm6387, %v6299
      %6399 = vst.msk [vmem:[%s264 + $0x2c] sm:$0xf] %vm6387, %v6300
      %6400 = vst.msk [vmem:[%s264 + $0x30] sm:$0xf] %vm6387, %v6301
      %6401 = vst.msk [vmem:[%s264 + $0x34] sm:$0xf] %vm6387, %v6302
      %6402 = vst.msk [vmem:[%s264 + $0x38] sm:$0xf] %vm6387, %v6303
      %6403 = vst.msk [vmem:[%s264 + $0x3c] sm:$0xf] %vm6387, %v6304
      %6404 = vst.msk [vmem:[%s264 + $0x40] sm:$0xf] %vm6387, %v6305
      %6405 = vst.msk [vmem:[%s264 + $0x44] sm:$0xf] %vm6387, %v6306
      %6406 = vst.msk [vmem:[%s264 + $0x48] sm:$0xf] %vm6387, %v6307
      %6407 = vst.msk [vmem:[%s264 + $0x4c] sm:$0xf] %vm6387, %v6308
      %6408 = vst.msk [vmem:[%s264 + $0x50] sm:$0xf] %vm6387, %v6309
      %6409 = vst.msk [vmem:[%s264 + $0x54] sm:$0xf] %vm6387, %v6310
      %6410 = vst.msk [vmem:[%s264 + $0x58] sm:$0xf] %vm6387, %v6311
      %6411 = vst.msk [vmem:[%s264 + $0x5c] sm:$0xf] %vm6387, %v6312
      %6412 = vst.msk [vmem:[%s264 + $0x60] sm:$0xf] %vm6387, %v6313
      %6413 = vst.msk [vmem:[%s264 + $0x64] sm:$0xf] %vm6387, %v6314
      %6414 = vst.msk [vmem:[%s264 + $0x68] sm:$0xf] %vm6387, %v6315
      %6415 = vst.msk [vmem:[%s264 + $0x6c] sm:$0xf] %vm6387, %v6316
      %6416 = vst.msk [vmem:[%s264 + $0x70] sm:$0xf] %vm6387, %v6317
      %6417 = vst.msk [vmem:[%s264 + $0x74] sm:$0xf] %vm6387, %v6318
      %6418 = vst.msk [vmem:[%s264 + $0x78] sm:$0xf] %vm6387, %v6319
      %6419 = vst.msk [vmem:[%s264 + $0x7c] sm:$0xf] %vm6387, %v6320
      %6420 = vst.msk [vmem:[%s264 + $0x80] sm:$0xf] %vm6387, %v6321
      %6421 = vst.msk [vmem:[%s264 + $0x84] sm:$0xf] %vm6387, %v6322
      %6422 = vst.msk [vmem:[%s264 + $0x88] sm:$0xf] %vm6387, %v6323
      %6423 = vst.msk [vmem:[%s264 + $0x8c] sm:$0xf] %vm6387, %v6324
      %6424 = vst.msk [vmem:[%s264 + $0x90] sm:$0xf] %vm6387, %v6325
      %6425 = vst.msk [vmem:[%s264 + $0x94] sm:$0xf] %vm6387, %v6326
      %6426 = vst.msk [vmem:[%s264 + $0x98] sm:$0xf] %vm6387, %v6327
      %6427 = vst.msk [vmem:[%s264 + $0x9c] sm:$0xf] %vm6387, %v6328
      %6428 = vst.msk [vmem:[%s264 + $0xa0] sm:$0xf] %vm6387, %v6329
      %6429 = vst.msk [vmem:[%s264 + $0xa4] sm:$0xf] %vm6387, %v6330
      %6430 = vst.msk [vmem:[%s264 + $0xa8] sm:$0xf] %vm6387, %v6331
      %6431 = vst.msk [vmem:[%s264 + $0xac] sm:$0xf] %vm6387, %v6332
      %6432 = vst.msk [vmem:[%s264 + $0xb0] sm:$0xf] %vm6387, %v6333
      %6433 = vst.msk [vmem:[%s264 + $0xb4] sm:$0xf] %vm6387, %v6334
      %6434 = vst.msk [vmem:[%s264 + $0xb8] sm:$0xf] %vm6387, %v6335
      %6435 = vst.msk [vmem:[%s264 + $0xbc] sm:$0xf] %vm6387, %v6336
      %6436 = vst.msk [vmem:[%s264 + $0xc0] sm:$0xf] %vm6387, %v6337
      %p6437 = scmp.lt.s32.totalorder %s16, 1
      %s6438 = scalar_select %p6437, %s16, 1
      %s6439 = smul.addr %s6438, 49
      %s6440 = smul.addr %s6439, 4
      %s6441 = scalar_lea.vmem %s5, %s6440
      // Predicated region
      $region41: #{tpu_custom_call.1} parent=39 // pred_check
        %p6442 = pneg %p154
      $region42: #{tpu_custom_call.1} parent=39 // pred_check_branch
        %6444 = sbr.rel (%p6442) target = $region44
      $region43: #{tpu_custom_call.1} parent=39 // pred_region
        _
      $region44: #{tpu_custom_call.1} parent=39 // pred_fallthru
        _
    $region40: #{tpu_custom_call.1} parent=5 // pred_fallthru
      _
    %p6445 = scmp.le.s32.totalorder 2, %s11
    // Predicated region
    $region45: #{tpu_custom_call.1} parent=5 // pred_check
      %p6446 = pneg %p6445
    $region46: #{tpu_custom_call.1} parent=5 // pred_check_branch
      %6448 = sbr.rel (%p6446) target = $region48
    $region47: #{tpu_custom_call.1} parent=5 // pred_region
      %s6449 = ssub.s32 %s11, 2
      // Predicated region
      $region49: #{tpu_custom_call.1} parent=47 // pred_check
        %p6450 = pneg %p160
      $region50: #{tpu_custom_call.1} parent=47 // pred_check_branch
        %6452 = sbr.rel (%p6450) target = $region52
      $region51: #{tpu_custom_call.1} parent=47 // pred_region
        %p6453 = scmp.lt.s32.totalorder %s17, 1
        %s6454 = scalar_select %p6453, %s17, 1
        %s6455 = smul.addr %s6454, 49
        %s6456 = smul.addr %s6455, 4
        %s6457 = scalar_lea.vmem %s5, %s6456
      $region52: #{tpu_custom_call.1} parent=47 // pred_fallthru
        _
    $region48: #{tpu_custom_call.1} parent=5 // pred_fallthru
      _
  $region6: #{tpu_custom_call.1} parent=0 // loop_footer
    %s15 = sadd.s32 1, %s11
  $region7: #{tpu_custom_call.1} parent=0 // loop_footer_branch
    %10 = sbr.rel target = $region3
  $region8: #{tpu_custom_call.1} parent=0 // loop_exit
    _

</llo_original>
